<compile_context>
chip_gen: v6e
topology: v6e:2x2x1
jax: 0.10.0
libtpu: 0.0.40
codegen_flags: <defaults>
</compile_context>

<pallas_src>
import functools

import numpy as np
import jax
import jax.numpy as jnp
from jax import lax
from jax.experimental import pallas as pl
from jax.experimental.pallas import tpu as pltpu


def _round_up(v, m):
    return ((v + m - 1) // m) * m


def _vmem_limit_bytes():
    # Use most of physical VMEM (128 MiB on v5e/v6e, 64 MiB on v7x); fall back
    # to the conservative known-good cap if the query is unavailable.
    try:
        return int(pltpu.get_tpu_info().vmem_capacity_bytes * 3 // 4)
    except Exception:
        return 32 * 1024 * 1024


def _zero_halo(pad_ref, Hh, Ww, Cch, KBk):
    """Zero only what the interior patch stores never overwrite.

    Regions: the two halo rows, the pad lanes (3*Cch .. KBk), and the boundary
    column of the dx=0 / dx=2 blocks.  Everything else is rewritten by every
    conv in the grid step, so no full memset of the scratch is needed.
    """
    zrow = jnp.zeros((1, Ww, KBk), pad_ref.dtype)
    pad_ref[0:1, :, :] = zrow                       # top halo row
    pad_ref[Hh + 1:Hh + 2, :, :] = zrow             # bottom halo row
    if KBk > 3 * Cch:                               # pad lanes (zero weights too,
        pad_ref[1:Hh + 1, :, 3 * Cch:KBk] = jnp.zeros(  # but keep NaN/Inf out)
            (Hh, Ww, KBk - 3 * Cch), pad_ref.dtype)
    zcol = jnp.zeros((Hh, 1, Cch), pad_ref.dtype)
    pad_ref[1:Hh + 1, 0:1, 0:Cch] = zcol                        # dx=0, col 0
    pad_ref[1:Hh + 1, Ww - 1:Ww, 2 * Cch:3 * Cch] = zcol        # dx=2, col W-1


# --------------------------------------------------------------------------
# Kernel 1: down conv + ResBlock body + tail + fused up-GEMMs (both branches)
# --------------------------------------------------------------------------

def _body_up_kernel(s2d_ref, dw_ref, db_ref, bw_ref, bb_ref, uw_ref, ub_ref,
                    o_ref, pad_ref, *, Hd, Wd, F, KB, n_blocks, n_conv):
    P = Hd * Wd
    # bf16 patch scratch, dx blocks tightly packed at lane offsets 0, F, 2*F.
    _zero_halo(pad_ref, Hd, Wd, F, KB)

    def conv3x3(act_flat, idx, relu):
        # act_flat: (P, F) f32.  3x3 "same" conv as 3 MXU matmuls of
        # (P, KB) x (KB, F): K grouped by dx, bf16 operands, f32 accumulation,
        # bias-initialized accumulator.
        a = act_flat.astype(jnp.bfloat16).reshape(Hd, Wd, F)
        pad_ref[1:Hd + 1, 0:Wd, F:2 * F] = a                          # dx = 1
        pad_ref[1:Hd + 1, 1:Wd, 0:F] = a[:, 0:Wd - 1, :]              # dx = 0
        pad_ref[1:Hd + 1, 0:Wd - 1, 2 * F:3 * F] = a[:, 1:Wd, :]      # dx = 2
        w3 = bw_ref[idx]                       # (3, KB, F) bf16
        acc = bb_ref[idx]                      # (1, F) f32 — bias init
        for dy in range(3):
            patch = pad_ref[dy:dy + Hd, :, :].reshape(P, KB)          # bf16
            acc = acc + jnp.dot(patch, w3[dy],
                                preferred_element_type=jnp.float32)
        if relu:
            acc = jnp.maximum(acc, 0.0)
        return acc                             # (P, F) f32

    # ---- down: 2x2 stride-2 conv as a GEMM over space-to-depth input ----
    down = jnp.maximum(
        db_ref[...] + jnp.dot(s2d_ref[0], dw_ref[...],
                              preferred_element_type=jnp.float32), 0.0)

    # ---- body: ResBlocks (conv-BN-ReLU-conv-BN + residual), BN folded ----
    def block_body(b, h):
        y = conv3x3(h, 2 * b, relu=True)
        return conv3x3(y, 2 * b + 1, relu=False) + h

    h = lax.fori_loop(0, n_blocks, block_body, down)
    body = conv3x3(h, n_conv - 1, relu=False) + down

    # ---- both ConvTranspose2d(k2,s2) branches as one GEMM (BN+ReLU folded).
    # Columns ordered (di, dj, [noisemap sigma | denoise outf]) so the host
    # depth-to-space between the kernels is a single transpose.
    up = jnp.maximum(
        ub_ref[...] + jnp.dot(body.astype(jnp.bfloat16), uw_ref[...],
                              preferred_element_type=jnp.float32), 0.0)
    o_ref[0] = up.astype(o_ref.dtype)          # (P, 4*Cc) bf16 — lane dense


# --------------------------------------------------------------------------
# Kernel 2: both final 3x3 convs fused (block-diagonal weight)
# --------------------------------------------------------------------------

def _final_conv_kernel(u_ref, w_ref, b_ref, o_ref, pad_ref, *, H, W, Cc, KB):
    P = H * W
    _zero_halo(pad_ref, H, W, Cc, KB)
    a = u_ref[0]                                                     # (H, W, Cc) bf16
    pad_ref[1:H + 1, 0:W, Cc:2 * Cc] = a                             # dx = 1
    pad_ref[1:H + 1, 1:W, 0:Cc] = a[:, 0:W - 1, :]                   # dx = 0
    pad_ref[1:H + 1, 0:W - 1, 2 * Cc:3 * Cc] = a[:, 1:W, :]          # dx = 2
    acc = b_ref[...]                                                 # (1, 2*Cin) f32
    for dy in range(3):
        patch = pad_ref[dy:dy + H, :, :].reshape(P, KB)
        acc = acc + jnp.dot(patch, w_ref[dy],
                            preferred_element_type=jnp.float32)
    # TODO(synk): 6-lane-wide store; lane-dense output layout would be better.
    o_ref[0] = acc


# --------------------------------------------------------------------------
# Parameters (deterministic synthetic init, PyTorch-like layouts)
# --------------------------------------------------------------------------

def init_params(key, *, cin=3, feats=32, sigma=32, outf=32, blocks=2):
    eps = 1e-5
    keys = iter(jax.random.split(key, 256))

    def nrm(shape, s=0.05):
        return s * jax.random.normal(next(keys), shape, jnp.float32)

    def bn(c):
        return dict(
            gamma=1.0 + 0.1 * jax.random.normal(next(keys), (c,), jnp.float32),
            beta=0.1 * jax.random.normal(next(keys), (c,), jnp.float32),
            mean=0.1 * jax.random.normal(next(keys), (c,), jnp.float32),
            var=1.0 + 0.1 * jnp.abs(jax.random.normal(next(keys), (c,), jnp.float32)),
            eps=eps)

    p = {}
    p['down_w'] = nrm((feats, cin, 2, 2), 0.1)          # torch OIHW
    p['down_b'] = nrm((feats,), 0.02)
    p['blocks'] = []
    for _ in range(blocks):
        p['blocks'].append(dict(
            w1=nrm((feats, feats, 3, 3)), b1=nrm((feats,), 0.02), bn1=bn(feats),
            w2=nrm((feats, feats, 3, 3)), b2=nrm((feats,), 0.02), bn2=bn(feats)))
    p['tail_w'] = nrm((feats, feats, 3, 3))
    p['tail_b'] = nrm((feats,), 0.02)
    p['nm_up_w'] = nrm((sigma, sigma, 2, 2), 0.1)       # torch ConvT (in,out,kh,kw)
    p['nm_up_b'] = nrm((sigma,), 0.02)
    p['nm_bn'] = bn(sigma)
    p['nm_conv_w'] = nrm((cin, sigma, 3, 3))
    p['nm_conv_b'] = nrm((cin,), 0.02)
    p['dn_up_w'] = nrm((feats, outf, 2, 2), 0.1)
    p['dn_up_b'] = nrm((outf,), 0.02)
    p['dn_bn'] = bn(outf)
    p['dn_conv_w'] = nrm((cin, outf, 3, 3))
    p['dn_conv_b'] = nrm((cin,), 0.02)
    return p


def bn_scale_shift(bn):
    scale = bn['gamma'] / jnp.sqrt(bn['var'] + bn['eps'])
    shift = bn['beta'] - bn['mean'] * scale
    return scale, shift


def fold_conv_bn_hwio(w_oihw, b, bn):
    """Return HWIO weight and bias with eval-mode BN folded in."""
    w = jnp.transpose(w_oihw, (2, 3, 1, 0))             # (3,3,Cin,Cout)
    scale, shift = bn_scale_shift(bn)
    return w * scale, b * scale + shift


def pack_conv3x3_weights(w_hwio, kblk):
    """(3,3,Cin,Cout) -> (3, kblk, Cout); dx blocks tightly packed at lane
    offsets 0, Cin, 2*Cin (remaining lanes are zero pad)."""
    _, _, cin, cout = w_hwio.shape
    assert kblk >= 3 * cin
    wp = jnp.zeros((3, kblk, cout), w_hwio.dtype)
    for dx in range(3):
        wp = wp.at[:, dx * cin:dx * cin + cin, :].set(w_hwio[:, dx])
    return wp


# --------------------------------------------------------------------------
# Pallas-backed EstNetRGB forward
# --------------------------------------------------------------------------

def estnet_forward_pallas(x_nchw, p, *, sigma):
    x = jnp.transpose(x_nchw, (0, 2, 3, 1)).astype(jnp.float32)   # -> NHWC
    N, H, W, C = x.shape
    expanded_h = (H % 2 == 1)
    expanded_w = (W % 2 == 1)
    x_ = x
    if expanded_h:
        x_ = jnp.concatenate([x_, x_[:, -2:-1, :, :]], axis=1)
    if expanded_w:
        x_ = jnp.concatenate([x_, x_[:, :, -2:-1, :]], axis=2)
    Hp, Wp = x_.shape[1], x_.shape[2]
    Hd, Wd = Hp // 2, Wp // 2
    F = p['down_w'].shape[0]
    outf = p['dn_up_w'].shape[1]
    P = Hd * Wd
    Cc = sigma + outf
    Uc = 4 * Cc
    KB = _round_up(3 * F, 128)          # tight dx packing (128 for F=32)
    KB2 = _round_up(3 * Cc, 128)        # 256 for Cc=64
    vmem_limit = _vmem_limit_bytes()

    # ---- pack weights (BN folded in f32, then cast to bf16 for the MXU) ----
    dw = jnp.transpose(p['down_w'], (2, 3, 1, 0)).reshape(4 * C, F).astype(jnp.bfloat16)
    db = p['down_b'].reshape(1, F)

    body_ws, body_bs = [], []
    for blk in p['blocks']:
        for w, b, bn in ((blk['w1'], blk['b1'], blk['bn1']),
                         (blk['w2'], blk['b2'], blk['bn2'])):
            wf, bf = fold_conv_bn_hwio(w, b, bn)
            body_ws.append(pack_conv3x3_weights(wf, KB))
            body_bs.append(bf.reshape(1, F))
    body_ws.append(pack_conv3x3_weights(jnp.transpose(p['tail_w'], (2, 3, 1, 0)), KB))
    body_bs.append(p['tail_b'].reshape(1, F))
    bw = jnp.stack(body_ws).astype(jnp.bfloat16)        # (n_conv, 3, KB, F)
    bb = jnp.stack(body_bs)                             # (n_conv, 1, F) f32
    n_conv = bw.shape[0]
    n_blocks = len(p['blocks'])

    def convT_cols_phased(wt, bt, bn, rows):
        # Columns grouped per (di, dj) phase, channel fastest; BN folded.
        ci, co = wt.shape[0], wt.shape[1]
        assert ci <= rows, "up-branch reads more channels than the body provides"
        scale, shift = bn_scale_shift(bn)
        wg = jnp.transpose(wt, (0, 2, 3, 1)).reshape(ci, 4, co) * scale
        bg = jnp.broadcast_to(bt * scale + shift, (4, co))
        if ci < rows:   # noisemap only reads body[:, :sigma]; unused rows are 0
            wg = jnp.concatenate(
                [wg, jnp.zeros((rows - ci, 4, co), wg.dtype)], axis=0)
        return wg, bg

    wg_nm, bg_nm = convT_cols_phased(p['nm_up_w'], p['nm_up_b'], p['nm_bn'], F)
    wg_dn, bg_dn = convT_cols_phased(p['dn_up_w'], p['dn_up_b'], p['dn_bn'], F)
    uw = jnp.concatenate([wg_nm, wg_dn], axis=2).reshape(F, Uc).astype(jnp.bfloat16)
    ub = jnp.concatenate([bg_nm, bg_dn], axis=1).reshape(1, Uc)

    # ---- space-to-depth for the 2x2/s2 down conv (tiny host glue, bf16) ----
    s2d = (x_.reshape(N, Hd, 2, Wd, 2, C)
              .transpose(0, 1, 3, 2, 4, 5)
              .reshape(N, P, 4 * C)).astype(jnp.bfloat16)

    kernel1 = functools.partial(_body_up_kernel, Hd=Hd, Wd=Wd, F=F, KB=KB,
                                n_blocks=n_blocks, n_conv=n_conv)
    up = pl.pallas_call(
        kernel1,
        out_shape=jax.ShapeDtypeStruct((N, P, Uc), jnp.bfloat16),
        grid=(N,),
        in_specs=[
            pl.BlockSpec((1, P, 4 * C), lambda n: (n, 0, 0)),
            pl.BlockSpec((4 * C, F), lambda n: (0, 0)),
            pl.BlockSpec((1, F), lambda n: (0, 0)),
            pl.BlockSpec((n_conv, 3, KB, F), lambda n: (0, 0, 0, 0)),
            pl.BlockSpec((n_conv, 1, F), lambda n: (0, 0, 0)),
            pl.BlockSpec((F, Uc), lambda n: (0, 0)),
            pl.BlockSpec((1, Uc), lambda n: (0, 0)),
        ],
        out_specs=pl.BlockSpec((1, P, Uc), lambda n: (n, 0, 0)),
        scratch_shapes=[pltpu.VMEM((Hd + 2, Wd, KB), jnp.bfloat16)],
        compiler_params=pltpu.CompilerParams(
            dimension_semantics=("parallel",),
            vmem_limit_bytes=vmem_limit),
    )(s2d, dw, db, bw, bb, uw, ub)

    # ---- depth-to-space: a single bf16 transpose (phases already interleaved
    #      per pixel by the up-GEMM column order; no concat / branch copies) ----
    ucat = (up.reshape(N, Hd, Wd, 2, 2, Cc)
              .transpose(0, 1, 3, 2, 4, 5)
              .reshape(N, Hp, Wp, Cc))

    # block-diagonal weight: out[..., :C] = conv(noisemap), out[..., C:] = conv(denoise)
    wcat = jnp.zeros((3, 3, Cc, 2 * C), jnp.float32)
    wcat = wcat.at[:, :, :sigma, :C].set(jnp.transpose(p['nm_conv_w'], (2, 3, 1, 0)))
    wcat = wcat.at[:, :, sigma:, C:].set(jnp.transpose(p['dn_conv_w'], (2, 3, 1, 0)))
    wfin = pack_conv3x3_weights(wcat, KB2).astype(jnp.bfloat16)   # (3, KB2, 2C)
    bfin = jnp.concatenate([p['nm_conv_b'], p['dn_conv_b']]).reshape(1, 2 * C)

    kernel2 = functools.partial(_final_conv_kernel, H=Hp, W=Wp, Cc=Cc, KB=KB2)
    out2 = pl.pallas_call(
        kernel2,
        out_shape=jax.ShapeDtypeStruct((N, Hp * Wp, 2 * C), jnp.float32),
        grid=(N,),
        in_specs=[
            pl.BlockSpec((1, Hp, Wp, Cc), lambda n: (n, 0, 0, 0)),
            pl.BlockSpec((3, KB2, 2 * C), lambda n: (0, 0, 0)),
            pl.BlockSpec((1, 2 * C), lambda n: (0, 0)),
        ],
        out_specs=pl.BlockSpec((1, Hp * Wp, 2 * C), lambda n: (n, 0, 0)),
        scratch_shapes=[pltpu.VMEM((Hp + 2, Wp, KB2), jnp.bfloat16)],
        compiler_params=pltpu.CompilerParams(
            dimension_semantics=("parallel",),
            vmem_limit_bytes=vmem_limit),
    )(ucat, wfin, bfin)

    out2 = out2.reshape(N, Hp, Wp, 2 * C)
    e_nm, e_dn = out2[..., :C], out2[..., C:]
    if expanded_h:
        e_nm, e_dn = e_nm[:, :-1], e_dn[:, :-1]
    if expanded_w:
        e_nm, e_dn = e_nm[:, :, :-1], e_dn[:, :, :-1]
    # residual "+ x" fuses with the NHWC->NCHW output transpose in XLA (no
    # tiled x materialization, no extra lane-sparse DMA into the kernels).
    e_nm = e_nm + x
    e_dn = e_dn + x
    return jnp.transpose(e_nm, (0, 3, 1, 2)), jnp.transpose(e_dn, (0, 3, 1, 2))


# --------------------------------------------------------------------------
# Pure-JAX (XLA) reference for correctness checking
# --------------------------------------------------------------------------

def _conv2d_ref(x, w_oihw, b, stride, padding):
    w = jnp.transpose(w_oihw, (2, 3, 1, 0))
    out = lax.conv_general_dilated(
        x, w, window_strides=(stride, stride),
        padding=((padding, padding), (padding, padding)),
        dimension_numbers=('NHWC', 'HWIO', 'NHWC'),
        precision=lax.Precision.HIGHEST)
    return out + b


def _bn_ref(x, bn):
    scale, shift = bn_scale_shift(bn)
    return x * scale + shift


def _convT2x2_ref(x, wt, bt):
    N, Hh, Ww, Ci = x.shape
    Co = wt.shape[1]
    y = jnp.einsum('nijc,coab->niajbo', x, wt, precision=lax.Precision.HIGHEST)
    return y.reshape(N, 2 * Hh, 2 * Ww, Co) + bt


def estnet_forward_ref(x_nchw, p, *, sigma):
    x = jnp.transpose(x_nchw, (0, 2, 3, 1)).astype(jnp.float32)
    H, W = x.shape[1], x.shape[2]
    expanded_h = (H % 2 == 1)
    expanded_w = (W % 2 == 1)
    x_ = x
    if expanded_h:
        x_ = jnp.concatenate([x_, x_[:, -2:-1, :, :]], axis=1)
    if expanded_w:
        x_ = jnp.concatenate([x_, x_[:, :, -2:-1, :]], axis=2)
    down = jax.nn.relu(_conv2d_ref(x_, p['down_w'], p['down_b'], 2, 0))
    h = down
    for blk in p['blocks']:
        y = jax.nn.relu(_bn_ref(_conv2d_ref(h, blk['w1'], blk['b1'], 1, 1), blk['bn1']))
        y = _bn_ref(_conv2d_ref(y, blk['w2'], blk['b2'], 1, 1), blk['bn2'])
        h = y + h
    body = _conv2d_ref(h, p['tail_w'], p['tail_b'], 1, 1) + down

    def branch(feat, wt, bt, bn, wc, bc):
        u = jax.nn.relu(_bn_ref(_convT2x2_ref(feat, wt, bt), bn))
        out = _conv2d_ref(u, wc, bc, 1, 1)
        if expanded_h:
            out = out[:, :-1, :, :]
        if expanded_w:
            out = out[:, :, :-1, :]
        return out + x

    e_ = branch(body[..., :sigma], p['nm_up_w'], p['nm_up_b'], p['nm_bn'],
                p['nm_conv_w'], p['nm_conv_b'])
    e = branch(body, p['dn_up_w'], p['dn_up_b'], p['dn_bn'],
               p['dn_conv_w'], p['dn_conv_b'])
    return jnp.transpose(e_, (0, 3, 1, 2)), jnp.transpose(e, (0, 3, 1, 2))


# --------------------------------------------------------------------------

if __name__ == "__main__":
    key = jax.random.PRNGKey(0)
    k_x, k_p = jax.random.split(key)

    # Small instantiation of EstNetRGB(num_input_channels=3, num_feature_maps=32,
    #                                  num_layer_sigma=32, output_features=32,
    #                                  num_mid_blocks=2)
    N, CIN, H, W = 2, 3, 16, 16
    FEATS, SIGMA, OUTF, BLOCKS = 32, 32, 32, 2

    x = 0.5 * jax.random.normal(k_x, (N, CIN, H, W), jnp.float32)
    params = init_params(k_p, cin=CIN, feats=FEATS, sigma=SIGMA, outf=OUTF,
                         blocks=BLOCKS)

    fwd = jax.jit(functools.partial(estnet_forward_pallas, sigma=SIGMA))
    est_noise_, est_noise = fwd(x, params)
    jax.block_until_ready((est_noise_, est_noise))

    ref_, ref = estnet_forward_ref(x, params, sigma=SIGMA)
    np.testing.assert_allclose(np.asarray(est_noise_), np.asarray(ref_),
                               rtol=2e-2, atol=2e-2)
    np.testing.assert_allclose(np.asarray(est_noise), np.asarray(ref),
                               rtol=2e-2, atol=2e-2)
    assert est_noise_.shape == (N, CIN, H, W)
    assert est_noise.shape == (N, CIN, H, W)
    print("KERNEL_OK")
</pallas_src>

<mosaic_0001>
module attributes {stable_mosaic.version = 11 : i64} {
  func.func @_body_up_kernel(%arg0: i32, %arg1: memref<1x64x12xbf16, #tpu.memory_space<vmem>>, %arg2: memref<12x32xbf16, #tpu.memory_space<vmem>>, %arg3: memref<1x32xf32, #tpu.memory_space<vmem>>, %arg4: memref<5x3x128x32xbf16, #tpu.memory_space<vmem>>, %arg5: memref<5x1x32xf32, #tpu.memory_space<vmem>>, %arg6: memref<32x256xbf16, #tpu.memory_space<vmem>>, %arg7: memref<1x256xf32, #tpu.memory_space<vmem>>, %arg8: memref<1x64x256xbf16, #tpu.memory_space<vmem>>, %arg9: memref<10x8x128xbf16, #tpu.memory_space<vmem>>) attributes {dimension_semantics = [#tpu.dimension_semantics<parallel>], iteration_bounds = array<i64: 2>, scalar_prefetch = 0 : i64, scratch_operands = 1 : i64, tpu.core_type = #tpu.core_type<tc>, window_params = [{transform_indices = @transform_0, window_bounds = array<i64: 1, 64, 12>}, {pipeline_mode = #tpu.pipeline_mode<synchronous>, transform_indices = @transform_1, window_bounds = array<i64: 12, 32>}, {pipeline_mode = #tpu.pipeline_mode<synchronous>, transform_indices = @transform_2, window_bounds = array<i64: 1, 32>}, {pipeline_mode = #tpu.pipeline_mode<synchronous>, transform_indices = @transform_3, window_bounds = array<i64: 5, 3, 128, 32>}, {pipeline_mode = #tpu.pipeline_mode<synchronous>, transform_indices = @transform_4, window_bounds = array<i64: 5, 1, 32>}, {pipeline_mode = #tpu.pipeline_mode<synchronous>, transform_indices = @transform_5, window_bounds = array<i64: 32, 256>}, {pipeline_mode = #tpu.pipeline_mode<synchronous>, transform_indices = @transform_6, window_bounds = array<i64: 1, 256>}, {transform_indices = @transform_7, window_bounds = array<i64: 1, 64, 256>}]} {
    %cst = arith.constant 0.000000e+00 : bf16
    %0 = vector.broadcast %cst : bf16 to vector<1x8x128xbf16>
    %c0 = arith.constant 0 : index
    %c0_0 = arith.constant 0 : index
    %c0_1 = arith.constant 0 : index
    %1 = vector.load %arg9[%c0, %c0_0, %c0_1] : memref<10x8x128xbf16, #tpu.memory_space<vmem>>, vector<1x8x128xbf16>
    tpu.vector_store %arg9[%c0, %c0_0, %c0_1], %0 {strides = array<i32>} : memref<10x8x128xbf16, #tpu.memory_space<vmem>>, vector<1x8x128xbf16>,
    %c9 = arith.constant 9 : index
    %c0_2 = arith.constant 0 : index
    %c0_3 = arith.constant 0 : index
    %2 = vector.load %arg9[%c9, %c0_2, %c0_3] : memref<10x8x128xbf16, #tpu.memory_space<vmem>>, vector<1x8x128xbf16>
    tpu.vector_store %arg9[%c9, %c0_2, %c0_3], %0 {strides = array<i32>} : memref<10x8x128xbf16, #tpu.memory_space<vmem>>, vector<1x8x128xbf16>,
    %cst_4 = arith.constant 0.000000e+00 : bf16
    %3 = vector.broadcast %cst_4 : bf16 to vector<8x8x32xbf16>
    %c1 = arith.constant 1 : index
    %c0_5 = arith.constant 0 : index
    %c96 = arith.constant 96 : index
    %4 = vector.load %arg9[%c1, %c0_5, %c96] : memref<10x8x128xbf16, #tpu.memory_space<vmem>>, vector<8x8x32xbf16>
    tpu.vector_store %arg9[%c1, %c0_5, %c96], %3 {strides = array<i32>} : memref<10x8x128xbf16, #tpu.memory_space<vmem>>, vector<8x8x32xbf16>,
    %cst_6 = arith.constant 0.000000e+00 : bf16
    %5 = vector.broadcast %cst_6 : bf16 to vector<8x1x32xbf16>
    %c1_7 = arith.constant 1 : index
    %c0_8 = arith.constant 0 : index
    %c0_9 = arith.constant 0 : index
    %6 = vector.load %arg9[%c1_7, %c0_8, %c0_9] : memref<10x8x128xbf16, #tpu.memory_space<vmem>>, vector<8x1x32xbf16>
    tpu.vector_store %arg9[%c1_7, %c0_8, %c0_9], %5 {strides = array<i32>} : memref<10x8x128xbf16, #tpu.memory_space<vmem>>, vector<8x1x32xbf16>,
    %c1_10 = arith.constant 1 : index
    %c7 = arith.constant 7 : index
    %c64 = arith.constant 64 : index
    %7 = vector.load %arg9[%c1_10, %c7, %c64] : memref<10x8x128xbf16, #tpu.memory_space<vmem>>, vector<8x1x32xbf16>
    tpu.vector_store %arg9[%c1_10, %c7, %c64], %5 {strides = array<i32>} : memref<10x8x128xbf16, #tpu.memory_space<vmem>>, vector<8x1x32xbf16>,
    %c0_11 = arith.constant 0 : index
    %c0_12 = arith.constant 0 : index
    %8 = vector.load %arg3[%c0_11, %c0_12] : memref<1x32xf32, #tpu.memory_space<vmem>>, vector<1x32xf32>
    %c0_13 = arith.constant 0 : index
    %c0_14 = arith.constant 0 : index
    %c0_15 = arith.constant 0 : index
    %9 = vector.load %arg1[%c0_13, %c0_14, %c0_15] : memref<1x64x12xbf16, #tpu.memory_space<vmem>>, vector<1x64x12xbf16>
    %10 = vector.shape_cast %9 : vector<1x64x12xbf16> to vector<64x12xbf16>
    %c0_16 = arith.constant 0 : index
    %c0_17 = arith.constant 0 : index
    %11 = vector.load %arg2[%c0_16, %c0_17] : memref<12x32xbf16, #tpu.memory_space<vmem>>, vector<12x32xbf16>
    %cst_18 = arith.constant dense<0.000000e+00> : vector<64x32xf32>
    %12 = tpu.matmul %10, %11, %cst_18 {dimension_numbers = #tpu.dot_dimension_numbers<[1], [0], [0], [1], [0, 0, 1, 1], [], []>} : vector<64x12xbf16>, vector<12x32xbf16>, vector<64x32xf32> -> vector<64x32xf32>
    %13 = vector.broadcast %8 : vector<1x32xf32> to vector<64x32xf32>
    %14 = arith.addf %13, %12 : vector<64x32xf32>
    %cst_19 = arith.constant 0.000000e+00 : f32
    %15 = vector.broadcast %cst_19 : f32 to vector<64x32xf32>
    %16 = arith.maximumf %14, %15 : vector<64x32xf32>
    %c0_i32 = arith.constant 0 : i32
    %c2_i32 = arith.constant 2 : i32
    %17 = arith.addi %c0_i32, %c2_i32 : i32
    %c1_i32 = arith.constant 1 : i32
    %18 = scf.for %arg10 = %c0_i32 to %17 step %c1_i32 iter_args(%arg11 = %16) -> (vector<64x32xf32>)  : i32 {
      %c2_i32_55 = arith.constant 2 : i32
      %62 = arith.muli %c2_i32_55, %arg10 : i32
      %63 = arith.truncf %arg11 : vector<64x32xf32> to vector<64x32xbf16>
      %64 = vector.shape_cast %63 : vector<64x32xbf16> to vector<8x8x32xbf16>
      %c1_56 = arith.constant 1 : index
      %c0_57 = arith.constant 0 : index
      %c32_58 = arith.constant 32 : index
      %65 = vector.load %arg9[%c1_56, %c0_57, %c32_58] : memref<10x8x128xbf16, #tpu.memory_space<vmem>>, vector<8x8x32xbf16>
      tpu.vector_store %arg9[%c1_56, %c0_57, %c32_58], %64 {strides = array<i32>} : memref<10x8x128xbf16, #tpu.memory_space<vmem>>, vector<8x8x32xbf16>,
      %66 = vector.extract_strided_slice %64 {offsets = [0, 0, 0], sizes = [8, 7, 32], strides = [1, 1, 1]} : vector<8x8x32xbf16> to vector<8x7x32xbf16>
      %c1_59 = arith.constant 1 : index
      %c1_60 = arith.constant 1 : index
      %c0_61 = arith.constant 0 : index
      %67 = vector.load %arg9[%c1_59, %c1_60, %c0_61] : memref<10x8x128xbf16, #tpu.memory_space<vmem>>, vector<8x7x32xbf16>
      tpu.vector_store %arg9[%c1_59, %c1_60, %c0_61], %66 {strides = array<i32>} : memref<10x8x128xbf16, #tpu.memory_space<vmem>>, vector<8x7x32xbf16>,
      %68 = vector.extract_strided_slice %64 {offsets = [0, 1, 0], sizes = [8, 7, 32], strides = [1, 1, 1]} : vector<8x8x32xbf16> to vector<8x7x32xbf16>
      %c1_62 = arith.constant 1 : index
      %c0_63 = arith.constant 0 : index
      %c64_64 = arith.constant 64 : index
      %69 = vector.load %arg9[%c1_62, %c0_63, %c64_64] : memref<10x8x128xbf16, #tpu.memory_space<vmem>>, vector<8x7x32xbf16>
      tpu.vector_store %arg9[%c1_62, %c0_63, %c64_64], %68 {strides = array<i32>} : memref<10x8x128xbf16, #tpu.memory_space<vmem>>, vector<8x7x32xbf16>,
      %70 = arith.index_cast %62 : i32 to index
      %c0_65 = arith.constant 0 : index
      %c0_66 = arith.constant 0 : index
      %c0_67 = arith.constant 0 : index
      %71 = vector.load %arg4[%70, %c0_65, %c0_66, %c0_67] : memref<5x3x128x32xbf16, #tpu.memory_space<vmem>>, vector<1x3x128x32xbf16>
      %72 = vector.shape_cast %71 : vector<1x3x128x32xbf16> to vector<3x128x32xbf16>
      %73 = arith.index_cast %62 : i32 to index
      %c0_68 = arith.constant 0 : index
      %c0_69 = arith.constant 0 : index
      %74 = vector.load %arg5[%73, %c0_68, %c0_69] : memref<5x1x32xf32, #tpu.memory_space<vmem>>, vector<1x1x32xf32>
      %75 = vector.shape_cast %74 : vector<1x1x32xf32> to vector<1x32xf32>
      %c0_70 = arith.constant 0 : index
      %c0_71 = arith.constant 0 : index
      %c0_72 = arith.constant 0 : index
      %76 = vector.load %arg9[%c0_70, %c0_71, %c0_72] : memref<10x8x128xbf16, #tpu.memory_space<vmem>>, vector<8x8x128xbf16>
      %77 = vector.shape_cast %76 : vector<8x8x128xbf16> to vector<64x128xbf16>
      %78 = vector.extract_strided_slice %72 {offsets = [0, 0, 0], sizes = [1, 128, 32], strides = [1, 1, 1]} : vector<3x128x32xbf16> to vector<1x128x32xbf16>
      %79 = vector.shape_cast %78 : vector<1x128x32xbf16> to vector<128x32xbf16>
      %cst_73 = arith.constant dense<0.000000e+00> : vector<64x32xf32>
      %80 = tpu.matmul %77, %79, %cst_73 {dimension_numbers = #tpu.dot_dimension_numbers<[1], [0], [0], [1], [0, 0, 1, 1], [], []>} : vector<64x128xbf16>, vector<128x32xbf16>, vector<64x32xf32> -> vector<64x32xf32>
      %81 = vector.broadcast %75 : vector<1x32xf32> to vector<64x32xf32>
      %82 = arith.addf %81, %80 : vector<64x32xf32>
      %c1_74 = arith.constant 1 : index
      %c0_75 = arith.constant 0 : index
      %c0_76 = arith.constant 0 : index
      %83 = vector.load %arg9[%c1_74, %c0_75, %c0_76] : memref<10x8x128xbf16, #tpu.memory_space<vmem>>, vector<8x8x128xbf16>
      %84 = vector.shape_cast %83 : vector<8x8x128xbf16> to vector<64x128xbf16>
      %85 = vector.extract_strided_slice %72 {offsets = [1, 0, 0], sizes = [1, 128, 32], strides = [1, 1, 1]} : vector<3x128x32xbf16> to vector<1x128x32xbf16>
      %86 = vector.shape_cast %85 : vector<1x128x32xbf16> to vector<128x32xbf16>
      %cst_77 = arith.constant dense<0.000000e+00> : vector<64x32xf32>
      %87 = tpu.matmul %84, %86, %cst_77 {dimension_numbers = #tpu.dot_dimension_numbers<[1], [0], [0], [1], [0, 0, 1, 1], [], []>} : vector<64x128xbf16>, vector<128x32xbf16>, vector<64x32xf32> -> vector<64x32xf32>
      %88 = arith.addf %82, %87 : vector<64x32xf32>
      %c2_78 = arith.constant 2 : index
      %c0_79 = arith.constant 0 : index
      %c0_80 = arith.constant 0 : index
      %89 = vector.load %arg9[%c2_78, %c0_79, %c0_80] : memref<10x8x128xbf16, #tpu.memory_space<vmem>>, vector<8x8x128xbf16>
      %90 = vector.shape_cast %89 : vector<8x8x128xbf16> to vector<64x128xbf16>
      %91 = vector.extract_strided_slice %72 {offsets = [2, 0, 0], sizes = [1, 128, 32], strides = [1, 1, 1]} : vector<3x128x32xbf16> to vector<1x128x32xbf16>
      %92 = vector.shape_cast %91 : vector<1x128x32xbf16> to vector<128x32xbf16>
      %cst_81 = arith.constant dense<0.000000e+00> : vector<64x32xf32>
      %93 = tpu.matmul %90, %92, %cst_81 {dimension_numbers = #tpu.dot_dimension_numbers<[1], [0], [0], [1], [0, 0, 1, 1], [], []>} : vector<64x128xbf16>, vector<128x32xbf16>, vector<64x32xf32> -> vector<64x32xf32>
      %94 = arith.addf %88, %93 : vector<64x32xf32>
      %cst_82 = arith.constant 0.000000e+00 : f32
      %95 = vector.broadcast %cst_82 : f32 to vector<64x32xf32>
      %96 = arith.maximumf %94, %95 : vector<64x32xf32>
      %c2_i32_83 = arith.constant 2 : i32
      %97 = arith.muli %c2_i32_83, %arg10 : i32
      %c1_i32_84 = arith.constant 1 : i32
      %98 = arith.addi %97, %c1_i32_84 : i32
      %99 = arith.truncf %96 : vector<64x32xf32> to vector<64x32xbf16>
      %100 = vector.shape_cast %99 : vector<64x32xbf16> to vector<8x8x32xbf16>
      %c1_85 = arith.constant 1 : index
      %c0_86 = arith.constant 0 : index
      %c32_87 = arith.constant 32 : index
      %101 = vector.load %arg9[%c1_85, %c0_86, %c32_87] : memref<10x8x128xbf16, #tpu.memory_space<vmem>>, vector<8x8x32xbf16>
      tpu.vector_store %arg9[%c1_85, %c0_86, %c32_87], %100 {strides = array<i32>} : memref<10x8x128xbf16, #tpu.memory_space<vmem>>, vector<8x8x32xbf16>,
      %102 = vector.extract_strided_slice %100 {offsets = [0, 0, 0], sizes = [8, 7, 32], strides = [1, 1, 1]} : vector<8x8x32xbf16> to vector<8x7x32xbf16>
      %c1_88 = arith.constant 1 : index
      %c1_89 = arith.constant 1 : index
      %c0_90 = arith.constant 0 : index
      %103 = vector.load %arg9[%c1_88, %c1_89, %c0_90] : memref<10x8x128xbf16, #tpu.memory_space<vmem>>, vector<8x7x32xbf16>
      tpu.vector_store %arg9[%c1_88, %c1_89, %c0_90], %102 {strides = array<i32>} : memref<10x8x128xbf16, #tpu.memory_space<vmem>>, vector<8x7x32xbf16>,
      %104 = vector.extract_strided_slice %100 {offsets = [0, 1, 0], sizes = [8, 7, 32], strides = [1, 1, 1]} : vector<8x8x32xbf16> to vector<8x7x32xbf16>
      %c1_91 = arith.constant 1 : index
      %c0_92 = arith.constant 0 : index
      %c64_93 = arith.constant 64 : index
      %105 = vector.load %arg9[%c1_91, %c0_92, %c64_93] : memref<10x8x128xbf16, #tpu.memory_space<vmem>>, vector<8x7x32xbf16>
      tpu.vector_store %arg9[%c1_91, %c0_92, %c64_93], %104 {strides = array<i32>} : memref<10x8x128xbf16, #tpu.memory_space<vmem>>, vector<8x7x32xbf16>,
      %106 = arith.index_cast %98 : i32 to index
      %c0_94 = arith.constant 0 : index
      %c0_95 = arith.constant 0 : index
      %c0_96 = arith.constant 0 : index
      %107 = vector.load %arg4[%106, %c0_94, %c0_95, %c0_96] : memref<5x3x128x32xbf16, #tpu.memory_space<vmem>>, vector<1x3x128x32xbf16>
      %108 = vector.shape_cast %107 : vector<1x3x128x32xbf16> to vector<3x128x32xbf16>
      %109 = arith.index_cast %98 : i32 to index
      %c0_97 = arith.constant 0 : index
      %c0_98 = arith.constant 0 : index
      %110 = vector.load %arg5[%109, %c0_97, %c0_98] : memref<5x1x32xf32, #tpu.memory_space<vmem>>, vector<1x1x32xf32>
      %111 = vector.shape_cast %110 : vector<1x1x32xf32> to vector<1x32xf32>
      %c0_99 = arith.constant 0 : index
      %c0_100 = arith.constant 0 : index
      %c0_101 = arith.constant 0 : index
      %112 = vector.load %arg9[%c0_99, %c0_100, %c0_101] : memref<10x8x128xbf16, #tpu.memory_space<vmem>>, vector<8x8x128xbf16>
      %113 = vector.shape_cast %112 : vector<8x8x128xbf16> to vector<64x128xbf16>
      %114 = vector.extract_strided_slice %108 {offsets = [0, 0, 0], sizes = [1, 128, 32], strides = [1, 1, 1]} : vector<3x128x32xbf16> to vector<1x128x32xbf16>
      %115 = vector.shape_cast %114 : vector<1x128x32xbf16> to vector<128x32xbf16>
      %cst_102 = arith.constant dense<0.000000e+00> : vector<64x32xf32>
      %116 = tpu.matmul %113, %115, %cst_102 {dimension_numbers = #tpu.dot_dimension_numbers<[1], [0], [0], [1], [0, 0, 1, 1], [], []>} : vector<64x128xbf16>, vector<128x32xbf16>, vector<64x32xf32> -> vector<64x32xf32>
      %117 = vector.broadcast %111 : vector<1x32xf32> to vector<64x32xf32>
      %118 = arith.addf %117, %116 : vector<64x32xf32>
      %c1_103 = arith.constant 1 : index
      %c0_104 = arith.constant 0 : index
      %c0_105 = arith.constant 0 : index
      %119 = vector.load %arg9[%c1_103, %c0_104, %c0_105] : memref<10x8x128xbf16, #tpu.memory_space<vmem>>, vector<8x8x128xbf16>
      %120 = vector.shape_cast %119 : vector<8x8x128xbf16> to vector<64x128xbf16>
      %121 = vector.extract_strided_slice %108 {offsets = [1, 0, 0], sizes = [1, 128, 32], strides = [1, 1, 1]} : vector<3x128x32xbf16> to vector<1x128x32xbf16>
      %122 = vector.shape_cast %121 : vector<1x128x32xbf16> to vector<128x32xbf16>
      %cst_106 = arith.constant dense<0.000000e+00> : vector<64x32xf32>
      %123 = tpu.matmul %120, %122, %cst_106 {dimension_numbers = #tpu.dot_dimension_numbers<[1], [0], [0], [1], [0, 0, 1, 1], [], []>} : vector<64x128xbf16>, vector<128x32xbf16>, vector<64x32xf32> -> vector<64x32xf32>
      %124 = arith.addf %118, %123 : vector<64x32xf32>
      %c2_107 = arith.constant 2 : index
      %c0_108 = arith.constant 0 : index
      %c0_109 = arith.constant 0 : index
      %125 = vector.load %arg9[%c2_107, %c0_108, %c0_109] : memref<10x8x128xbf16, #tpu.memory_space<vmem>>, vector<8x8x128xbf16>
      %126 = vector.shape_cast %125 : vector<8x8x128xbf16> to vector<64x128xbf16>
      %127 = vector.extract_strided_slice %108 {offsets = [2, 0, 0], sizes = [1, 128, 32], strides = [1, 1, 1]} : vector<3x128x32xbf16> to vector<1x128x32xbf16>
      %128 = vector.shape_cast %127 : vector<1x128x32xbf16> to vector<128x32xbf16>
      %cst_110 = arith.constant dense<0.000000e+00> : vector<64x32xf32>
      %129 = tpu.matmul %126, %128, %cst_110 {dimension_numbers = #tpu.dot_dimension_numbers<[1], [0], [0], [1], [0, 0, 1, 1], [], []>} : vector<64x128xbf16>, vector<128x32xbf16>, vector<64x32xf32> -> vector<64x32xf32>
      %130 = arith.addf %124, %129 : vector<64x32xf32>
      %131 = arith.addf %130, %arg11 : vector<64x32xf32>
      scf.yield %131 : vector<64x32xf32>
    }
    %c2_i32_20 = arith.constant 2 : i32
    %19 = arith.truncf %18 : vector<64x32xf32> to vector<64x32xbf16>
    %20 = vector.shape_cast %19 : vector<64x32xbf16> to vector<8x8x32xbf16>
    %c1_21 = arith.constant 1 : index
    %c0_22 = arith.constant 0 : index
    %c32 = arith.constant 32 : index
    %21 = vector.load %arg9[%c1_21, %c0_22, %c32] : memref<10x8x128xbf16, #tpu.memory_space<vmem>>, vector<8x8x32xbf16>
    tpu.vector_store %arg9[%c1_21, %c0_22, %c32], %20 {strides = array<i32>} : memref<10x8x128xbf16, #tpu.memory_space<vmem>>, vector<8x8x32xbf16>,
    %22 = vector.extract_strided_slice %20 {offsets = [0, 0, 0], sizes = [8, 7, 32], strides = [1, 1, 1]} : vector<8x8x32xbf16> to vector<8x7x32xbf16>
    %c1_23 = arith.constant 1 : index
    %c1_24 = arith.constant 1 : index
    %c0_25 = arith.constant 0 : index
    %23 = vector.load %arg9[%c1_23, %c1_24, %c0_25] : memref<10x8x128xbf16, #tpu.memory_space<vmem>>, vector<8x7x32xbf16>
    tpu.vector_store %arg9[%c1_23, %c1_24, %c0_25], %22 {strides = array<i32>} : memref<10x8x128xbf16, #tpu.memory_space<vmem>>, vector<8x7x32xbf16>,
    %24 = vector.extract_strided_slice %20 {offsets = [0, 1, 0], sizes = [8, 7, 32], strides = [1, 1, 1]} : vector<8x8x32xbf16> to vector<8x7x32xbf16>
    %c1_26 = arith.constant 1 : index
    %c0_27 = arith.constant 0 : index
    %c64_28 = arith.constant 64 : index
    %25 = vector.load %arg9[%c1_26, %c0_27, %c64_28] : memref<10x8x128xbf16, #tpu.memory_space<vmem>>, vector<8x7x32xbf16>
    tpu.vector_store %arg9[%c1_26, %c0_27, %c64_28], %24 {strides = array<i32>} : memref<10x8x128xbf16, #tpu.memory_space<vmem>>, vector<8x7x32xbf16>,
    %c4 = arith.constant 4 : index
    %c0_29 = arith.constant 0 : index
    %c0_30 = arith.constant 0 : index
    %c0_31 = arith.constant 0 : index
    %26 = vector.load %arg4[%c4, %c0_29, %c0_30, %c0_31] : memref<5x3x128x32xbf16, #tpu.memory_space<vmem>>, vector<1x3x128x32xbf16>
    %27 = vector.shape_cast %26 : vector<1x3x128x32xbf16> to vector<3x128x32xbf16>
    %c4_32 = arith.constant 4 : index
    %c0_33 = arith.constant 0 : index
    %c0_34 = arith.constant 0 : index
    %28 = vector.load %arg5[%c4_32, %c0_33, %c0_34] : memref<5x1x32xf32, #tpu.memory_space<vmem>>, vector<1x1x32xf32>
    %29 = vector.shape_cast %28 : vector<1x1x32xf32> to vector<1x32xf32>
    %c0_35 = arith.constant 0 : index
    %c0_36 = arith.constant 0 : index
    %c0_37 = arith.constant 0 : index
    %30 = vector.load %arg9[%c0_35, %c0_36, %c0_37] : memref<10x8x128xbf16, #tpu.memory_space<vmem>>, vector<8x8x128xbf16>
    %31 = vector.shape_cast %30 : vector<8x8x128xbf16> to vector<64x128xbf16>
    %32 = vector.extract_strided_slice %27 {offsets = [0, 0, 0], sizes = [1, 128, 32], strides = [1, 1, 1]} : vector<3x128x32xbf16> to vector<1x128x32xbf16>
    %33 = vector.shape_cast %32 : vector<1x128x32xbf16> to vector<128x32xbf16>
    %cst_38 = arith.constant dense<0.000000e+00> : vector<64x32xf32>
    %34 = tpu.matmul %31, %33, %cst_38 {dimension_numbers = #tpu.dot_dimension_numbers<[1], [0], [0], [1], [0, 0, 1, 1], [], []>} : vector<64x128xbf16>, vector<128x32xbf16>, vector<64x32xf32> -> vector<64x32xf32>
    %35 = vector.broadcast %29 : vector<1x32xf32> to vector<64x32xf32>
    %36 = arith.addf %35, %34 : vector<64x32xf32>
    %c1_39 = arith.constant 1 : index
    %c0_40 = arith.constant 0 : index
    %c0_41 = arith.constant 0 : index
    %37 = vector.load %arg9[%c1_39, %c0_40, %c0_41] : memref<10x8x128xbf16, #tpu.memory_space<vmem>>, vector<8x8x128xbf16>
    %38 = vector.shape_cast %37 : vector<8x8x128xbf16> to vector<64x128xbf16>
    %39 = vector.extract_strided_slice %27 {offsets = [1, 0, 0], sizes = [1, 128, 32], strides = [1, 1, 1]} : vector<3x128x32xbf16> to vector<1x128x32xbf16>
    %40 = vector.shape_cast %39 : vector<1x128x32xbf16> to vector<128x32xbf16>
    %cst_42 = arith.constant dense<0.000000e+00> : vector<64x32xf32>
    %41 = tpu.matmul %38, %40, %cst_42 {dimension_numbers = #tpu.dot_dimension_numbers<[1], [0], [0], [1], [0, 0, 1, 1], [], []>} : vector<64x128xbf16>, vector<128x32xbf16>, vector<64x32xf32> -> vector<64x32xf32>
    %42 = arith.addf %36, %41 : vector<64x32xf32>
    %c2 = arith.constant 2 : index
    %c0_43 = arith.constant 0 : index
    %c0_44 = arith.constant 0 : index
    %43 = vector.load %arg9[%c2, %c0_43, %c0_44] : memref<10x8x128xbf16, #tpu.memory_space<vmem>>, vector<8x8x128xbf16>
    %44 = vector.shape_cast %43 : vector<8x8x128xbf16> to vector<64x128xbf16>
    %45 = vector.extract_strided_slice %27 {offsets = [2, 0, 0], sizes = [1, 128, 32], strides = [1, 1, 1]} : vector<3x128x32xbf16> to vector<1x128x32xbf16>
    %46 = vector.shape_cast %45 : vector<1x128x32xbf16> to vector<128x32xbf16>
    %cst_45 = arith.constant dense<0.000000e+00> : vector<64x32xf32>
    %47 = tpu.matmul %44, %46, %cst_45 {dimension_numbers = #tpu.dot_dimension_numbers<[1], [0], [0], [1], [0, 0, 1, 1], [], []>} : vector<64x128xbf16>, vector<128x32xbf16>, vector<64x32xf32> -> vector<64x32xf32>
    %48 = arith.addf %42, %47 : vector<64x32xf32>
    %49 = arith.addf %48, %16 : vector<64x32xf32>
    %c0_46 = arith.constant 0 : index
    %c0_47 = arith.constant 0 : index
    %50 = vector.load %arg7[%c0_46, %c0_47] : memref<1x256xf32, #tpu.memory_space<vmem>>, vector<1x256xf32>
    %51 = arith.truncf %49 : vector<64x32xf32> to vector<64x32xbf16>
    %c0_48 = arith.constant 0 : index
    %c0_49 = arith.constant 0 : index
    %52 = vector.load %arg6[%c0_48, %c0_49] : memref<32x256xbf16, #tpu.memory_space<vmem>>, vector<32x256xbf16>
    %cst_50 = arith.constant dense<0.000000e+00> : vector<64x256xf32>
    %53 = tpu.matmul %51, %52, %cst_50 {dimension_numbers = #tpu.dot_dimension_numbers<[1], [0], [0], [1], [0, 0, 1, 1], [], []>} : vector<64x32xbf16>, vector<32x256xbf16>, vector<64x256xf32> -> vector<64x256xf32>
    %54 = vector.broadcast %50 : vector<1x256xf32> to vector<64x256xf32>
    %55 = arith.addf %54, %53 : vector<64x256xf32>
    %cst_51 = arith.constant 0.000000e+00 : f32
    %56 = vector.broadcast %cst_51 : f32 to vector<64x256xf32>
    %57 = arith.maximumf %55, %56 : vector<64x256xf32>
    %58 = arith.truncf %57 : vector<64x256xf32> to vector<64x256xbf16>
    %c0_52 = arith.constant 0 : index
    %c0_53 = arith.constant 0 : index
    %c0_54 = arith.constant 0 : index
    %59 = vector.load %arg8[%c0_52, %c0_53, %c0_54] : memref<1x64x256xbf16, #tpu.memory_space<vmem>>, vector<1x64x256xbf16>
    %60 = vector.shape_cast %59 : vector<1x64x256xbf16> to vector<64x256xbf16>
    %61 = vector.shape_cast %58 : vector<64x256xbf16> to vector<1x64x256xbf16>
    tpu.vector_store %arg8[%c0_52, %c0_53, %c0_54], %61 {strides = array<i32>} : memref<1x64x256xbf16, #tpu.memory_space<vmem>>, vector<1x64x256xbf16>,
    return
  }
  func.func @transform_0(%arg0: i32) -> (i32, i32, i32) {
    %c0_i32 = arith.constant 0 : i32
    %c0_i32_0 = arith.constant 0 : i32
    %c0_i32_1 = arith.constant 0 : i32
    return %arg0, %c0_i32, %c0_i32_0 : i32, i32, i32
  }
  func.func @transform_1(%arg0: i32) -> (i32, i32) {
    %c0_i32 = arith.constant 0 : i32
    %c0_i32_0 = arith.constant 0 : i32
    %c0_i32_1 = arith.constant 0 : i32
    return %c0_i32, %c0_i32_0 : i32, i32
  }
  func.func @transform_2(%arg0: i32) -> (i32, i32) {
    %c0_i32 = arith.constant 0 : i32
    %c0_i32_0 = arith.constant 0 : i32
    %c0_i32_1 = arith.constant 0 : i32
    return %c0_i32, %c0_i32_0 : i32, i32
  }
  func.func @transform_3(%arg0: i32) -> (i32, i32, i32, i32) {
    %c0_i32 = arith.constant 0 : i32
    %c0_i32_0 = arith.constant 0 : i32
    %c0_i32_1 = arith.constant 0 : i32
    %c0_i32_2 = arith.constant 0 : i32
    %c0_i32_3 = arith.constant 0 : i32
    return %c0_i32, %c0_i32_0, %c0_i32_1, %c0_i32_2 : i32, i32, i32, i32
  }
  func.func @transform_4(%arg0: i32) -> (i32, i32, i32) {
    %c0_i32 = arith.constant 0 : i32
    %c0_i32_0 = arith.constant 0 : i32
    %c0_i32_1 = arith.constant 0 : i32
    %c0_i32_2 = arith.constant 0 : i32
    return %c0_i32, %c0_i32_0, %c0_i32_1 : i32, i32, i32
  }
  func.func @transform_5(%arg0: i32) -> (i32, i32) {
    %c0_i32 = arith.constant 0 : i32
    %c0_i32_0 = arith.constant 0 : i32
    %c0_i32_1 = arith.constant 0 : i32
    return %c0_i32, %c0_i32_0 : i32, i32
  }
  func.func @transform_6(%arg0: i32) -> (i32, i32) {
    %c0_i32 = arith.constant 0 : i32
    %c0_i32_0 = arith.constant 0 : i32
    %c0_i32_1 = arith.constant 0 : i32
    return %c0_i32, %c0_i32_0 : i32, i32
  }
  func.func @transform_7(%arg0: i32) -> (i32, i32, i32) {
    %c0_i32 = arith.constant 0 : i32
    %c0_i32_0 = arith.constant 0 : i32
    %c0_i32_1 = arith.constant 0 : i32
    return %arg0, %c0_i32, %c0_i32_0 : i32, i32, i32
  }
}

module attributes {stable_mosaic.version = 11 : i64} {
  func.func @_final_conv_kernel(%arg0: i32, %arg1: memref<1x16x16x64xbf16, #tpu.memory_space<vmem>>, %arg2: memref<3x256x6xbf16, #tpu.memory_space<vmem>>, %arg3: memref<1x6xf32, #tpu.memory_space<vmem>>, %arg4: memref<1x256x6xf32, #tpu.memory_space<vmem>>, %arg5: memref<18x16x256xbf16, #tpu.memory_space<vmem>>) attributes {dimension_semantics = [#tpu.dimension_semantics<parallel>], iteration_bounds = array<i64: 2>, scalar_prefetch = 0 : i64, scratch_operands = 1 : i64, tpu.core_type = #tpu.core_type<tc>, window_params = [{transform_indices = @transform_0, window_bounds = array<i64: 1, 16, 16, 64>}, {pipeline_mode = #tpu.pipeline_mode<synchronous>, transform_indices = @transform_1, window_bounds = array<i64: 3, 256, 6>}, {pipeline_mode = #tpu.pipeline_mode<synchronous>, transform_indices = @transform_2, window_bounds = array<i64: 1, 6>}, {transform_indices = @transform_3, window_bounds = array<i64: 1, 256, 6>}]} {
    %cst = arith.constant 0.000000e+00 : bf16
    %0 = vector.broadcast %cst : bf16 to vector<1x16x256xbf16>
    %c0 = arith.constant 0 : index
    %c0_0 = arith.constant 0 : index
    %c0_1 = arith.constant 0 : index
    %1 = vector.load %arg5[%c0, %c0_0, %c0_1] : memref<18x16x256xbf16, #tpu.memory_space<vmem>>, vector<1x16x256xbf16>
    tpu.vector_store %arg5[%c0, %c0_0, %c0_1], %0 {strides = array<i32>} : memref<18x16x256xbf16, #tpu.memory_space<vmem>>, vector<1x16x256xbf16>,
    %c17 = arith.constant 17 : index
    %c0_2 = arith.constant 0 : index
    %c0_3 = arith.constant 0 : index
    %2 = vector.load %arg5[%c17, %c0_2, %c0_3] : memref<18x16x256xbf16, #tpu.memory_space<vmem>>, vector<1x16x256xbf16>
    tpu.vector_store %arg5[%c17, %c0_2, %c0_3], %0 {strides = array<i32>} : memref<18x16x256xbf16, #tpu.memory_space<vmem>>, vector<1x16x256xbf16>,
    %cst_4 = arith.constant 0.000000e+00 : bf16
    %3 = vector.broadcast %cst_4 : bf16 to vector<16x16x64xbf16>
    %c1 = arith.constant 1 : index
    %c0_5 = arith.constant 0 : index
    %c192 = arith.constant 192 : index
    %4 = vector.load %arg5[%c1, %c0_5, %c192] : memref<18x16x256xbf16, #tpu.memory_space<vmem>>, vector<16x16x64xbf16>
    tpu.vector_store %arg5[%c1, %c0_5, %c192], %3 {strides = array<i32>} : memref<18x16x256xbf16, #tpu.memory_space<vmem>>, vector<16x16x64xbf16>,
    %cst_6 = arith.constant 0.000000e+00 : bf16
    %5 = vector.broadcast %cst_6 : bf16 to vector<16x1x64xbf16>
    %c1_7 = arith.constant 1 : index
    %c0_8 = arith.constant 0 : index
    %c0_9 = arith.constant 0 : index
    %6 = vector.load %arg5[%c1_7, %c0_8, %c0_9] : memref<18x16x256xbf16, #tpu.memory_space<vmem>>, vector<16x1x64xbf16>
    tpu.vector_store %arg5[%c1_7, %c0_8, %c0_9], %5 {strides = array<i32>} : memref<18x16x256xbf16, #tpu.memory_space<vmem>>, vector<16x1x64xbf16>,
    %c1_10 = arith.constant 1 : index
    %c15 = arith.constant 15 : index
    %c128 = arith.constant 128 : index
    %7 = vector.load %arg5[%c1_10, %c15, %c128] : memref<18x16x256xbf16, #tpu.memory_space<vmem>>, vector<16x1x64xbf16>
    tpu.vector_store %arg5[%c1_10, %c15, %c128], %5 {strides = array<i32>} : memref<18x16x256xbf16, #tpu.memory_space<vmem>>, vector<16x1x64xbf16>,
    %c0_11 = arith.constant 0 : index
    %c0_12 = arith.constant 0 : index
    %c0_13 = arith.constant 0 : index
    %c0_14 = arith.constant 0 : index
    %8 = vector.load %arg1[%c0_11, %c0_12, %c0_13, %c0_14] : memref<1x16x16x64xbf16, #tpu.memory_space<vmem>>, vector<1x16x16x64xbf16>
    %9 = vector.shape_cast %8 : vector<1x16x16x64xbf16> to vector<16x16x64xbf16>
    %c1_15 = arith.constant 1 : index
    %c0_16 = arith.constant 0 : index
    %c64 = arith.constant 64 : index
    %10 = vector.load %arg5[%c1_15, %c0_16, %c64] : memref<18x16x256xbf16, #tpu.memory_space<vmem>>, vector<16x16x64xbf16>
    tpu.vector_store %arg5[%c1_15, %c0_16, %c64], %9 {strides = array<i32>} : memref<18x16x256xbf16, #tpu.memory_space<vmem>>, vector<16x16x64xbf16>,
    %11 = vector.extract_strided_slice %9 {offsets = [0, 0, 0], sizes = [16, 15, 64], strides = [1, 1, 1]} : vector<16x16x64xbf16> to vector<16x15x64xbf16>
    %c1_17 = arith.constant 1 : index
    %c1_18 = arith.constant 1 : index
    %c0_19 = arith.constant 0 : index
    %12 = vector.load %arg5[%c1_17, %c1_18, %c0_19] : memref<18x16x256xbf16, #tpu.memory_space<vmem>>, vector<16x15x64xbf16>
    tpu.vector_store %arg5[%c1_17, %c1_18, %c0_19], %11 {strides = array<i32>} : memref<18x16x256xbf16, #tpu.memory_space<vmem>>, vector<16x15x64xbf16>,
    %13 = vector.extract_strided_slice %9 {offsets = [0, 1, 0], sizes = [16, 15, 64], strides = [1, 1, 1]} : vector<16x16x64xbf16> to vector<16x15x64xbf16>
    %c1_20 = arith.constant 1 : index
    %c0_21 = arith.constant 0 : index
    %c128_22 = arith.constant 128 : index
    %14 = vector.load %arg5[%c1_20, %c0_21, %c128_22] : memref<18x16x256xbf16, #tpu.memory_space<vmem>>, vector<16x15x64xbf16>
    tpu.vector_store %arg5[%c1_20, %c0_21, %c128_22], %13 {strides = array<i32>} : memref<18x16x256xbf16, #tpu.memory_space<vmem>>, vector<16x15x64xbf16>,
    %c0_23 = arith.constant 0 : index
    %c0_24 = arith.constant 0 : index
    %15 = vector.load %arg3[%c0_23, %c0_24] : memref<1x6xf32, #tpu.memory_space<vmem>>, vector<1x6xf32>
    %c0_25 = arith.constant 0 : index
    %c0_26 = arith.constant 0 : index
    %c0_27 = arith.constant 0 : index
    %16 = vector.load %arg5[%c0_25, %c0_26, %c0_27] : memref<18x16x256xbf16, #tpu.memory_space<vmem>>, vector<16x16x256xbf16>
    %17 = vector.shape_cast %16 : vector<16x16x256xbf16> to vector<256x256xbf16>
    %c0_28 = arith.constant 0 : index
    %c0_29 = arith.constant 0 : index
    %c0_30 = arith.constant 0 : index
    %18 = vector.load %arg2[%c0_28, %c0_29, %c0_30] : memref<3x256x6xbf16, #tpu.memory_space<vmem>>, vector<1x256x6xbf16>
    %19 = vector.shape_cast %18 : vector<1x256x6xbf16> to vector<256x6xbf16>
    %cst_31 = arith.constant dense<0.000000e+00> : vector<256x6xf32>
    %20 = tpu.matmul %17, %19, %cst_31 {dimension_numbers = #tpu.dot_dimension_numbers<[1], [0], [0], [1], [0, 0, 1, 1], [], []>} : vector<256x256xbf16>, vector<256x6xbf16>, vector<256x6xf32> -> vector<256x6xf32>
    %21 = vector.broadcast %15 : vector<1x6xf32> to vector<256x6xf32>
    %22 = arith.addf %21, %20 : vector<256x6xf32>
    %c1_32 = arith.constant 1 : index
    %c0_33 = arith.constant 0 : index
    %c0_34 = arith.constant 0 : index
    %23 = vector.load %arg5[%c1_32, %c0_33, %c0_34] : memref<18x16x256xbf16, #tpu.memory_space<vmem>>, vector<16x16x256xbf16>
    %24 = vector.shape_cast %23 : vector<16x16x256xbf16> to vector<256x256xbf16>
    %c1_35 = arith.constant 1 : index
    %c0_36 = arith.constant 0 : index
    %c0_37 = arith.constant 0 : index
    %25 = vector.load %arg2[%c1_35, %c0_36, %c0_37] : memref<3x256x6xbf16, #tpu.memory_space<vmem>>, vector<1x256x6xbf16>
    %26 = vector.shape_cast %25 : vector<1x256x6xbf16> to vector<256x6xbf16>
    %cst_38 = arith.constant dense<0.000000e+00> : vector<256x6xf32>
    %27 = tpu.matmul %24, %26, %cst_38 {dimension_numbers = #tpu.dot_dimension_numbers<[1], [0], [0], [1], [0, 0, 1, 1], [], []>} : vector<256x256xbf16>, vector<256x6xbf16>, vector<256x6xf32> -> vector<256x6xf32>
    %28 = arith.addf %22, %27 : vector<256x6xf32>
    %c2 = arith.constant 2 : index
    %c0_39 = arith.constant 0 : index
    %c0_40 = arith.constant 0 : index
    %29 = vector.load %arg5[%c2, %c0_39, %c0_40] : memref<18x16x256xbf16, #tpu.memory_space<vmem>>, vector<16x16x256xbf16>
    %30 = vector.shape_cast %29 : vector<16x16x256xbf16> to vector<256x256xbf16>
    %c2_41 = arith.constant 2 : index
    %c0_42 = arith.constant 0 : index
    %c0_43 = arith.constant 0 : index
    %31 = vector.load %arg2[%c2_41, %c0_42, %c0_43] : memref<3x256x6xbf16, #tpu.memory_space<vmem>>, vector<1x256x6xbf16>
    %32 = vector.shape_cast %31 : vector<1x256x6xbf16> to vector<256x6xbf16>
    %cst_44 = arith.constant dense<0.000000e+00> : vector<256x6xf32>
    %33 = tpu.matmul %30, %32, %cst_44 {dimension_numbers = #tpu.dot_dimension_numbers<[1], [0], [0], [1], [0, 0, 1, 1], [], []>} : vector<256x256xbf16>, vector<256x6xbf16>, vector<256x6xf32> -> vector<256x6xf32>
    %34 = arith.addf %28, %33 : vector<256x6xf32>
    %c0_45 = arith.constant 0 : index
    %c0_46 = arith.constant 0 : index
    %c0_47 = arith.constant 0 : index
    %35 = vector.load %arg4[%c0_45, %c0_46, %c0_47] : memref<1x256x6xf32, #tpu.memory_space<vmem>>, vector<1x256x6xf32>
    %36 = vector.shape_cast %35 : vector<1x256x6xf32> to vector<256x6xf32>
    %37 = vector.shape_cast %34 : vector<256x6xf32> to vector<1x256x6xf32>
    tpu.vector_store %arg4[%c0_45, %c0_46, %c0_47], %37 {strides = array<i32>} : memref<1x256x6xf32, #tpu.memory_space<vmem>>, vector<1x256x6xf32>,
    return
  }
  func.func @transform_0(%arg0: i32) -> (i32, i32, i32, i32) {
    %c0_i32 = arith.constant 0 : i32
    %c0_i32_0 = arith.constant 0 : i32
    %c0_i32_1 = arith.constant 0 : i32
    %c0_i32_2 = arith.constant 0 : i32
    return %arg0, %c0_i32, %c0_i32_0, %c0_i32_1 : i32, i32, i32, i32
  }
  func.func @transform_1(%arg0: i32) -> (i32, i32, i32) {
    %c0_i32 = arith.constant 0 : i32
    %c0_i32_0 = arith.constant 0 : i32
    %c0_i32_1 = arith.constant 0 : i32
    %c0_i32_2 = arith.constant 0 : i32
    return %c0_i32, %c0_i32_0, %c0_i32_1 : i32, i32, i32
  }
  func.func @transform_2(%arg0: i32) -> (i32, i32) {
    %c0_i32 = arith.constant 0 : i32
    %c0_i32_0 = arith.constant 0 : i32
    %c0_i32_1 = arith.constant 0 : i32
    return %c0_i32, %c0_i32_0 : i32, i32
  }
  func.func @transform_3(%arg0: i32) -> (i32, i32, i32) {
    %c0_i32 = arith.constant 0 : i32
    %c0_i32_0 = arith.constant 0 : i32
    %c0_i32_1 = arith.constant 0 : i32
    return %arg0, %c0_i32, %c0_i32_0 : i32, i32, i32
  }
}

</mosaic_0001>

<llo_original>
// kernel: estnet_forward_pallas.2
$region0: #{estnet_forward_pallas.2}
  #allocation0 [shape = 'u32[]', space=smem, size = 0x4, offset = 0x4, fixed_abs, tag = 'smem constant byte address 0x4 - core index']
  #allocation1 [shape = 'u32[144,128]{1,0:T(1,128)}', space=vmem, size = 0x12000, scoped, tag = 'internal scratch']
  #allocation2 [shape = 'bf16[10,8,128]{2,1,0:T(8,128)(2,1)}', space=vmem, size = 0x5000, scoped, tag = 'scratch operand']
  %s0 = inlined_call_operand.vmem [shape: bf16[2,64,12], index: 0, kind: input, shape index: {}]
  %s1 = inlined_call_operand.vmem [shape: bf16[12,32], index: 1, kind: input, shape index: {}]
  %s2 = inlined_call_operand.vmem [shape: f32[1,32], index: 2, kind: input, shape index: {}]
  %s3 = inlined_call_operand.vmem [shape: bf16[5,3,128,32], index: 3, kind: input, shape index: {}]
  %s4 = inlined_call_operand.vmem [shape: f32[5,1,32], index: 4, kind: input, shape index: {}]
  %s5 = inlined_call_operand.vmem [shape: bf16[32,256], index: 5, kind: input, shape index: {}]
  %s6 = inlined_call_operand.vmem [shape: f32[1,256], index: 6, kind: input, shape index: {}]
  %s7 = inlined_call_operand.vmem [shape: bf16[2,64,256], index: 7, kind: output, shape index: {}]
  %s8 = sld [smem:[#allocation0]]
  $region68: #{estnet_forward_pallas.2} parent=0
    _
  %s10 = ssub.s32 1, %s8
  %s11 = scalar_select 0, %s10, %s8
  loop: start=0, step=1, limit=4
  $region2: #{estnet_forward_pallas.2} parent=0 // loop_pre_header
    _
  $region3: #{estnet_forward_pallas.2} parent=0 // loop_header
    %s13 = sphi 0, %s17
    %p14 = scmp.ge.s32.totalorder %s13, 4
    %s23 = sphi 0, %s25
    %s26 = sphi 0, %s23
    %s27 = sphi 0, %s26
    %s43 = sphi 0, %s27
    %s47 = sphi 0, %s47
    %s49 = sphi 0, %s47
    %s50 = sphi 0, %s49
    %s64 = sphi 0, %s50
    %s68 = sphi 0, %s68
    %s70 = sphi 0, %s68
    %s71 = sphi 0, %s70
    %s85 = sphi 0, %s71
    %s89 = sphi 0, %s89
    %s91 = sphi 0, %s89
    %s92 = sphi 0, %s91
    %s106 = sphi 0, %s92
    %s110 = sphi 0, %s110
    %s112 = sphi 0, %s110
    %s113 = sphi 0, %s112
    %s127 = sphi 0, %s113
    %s131 = sphi 0, %s131
    %s133 = sphi 0, %s131
    %s134 = sphi 0, %s133
    %s148 = sphi 0, %s134
    %s152 = sphi 0, %s152
    %s154 = sphi 0, %s152
    %s155 = sphi 0, %s154
    %s169 = sphi 0, %s155
    %s175 = sphi 0, %s177
    %s178 = sphi 0, %s175
    %s179 = sphi 0, %s178
    %s195 = sphi 0, %s179
  $region4: #{estnet_forward_pallas.2} parent=0 // loop_header_branch
    %16 = sbr.rel (%p14) target = $region8
  $region5: #{estnet_forward_pallas.2} parent=0 // loop_body
    %s18 = ssub.s32 %s13, 1
    %s19 = ssub.s32 %s13, 2
    %s20 = sadd.s32 %s13, 1
    %s21 = ssub.s32 %s13, %s20
    %p22 = scmp.eq.s32.totalorder %s21, 0
    %s24 = sadd.s32 %s23, 1
    %s25 = scalar_select %p22, %s23, %s24
    %p28 = pneg %p22
    %p29 = scmp.eq.s32.totalorder %s13, 1
    %p30 = por %p28, %p29
    %p31 = scmp.ne.s32.totalorder %s23, %s26
    %p32 = scmp.eq.s32.totalorder %s13, 0
    %p33 = por %p31, %p32
    %p34 = scmp.ne.s32.totalorder %s23, %s26
    %p35 = scmp.eq.s32.totalorder %s18, 1
    %p36 = por %p34, %p35
    %p37 = scmp.ne.s32.totalorder %s26, %s27
    %p38 = scmp.eq.s32.totalorder %s18, 0
    %p39 = por %p37, %p38
    %p40 = scmp.ne.s32.totalorder %s26, %s27
    %p41 = scmp.eq.s32.totalorder %s19, 1
    %p42 = por %p40, %p41
    %p44 = scmp.ne.s32.totalorder %s27, %s43
    %p45 = scmp.eq.s32.totalorder %s19, 0
    %p46 = por %p44, %p45
    %s48 = sadd.s32 %s47, 1
    %p51 = scmp.eq.s32.totalorder %s13, 1
    %p52 = scmp.ne.s32.totalorder %s47, %s49
    %p53 = scmp.eq.s32.totalorder %s13, 0
    %p54 = por %p52, %p53
    %p55 = scmp.ne.s32.totalorder %s47, %s49
    %p56 = scmp.eq.s32.totalorder %s18, 1
    %p57 = por %p55, %p56
    %p58 = scmp.ne.s32.totalorder %s49, %s50
    %p59 = scmp.eq.s32.totalorder %s18, 0
    %p60 = por %p58, %p59
    %p61 = scmp.ne.s32.totalorder %s49, %s50
    %p62 = scmp.eq.s32.totalorder %s19, 1
    %p63 = por %p61, %p62
    %p65 = scmp.ne.s32.totalorder %s50, %s64
    %p66 = scmp.eq.s32.totalorder %s19, 0
    %p67 = por %p65, %p66
    %s69 = sadd.s32 %s68, 1
    %p72 = scmp.eq.s32.totalorder %s13, 1
    %p73 = scmp.ne.s32.totalorder %s68, %s70
    %p74 = scmp.eq.s32.totalorder %s13, 0
    %p75 = por %p73, %p74
    %p76 = scmp.ne.s32.totalorder %s68, %s70
    %p77 = scmp.eq.s32.totalorder %s18, 1
    %p78 = por %p76, %p77
    %p79 = scmp.ne.s32.totalorder %s70, %s71
    %p80 = scmp.eq.s32.totalorder %s18, 0
    %p81 = por %p79, %p80
    %p82 = scmp.ne.s32.totalorder %s70, %s71
    %p83 = scmp.eq.s32.totalorder %s19, 1
    %p84 = por %p82, %p83
    %p86 = scmp.ne.s32.totalorder %s71, %s85
    %p87 = scmp.eq.s32.totalorder %s19, 0
    %p88 = por %p86, %p87
    %s90 = sadd.s32 %s89, 1
    %p93 = scmp.eq.s32.totalorder %s13, 1
    %p94 = scmp.ne.s32.totalorder %s89, %s91
    %p95 = scmp.eq.s32.totalorder %s13, 0
    %p96 = por %p94, %p95
    %p97 = scmp.ne.s32.totalorder %s89, %s91
    %p98 = scmp.eq.s32.totalorder %s18, 1
    %p99 = por %p97, %p98
    %p100 = scmp.ne.s32.totalorder %s91, %s92
    %p101 = scmp.eq.s32.totalorder %s18, 0
    %p102 = por %p100, %p101
    %p103 = scmp.ne.s32.totalorder %s91, %s92
    %p104 = scmp.eq.s32.totalorder %s19, 1
    %p105 = por %p103, %p104
    %p107 = scmp.ne.s32.totalorder %s92, %s106
    %p108 = scmp.eq.s32.totalorder %s19, 0
    %p109 = por %p107, %p108
    %s111 = sadd.s32 %s110, 1
    %p114 = scmp.eq.s32.totalorder %s13, 1
    %p115 = scmp.ne.s32.totalorder %s110, %s112
    %p116 = scmp.eq.s32.totalorder %s13, 0
    %p117 = por %p115, %p116
    %p118 = scmp.ne.s32.totalorder %s110, %s112
    %p119 = scmp.eq.s32.totalorder %s18, 1
    %p120 = por %p118, %p119
    %p121 = scmp.ne.s32.totalorder %s112, %s113
    %p122 = scmp.eq.s32.totalorder %s18, 0
    %p123 = por %p121, %p122
    %p124 = scmp.ne.s32.totalorder %s112, %s113
    %p125 = scmp.eq.s32.totalorder %s19, 1
    %p126 = por %p124, %p125
    %p128 = scmp.ne.s32.totalorder %s113, %s127
    %p129 = scmp.eq.s32.totalorder %s19, 0
    %p130 = por %p128, %p129
    %s132 = sadd.s32 %s131, 1
    %p135 = scmp.eq.s32.totalorder %s13, 1
    %p136 = scmp.ne.s32.totalorder %s131, %s133
    %p137 = scmp.eq.s32.totalorder %s13, 0
    %p138 = por %p136, %p137
    %p139 = scmp.ne.s32.totalorder %s131, %s133
    %p140 = scmp.eq.s32.totalorder %s18, 1
    %p141 = por %p139, %p140
    %p142 = scmp.ne.s32.totalorder %s133, %s134
    %p143 = scmp.eq.s32.totalorder %s18, 0
    %p144 = por %p142, %p143
    %p145 = scmp.ne.s32.totalorder %s133, %s134
    %p146 = scmp.eq.s32.totalorder %s19, 1
    %p147 = por %p145, %p146
    %p149 = scmp.ne.s32.totalorder %s134, %s148
    %p150 = scmp.eq.s32.totalorder %s19, 0
    %p151 = por %p149, %p150
    %s153 = sadd.s32 %s152, 1
    %p156 = scmp.eq.s32.totalorder %s13, 1
    %p157 = scmp.ne.s32.totalorder %s152, %s154
    %p158 = scmp.eq.s32.totalorder %s13, 0
    %p159 = por %p157, %p158
    %p160 = scmp.ne.s32.totalorder %s152, %s154
    %p161 = scmp.eq.s32.totalorder %s18, 1
    %p162 = por %p160, %p161
    %p163 = scmp.ne.s32.totalorder %s154, %s155
    %p164 = scmp.eq.s32.totalorder %s18, 0
    %p165 = por %p163, %p164
    %p166 = scmp.ne.s32.totalorder %s154, %s155
    %p167 = scmp.eq.s32.totalorder %s19, 1
    %p168 = por %p166, %p167
    %p170 = scmp.ne.s32.totalorder %s155, %s169
    %p171 = scmp.eq.s32.totalorder %s19, 0
    %p172 = por %p170, %p171
    %s173 = ssub.s32 %s13, %s20
    %p174 = scmp.eq.s32.totalorder %s173, 0
    %s176 = sadd.s32 %s175, 1
    %s177 = scalar_select %p174, %s175, %s176
    %p180 = pneg %p174
    %p181 = scmp.eq.s32.totalorder %s13, 1
    %p182 = por %p180, %p181
    %p183 = scmp.ne.s32.totalorder %s175, %s178
    %p184 = scmp.eq.s32.totalorder %s13, 0
    %p185 = por %p183, %p184
    %p186 = scmp.ne.s32.totalorder %s175, %s178
    %p187 = scmp.eq.s32.totalorder %s18, 1
    %p188 = por %p186, %p187
    %p189 = scmp.ne.s32.totalorder %s178, %s179
    %p190 = scmp.eq.s32.totalorder %s18, 0
    %p191 = por %p189, %p190
    %p192 = scmp.ne.s32.totalorder %s178, %s179
    %p193 = scmp.eq.s32.totalorder %s19, 1
    %p194 = por %p192, %p193
    %p196 = scmp.ne.s32.totalorder %s179, %s195
    %p197 = scmp.eq.s32.totalorder %s19, 0
    %p198 = por %p196, %p197
    %p199 = scmp.le.s32.totalorder 1, %s13
    %p200 = scmp.lt.s32.totalorder %s13, 3
    %p201 = pnand %p199, %p200
    %p202 = pneg %p201
    // Predicated region
    $region9: #{estnet_forward_pallas.2} parent=5 // pred_check
      _
    $region10: #{estnet_forward_pallas.2} parent=5 // pred_check_branch
      %204 = sbr.rel (%p201) target = $region12
    $region11: #{estnet_forward_pallas.2} parent=5 // pred_region
      %s205 = ssub.s32 %s13, 1
      // Predicated region
      $region13: #{estnet_forward_pallas.2} parent=11 // pred_check
        %p206 = pneg %p60
      $region14: #{estnet_forward_pallas.2} parent=11 // pred_check_branch
        %208 = sbr.rel (%p206) target = $region16
      $region15: #{estnet_forward_pallas.2} parent=11 // pred_region
        _
      $region16: #{estnet_forward_pallas.2} parent=11 // pred_fallthru
        _
      // Predicated region
      $region17: #{estnet_forward_pallas.2} parent=11 // pred_check
        %p209 = pneg %p81
      $region18: #{estnet_forward_pallas.2} parent=11 // pred_check_branch
        %211 = sbr.rel (%p209) target = $region20
      $region19: #{estnet_forward_pallas.2} parent=11 // pred_region
        _
      $region20: #{estnet_forward_pallas.2} parent=11 // pred_fallthru
        _
      // Predicated region
      $region21: #{estnet_forward_pallas.2} parent=11 // pred_check
        %p212 = pneg %p102
      $region22: #{estnet_forward_pallas.2} parent=11 // pred_check_branch
        %214 = sbr.rel (%p212) target = $region24
      $region23: #{estnet_forward_pallas.2} parent=11 // pred_region
        _
      $region24: #{estnet_forward_pallas.2} parent=11 // pred_fallthru
        _
      // Predicated region
      $region25: #{estnet_forward_pallas.2} parent=11 // pred_check
        %p215 = pneg %p123
      $region26: #{estnet_forward_pallas.2} parent=11 // pred_check_branch
        %217 = sbr.rel (%p215) target = $region28
      $region27: #{estnet_forward_pallas.2} parent=11 // pred_region
        _
      $region28: #{estnet_forward_pallas.2} parent=11 // pred_fallthru
        _
      // Predicated region
      $region29: #{estnet_forward_pallas.2} parent=11 // pred_check
        %p218 = pneg %p144
      $region30: #{estnet_forward_pallas.2} parent=11 // pred_check_branch
        %220 = sbr.rel (%p218) target = $region32
      $region31: #{estnet_forward_pallas.2} parent=11 // pred_region
        _
      $region32: #{estnet_forward_pallas.2} parent=11 // pred_fallthru
        _
      // Predicated region
      $region33: #{estnet_forward_pallas.2} parent=11 // pred_check
        %p221 = pneg %p165
      $region34: #{estnet_forward_pallas.2} parent=11 // pred_check_branch
        %223 = sbr.rel (%p221) target = $region36
      $region35: #{estnet_forward_pallas.2} parent=11 // pred_region
        _
      $region36: #{estnet_forward_pallas.2} parent=11 // pred_fallthru
        _
    $region12: #{estnet_forward_pallas.2} parent=5 // pred_fallthru
      _
    %p224 = scmp.lt.s32.totalorder %s13, 2
    // Predicated region
    $region37: #{estnet_forward_pallas.2} parent=5 // pred_check
      %p225 = pneg %p224
    $region38: #{estnet_forward_pallas.2} parent=5 // pred_check_branch
      %227 = sbr.rel (%p225) target = $region40
    $region39: #{estnet_forward_pallas.2} parent=5 // pred_region
      // Predicated region
      $region41: #{estnet_forward_pallas.2} parent=39 // pred_check
        %p228 = pneg %p33
      $region42: #{estnet_forward_pallas.2} parent=39 // pred_check_branch
        %230 = sbr.rel (%p228) target = $region44
      $region43: #{estnet_forward_pallas.2} parent=39 // pred_region
        %p231 = scmp.lt.s32.totalorder %s13, 1
        %s232 = scalar_select %p231, %s13, 1
        %s233 = smul.addr %s232, 8
        %s234 = smul.addr %s233, 4
        %s235 = scalar_lea.vmem %s0, %s234
      $region44: #{estnet_forward_pallas.2} parent=39 // pred_fallthru
        _
    $region40: #{estnet_forward_pallas.2} parent=5 // pred_fallthru
      _
    %p236 = scmp.le.s32.totalorder 1, %s13
    %p237 = scmp.lt.s32.totalorder %s13, 3
    %p238 = pnand %p236, %p237
    %p239 = pneg %p238
    // Predicated region
    $region45: #{estnet_forward_pallas.2} parent=5 // pred_check
      _
    $region46: #{estnet_forward_pallas.2} parent=5 // pred_check_branch
      %241 = sbr.rel (%p238) target = $region48
    $region47: #{estnet_forward_pallas.2} parent=5 // pred_region
      %s242 = ssub.s32 %s13, 1
      %p243 = scmp.lt.s32.totalorder %s18, 1
      %s244 = scalar_select %p243, %s18, 1
      %s245 = smul.addr %s244, 8
      %s246 = smul.addr %s245, 4
      %s247 = scalar_lea.vmem %s0, %s246
      %p248 = pneg %p39
      %p249 = pneg %p36
      %p250 = pneg %p60
      %p251 = pneg %p57
      %p252 = pneg %p81
      %p253 = pneg %p78
      %p254 = pneg %p102
      %p255 = pneg %p99
      %p256 = pneg %p123
      %p257 = pneg %p120
      %p258 = pneg %p144
      %p259 = pneg %p141
      %p260 = pneg %p165
      %p261 = pneg %p162
      %p262 = pneg %p191
      %p263 = pneg %p188
      %p264 = scmp.lt.s32.totalorder %s18, 1
      %s265 = scalar_select %p264, %s18, 1
      %s266 = smul.addr %s265, 16
      %s267 = smul.addr %s266, 4
      %s268 = scalar_lea.vmem %s7, %s267
      %p269 = scmp.lt.s32.totalorder %s18, 1
      %s270 = scalar_select %p269, %s18, 1
      %s271 = smul.addr %s270, 8
      %s272 = smul.addr %s271, 4
      %s273 = scalar_lea.vmem %s0, %s272
      %p274 = scmp.lt.s32.totalorder %s18, 1
      %s275 = scalar_select %p274, %s18, 1
      %s276 = smul.addr %s275, 16
      %s277 = smul.addr %s276, 4
      %s278 = scalar_lea.vmem %s7, %s277
      %280 = vst [vmem:[#allocation2] sm:$0xf] 0
      %s281 = scalar_lea.vmem [#allocation2], 36
      %282 = vst [vmem:[%s281] sm:$0xf] 0
      %s283 = scalar_lea.vmem [#allocation2], 4
      %vm284 = vcmask 1044224
      %285 = vst.msk [vmem:[%s283] sm:$0xf] %vm284, 0
      %286 = vst.msk [vmem:[%s283 + $0x4] sm:$0xf] %vm284, 0
      %287 = vst.msk [vmem:[%s283 + $0x8] sm:$0xf] %vm284, 0
      %288 = vst.msk [vmem:[%s283 + $0xc] sm:$0xf] %vm284, 0
      %289 = vst.msk [vmem:[%s283 + $0x10] sm:$0xf] %vm284, 0
      %290 = vst.msk [vmem:[%s283 + $0x14] sm:$0xf] %vm284, 0
      %291 = vst.msk [vmem:[%s283 + $0x18] sm:$0xf] %vm284, 0
      %292 = vst.msk [vmem:[%s283 + $0x1c] sm:$0xf] %vm284, 0
      %vm293 = vcmask 253952
      %vm294 = vsmask.f32 256
      %vm295 = vmand %vm293, %vm294
      %v296 = vld [vmem:[%s283] sm:$0x1]
      %v297 = vsel %vm295, 0, %v296
      %298 = vst [vmem:[%s283] sm:$0x1] %v297
      %v299 = vld [vmem:[%s283 + $0x4] sm:$0x1]
      %v300 = vsel %vm295, 0, %v299
      %301 = vst [vmem:[%s283 + $0x4] sm:$0x1] %v300
      %v302 = vld [vmem:[%s283 + $0x8] sm:$0x1]
      %v303 = vsel %vm295, 0, %v302
      %304 = vst [vmem:[%s283 + $0x8] sm:$0x1] %v303
      %v305 = vld [vmem:[%s283 + $0xc] sm:$0x1]
      %v306 = vsel %vm295, 0, %v305
      %307 = vst [vmem:[%s283 + $0xc] sm:$0x1] %v306
      %v308 = vld [vmem:[%s283 + $0x10] sm:$0x1]
      %v309 = vsel %vm295, 0, %v308
      %310 = vst [vmem:[%s283 + $0x10] sm:$0x1] %v309
      %v311 = vld [vmem:[%s283 + $0x14] sm:$0x1]
      %v312 = vsel %vm295, 0, %v311
      %313 = vst [vmem:[%s283 + $0x14] sm:$0x1] %v312
      %v314 = vld [vmem:[%s283 + $0x18] sm:$0x1]
      %v315 = vsel %vm295, 0, %v314
      %316 = vst [vmem:[%s283 + $0x18] sm:$0x1] %v315
      %v317 = vld [vmem:[%s283 + $0x1c] sm:$0x1]
      %v318 = vsel %vm295, 0, %v317
      %319 = vst [vmem:[%s283 + $0x1c] sm:$0x1] %v318
      %vm320 = vcmask 781827
      %vm321 = vsmask.f32 7950
      %vm322 = vmand %vm320, %vm321
      %v323 = vld [vmem:[%s283] sm:$0x8]
      %v324 = vsel %vm322, 0, %v323
      %325 = vst [vmem:[%s283] sm:$0x8] %v324
      %v326 = vld [vmem:[%s283 + $0x4] sm:$0x8]
      %v327 = vsel %vm322, 0, %v326
      %328 = vst [vmem:[%s283 + $0x4] sm:$0x8] %v327
      %v329 = vld [vmem:[%s283 + $0x8] sm:$0x8]
      %v330 = vsel %vm322, 0, %v329
      %331 = vst [vmem:[%s283 + $0x8] sm:$0x8] %v330
      %v332 = vld [vmem:[%s283 + $0xc] sm:$0x8]
      %v333 = vsel %vm322, 0, %v332
      %334 = vst [vmem:[%s283 + $0xc] sm:$0x8] %v333
      %v335 = vld [vmem:[%s283 + $0x10] sm:$0x8]
      %v336 = vsel %vm322, 0, %v335
      %337 = vst [vmem:[%s283 + $0x10] sm:$0x8] %v336
      %v338 = vld [vmem:[%s283 + $0x14] sm:$0x8]
      %v339 = vsel %vm322, 0, %v338
      %340 = vst [vmem:[%s283 + $0x14] sm:$0x8] %v339
      %v341 = vld [vmem:[%s283 + $0x18] sm:$0x8]
      %v342 = vsel %vm322, 0, %v341
      %343 = vst [vmem:[%s283 + $0x18] sm:$0x8] %v342
      %v344 = vld [vmem:[%s283 + $0x1c] sm:$0x8]
      %v345 = vsel %vm322, 0, %v344
      %346 = vst [vmem:[%s283 + $0x1c] sm:$0x8] %v345
      %v347 = vld [vmem:[%s2] sm:$0x1]
      %v348 = vld [vmem:[%s273] sm:$0xf]
      %v349 = vld [vmem:[%s273 + $0x4] sm:$0xf]
      %v350 = vld [vmem:[%s273 + $0x8] sm:$0xf]
      %v351 = vld [vmem:[%s273 + $0xc] sm:$0xf]
      %v352 = vld [vmem:[%s273 + $0x10] sm:$0xf]
      %v353 = vld [vmem:[%s273 + $0x14] sm:$0xf]
      %v354 = vld [vmem:[%s273 + $0x18] sm:$0xf]
      %v355 = vld [vmem:[%s273 + $0x1c] sm:$0xf]
      %v356 = vld [vmem:[%s1] sm:$0xf]
      %v357 = vld [vmem:[%s1 + $0x4] sm:$0x3]
      %v366 = vunpack.c.l.b16 %v348
      %v367 = vunpack.c.l.b16 %v349
      %v368 = vunpack.c.l.b16 %v350
      %v369 = vunpack.c.l.b16 %v351
      %v370 = vunpack.c.l.b16 %v352
      %v371 = vunpack.c.l.b16 %v353
      %v372 = vunpack.c.l.b16 %v354
      %v373 = vunpack.c.l.b16 %v355
      %v374 = vpack.c.b16 %v367, %v366
      %v375 = vpack.c.b16 %v369, %v368
      %v376 = vpack.c.b16 %v371, %v370
      %v377 = vpack.c.b16 %v373, %v372
      %v380 = vunpack.c.l.b16 %v356
      %v381 = vunpack.c.l.b16 %v357
      %v382 = vpack.c.b16 %v381, %v380
      %vm383 = vcmask 97280
      %v385 = vsel %vm383, %v374, 0
      %v388 = vsel %vm383, %v375, 0
      %v391 = vsel %vm383, %v376, 0
      %v394 = vsel %vm383, %v377, 0
      %vm396 = vcmask 1045504
      %v398 = vsel %vm396, %v382, 0
      %400 = vmatprep.subr.bf16.mxu0 0
      %401 = vmatpush1.bf16.msra.mxu0 0
      %402 = vmatprep.subr.bf16.mxu0 0
      %403 = vmatpush1.bf16.msra.mxu0 0
      %404 = vmatprep.subr.bf16.mxu0 0
      %405 = vmatpush1.bf16.msra.mxu0 0
      %406 = vmatprep.subr.bf16.mxu0 0
      %407 = vmatpush1.bf16.msra.mxu0 0
      %408 = vmatprep.subr.bf16.mxu0 0
      %409 = vmatpush1.bf16.msra.mxu0 0
      %410 = vmatprep.subr.bf16.mxu0 0
      %411 = vmatpush1.bf16.msra.mxu0 0
      %412 = vmatprep.subr.bf16.mxu0 0
      %413 = vmatpush1.bf16.msra.mxu0 0
      %414 = vmatprep.subr.bf16.mxu0 0
      %415 = vmatpush1.bf16.msra.mxu0 %v398
      %416 = vmatprep.subr.bf16.mxu0 0
      %417 = vmatpush2.bf16.msra.mxu0 0
      %418 = vmatprep.subr.bf16.mxu0 0
      %419 = vmatpush2.bf16.msra.mxu0 0
      %420 = vmatprep.subr.bf16.mxu0 0
      %421 = vmatpush2.bf16.msra.mxu0 0
      %422 = vmatprep.subr.bf16.mxu0 0
      %423 = vmatpush2.bf16.msra.mxu0 0
      %424 = vmatprep.subr.bf16.mxu0 0
      %425 = vmatpush2.bf16.msra.mxu0 0
      %426 = vmatprep.subr.bf16.mxu0 0
      %427 = vmatpush2.bf16.msra.mxu0 0
      %428 = vmatprep.subr.bf16.mxu0 0
      %429 = vmatpush2.bf16.msra.mxu0 0
      %430 = vmatprep.subr.bf16.mxu0 0
      %431 = vmatpush2.bf16.msra.mxu0 0
      %432 = vmatprep.mubr.bf16.mxu0 0
      %433 = vmatmul.mubr.bf16.gmra.mxu0 %v385
      %v434 = vpop.f32.mrf.mxu0
      %v435 = vadd.f32 0.0, %v434
      %v436 = vpop.f32.mrf.mxu0
      %v437 = vpop.f32.mrf.mxu0
      %v438 = vadd.f32 0.0, %v437
      %v439 = vpop.f32.mrf.mxu0
      %440 = vmatprep.mubr.bf16.mxu0 0
      %441 = vmatmul.mubr.bf16.gmra.mxu0 %v388
      %v442 = vpop.f32.mrf.mxu0
      %v443 = vadd.f32 0.0, %v442
      %v444 = vpop.f32.mrf.mxu0
      %v445 = vpop.f32.mrf.mxu0
      %v446 = vadd.f32 0.0, %v445
      %v447 = vpop.f32.mrf.mxu0
      %448 = vmatprep.mubr.bf16.mxu0 0
      %449 = vmatmul.mubr.bf16.gmra.mxu0 %v391
      %v450 = vpop.f32.mrf.mxu0
      %v451 = vadd.f32 0.0, %v450
      %v452 = vpop.f32.mrf.mxu0
      %v453 = vpop.f32.mrf.mxu0
      %v454 = vadd.f32 0.0, %v453
      %v455 = vpop.f32.mrf.mxu0
      %456 = vmatprep.mubr.bf16.mxu0 0
      %457 = vmatmul.mubr.bf16.gmra.mxu0 %v394
      %v458 = vpop.f32.mrf.mxu0
      %v459 = vadd.f32 0.0, %v458
      %v460 = vpop.f32.mrf.mxu0
      %v461 = vpop.f32.mrf.mxu0
      %v462 = vadd.f32 0.0, %v461
      %v463 = vpop.f32.mrf.mxu0
      %464 = vdwg.mxu0
      %v466 = vlaneseq
      %v467 = vshrl.u32 %v466, 7
      %v468 = vsub.s32 0, %v467
      %v469 = vrot.slane %v347, %v468
      %v471 = vadd.f32 %v469, %v435
      %v472 = vadd.f32 %v469, %v438
      %v473 = vadd.f32 %v469, %v443
      %v474 = vadd.f32 %v469, %v446
      %v475 = vadd.f32 %v469, %v451
      %v476 = vadd.f32 %v469, %v454
      %v477 = vadd.f32 %v469, %v459
      %v478 = vadd.f32 %v469, %v462
      %v479 = vmax.f32 %v471, 0.0
      %v480 = vmax.f32 %v472, 0.0
      %v481 = vmax.f32 %v473, 0.0
      %v482 = vmax.f32 %v474, 0.0
      %v483 = vmax.f32 %v475, 0.0
      %v484 = vmax.f32 %v476, 0.0
      %v485 = vmax.f32 %v477, 0.0
      %v486 = vmax.f32 %v478, 0.0
      loop: start=0, step=1, limit=2
      $region49: #{estnet_forward_pallas.2} parent=47 // loop_pre_header
        _
      $region50: #{estnet_forward_pallas.2} parent=47 // loop_header
        %s488 = sphi 0, %s492
        %p489 = scmp.ge.s32.totalorder %s488, 2
        %v493 = vphi %v479, %v2003
        %v494 = vphi %v480, %v2004
        %v495 = vphi %v481, %v2005
        %v496 = vphi %v482, %v2006
        %v497 = vphi %v483, %v2007
        %v498 = vphi %v484, %v2008
        %v499 = vphi %v485, %v2009
        %v500 = vphi %v486, %v2010
      $region51: #{estnet_forward_pallas.2} parent=47 // loop_header_branch
        %491 = sbr.rel (%p489) target = $region55
      $region52: #{estnet_forward_pallas.2} parent=47 // loop_body
        %s501 = smul.u32 %s488, 2
        %v502 = vpack.c.bf16 %v494, %v493
        %v503 = vpack.c.bf16 %v496, %v495
        %v504 = vpack.c.bf16 %v498, %v497
        %v505 = vpack.c.bf16 %v500, %v499
        %v510 = vunpack.c.l.b16 %v502
        %v511 = vunpack.c.h.b16 %v502
        %v512 = vunpack.c.l.b16 %v503
        %v513 = vunpack.c.h.b16 %v503
        %v514 = vunpack.c.l.b16 %v504
        %v515 = vunpack.c.h.b16 %v504
        %v516 = vunpack.c.l.b16 %v505
        %v517 = vunpack.c.h.b16 %v505
        %v518 = vpack.c.b16 %v510, %v510
        %v519 = vpack.c.b16 %v511, %v511
        %v520 = vpack.c.b16 %v512, %v512
        %v521 = vpack.c.b16 %v513, %v513
        %v522 = vpack.c.b16 %v514, %v514
        %v523 = vpack.c.b16 %v515, %v515
        %v524 = vpack.c.b16 %v516, %v516
        %v525 = vpack.c.b16 %v517, %v517
        %526 = vrot.lane.b32.xlu0 %v518, 32
        %v527 = vpop.permute.xlu0 %526
        %528 = vrot.lane.b32.xlu0 %v519, 32
        %v529 = vpop.permute.xlu0 %528
        %530 = vrot.lane.b32.xlu0 %v520, 32
        %v531 = vpop.permute.xlu0 %530
        %532 = vrot.lane.b32.xlu0 %v521, 32
        %v533 = vpop.permute.xlu0 %532
        %534 = vrot.lane.b32.xlu0 %v522, 32
        %v535 = vpop.permute.xlu0 %534
        %536 = vrot.lane.b32.xlu0 %v523, 32
        %v537 = vpop.permute.xlu0 %536
        %538 = vrot.lane.b32.xlu0 %v524, 32
        %v539 = vpop.permute.xlu0 %538
        %540 = vrot.lane.b32.xlu0 %v525, 32
        %v541 = vpop.permute.xlu0 %540
        %vm550 = vcmask 519424
        %551 = vst.msk [vmem:[%s283] sm:$0xf] %vm550, %v527
        %552 = vst.msk [vmem:[%s283 + $0x4] sm:$0xf] %vm550, %v529
        %553 = vst.msk [vmem:[%s283 + $0x8] sm:$0xf] %vm550, %v531
        %554 = vst.msk [vmem:[%s283 + $0xc] sm:$0xf] %vm550, %v533
        %555 = vst.msk [vmem:[%s283 + $0x10] sm:$0xf] %vm550, %v535
        %556 = vst.msk [vmem:[%s283 + $0x14] sm:$0xf] %vm550, %v537
        %557 = vst.msk [vmem:[%s283 + $0x18] sm:$0xf] %vm550, %v539
        %558 = vst.msk [vmem:[%s283 + $0x1c] sm:$0xf] %vm550, %v541
        %v560 = vshrl.u32 %v518, 16
        %v562 = vrot.slane %v560, 7
        %v563 = vshll.u32 %v518, 16
        %v565 = vor.u32 %v562, %v563
        %v567 = vshrl.u32 %v519, 16
        %v569 = vrot.slane %v567, 7
        %v570 = vshll.u32 %v519, 16
        %v572 = vor.u32 %v569, %v570
        %v574 = vshrl.u32 %v520, 16
        %v576 = vrot.slane %v574, 7
        %v577 = vshll.u32 %v520, 16
        %v579 = vor.u32 %v576, %v577
        %v581 = vshrl.u32 %v521, 16
        %v583 = vrot.slane %v581, 7
        %v584 = vshll.u32 %v521, 16
        %v586 = vor.u32 %v583, %v584
        %v588 = vshrl.u32 %v522, 16
        %v590 = vrot.slane %v588, 7
        %v591 = vshll.u32 %v522, 16
        %v593 = vor.u32 %v590, %v591
        %v595 = vshrl.u32 %v523, 16
        %v597 = vrot.slane %v595, 7
        %v598 = vshll.u32 %v523, 16
        %v600 = vor.u32 %v597, %v598
        %v602 = vshrl.u32 %v524, 16
        %v604 = vrot.slane %v602, 7
        %v605 = vshll.u32 %v524, 16
        %v607 = vor.u32 %v604, %v605
        %v609 = vshrl.u32 %v525, 16
        %v611 = vrot.slane %v609, 7
        %v612 = vshll.u32 %v525, 16
        %v614 = vor.u32 %v611, %v612
        %vm623 = vcmask 257024
        %vm624 = vsmask.f32 7938
        %vm625 = vmand %vm623, %vm624
        %v626 = vld [vmem:[%s283] sm:$0xf]
        %v627 = vsel %vm625, %v565, %v626
        %628 = vst [vmem:[%s283] sm:$0xf] %v627
        %v629 = vld [vmem:[%s283 + $0x4] sm:$0xf]
        %v630 = vsel %vm625, %v572, %v629
        %631 = vst [vmem:[%s283 + $0x4] sm:$0xf] %v630
        %v632 = vld [vmem:[%s283 + $0x8] sm:$0xf]
        %v633 = vsel %vm625, %v579, %v632
        %634 = vst [vmem:[%s283 + $0x8] sm:$0xf] %v633
        %v635 = vld [vmem:[%s283 + $0xc] sm:$0xf]
        %v636 = vsel %vm625, %v586, %v635
        %637 = vst [vmem:[%s283 + $0xc] sm:$0xf] %v636
        %v638 = vld [vmem:[%s283 + $0x10] sm:$0xf]
        %v639 = vsel %vm625, %v593, %v638
        %640 = vst [vmem:[%s283 + $0x10] sm:$0xf] %v639
        %v641 = vld [vmem:[%s283 + $0x14] sm:$0xf]
        %v642 = vsel %vm625, %v600, %v641
        %643 = vst [vmem:[%s283 + $0x14] sm:$0xf] %v642
        %v644 = vld [vmem:[%s283 + $0x18] sm:$0xf]
        %v645 = vsel %vm625, %v607, %v644
        %646 = vst [vmem:[%s283 + $0x18] sm:$0xf] %v645
        %v647 = vld [vmem:[%s283 + $0x1c] sm:$0xf]
        %v648 = vsel %vm625, %v614, %v647
        %649 = vst [vmem:[%s283 + $0x1c] sm:$0xf] %v648
        %v650 = vrot.slane %v560, 4
        %v651 = vrot.slane %v563, 5
        %v652 = vor.u32 %v650, %v651
        %v653 = vrot.slane %v652, 4
        %v654 = vrot.slane %v567, 4
        %v655 = vrot.slane %v570, 5
        %v656 = vor.u32 %v654, %v655
        %v657 = vrot.slane %v656, 4
        %v658 = vrot.slane %v574, 4
        %v659 = vrot.slane %v577, 5
        %v660 = vor.u32 %v658, %v659
        %v661 = vrot.slane %v660, 4
        %v662 = vrot.slane %v581, 4
        %v663 = vrot.slane %v584, 5
        %v664 = vor.u32 %v662, %v663
        %v665 = vrot.slane %v664, 4
        %v666 = vrot.slane %v588, 4
        %v667 = vrot.slane %v591, 5
        %v668 = vor.u32 %v666, %v667
        %v669 = vrot.slane %v668, 4
        %v670 = vrot.slane %v595, 4
        %v671 = vrot.slane %v598, 5
        %v672 = vor.u32 %v670, %v671
        %v673 = vrot.slane %v672, 4
        %v674 = vrot.slane %v602, 4
        %v675 = vrot.slane %v605, 5
        %v676 = vor.u32 %v674, %v675
        %v677 = vrot.slane %v676, 4
        %v678 = vrot.slane %v609, 4
        %v679 = vrot.slane %v612, 5
        %v680 = vor.u32 %v678, %v679
        %v681 = vrot.slane %v680, 4
        %682 = vrot.lane.b32.xlu0 %v653, 64
        %v683 = vpop.permute.xlu0 %682
        %684 = vrot.lane.b32.xlu0 %v657, 64
        %v685 = vpop.permute.xlu0 %684
        %686 = vrot.lane.b32.xlu0 %v661, 64
        %v687 = vpop.permute.xlu0 %686
        %688 = vrot.lane.b32.xlu0 %v665, 64
        %v689 = vpop.permute.xlu0 %688
        %690 = vrot.lane.b32.xlu0 %v669, 64
        %v691 = vpop.permute.xlu0 %690
        %692 = vrot.lane.b32.xlu0 %v673, 64
        %v693 = vpop.permute.xlu0 %692
        %694 = vrot.lane.b32.xlu0 %v677, 64
        %v695 = vpop.permute.xlu0 %694
        %696 = vrot.lane.b32.xlu0 %v681, 64
        %v697 = vpop.permute.xlu0 %696
        %vm706 = vcmask 781824
        %vm707 = vsmask.f32 3328
        %vm708 = vmand %vm706, %vm707
        %v709 = vld [vmem:[%s283] sm:$0xf]
        %v710 = vsel %vm708, %v683, %v709
        %711 = vst [vmem:[%s283] sm:$0xf] %v710
        %v712 = vld [vmem:[%s283 + $0x4] sm:$0xf]
        %v713 = vsel %vm708, %v685, %v712
        %714 = vst [vmem:[%s283 + $0x4] sm:$0xf] %v713
        %v715 = vld [vmem:[%s283 + $0x8] sm:$0xf]
        %v716 = vsel %vm708, %v687, %v715
        %717 = vst [vmem:[%s283 + $0x8] sm:$0xf] %v716
        %v718 = vld [vmem:[%s283 + $0xc] sm:$0xf]
        %v719 = vsel %vm708, %v689, %v718
        %720 = vst [vmem:[%s283 + $0xc] sm:$0xf] %v719
        %v721 = vld [vmem:[%s283 + $0x10] sm:$0xf]
        %v722 = vsel %vm708, %v691, %v721
        %723 = vst [vmem:[%s283 + $0x10] sm:$0xf] %v722
        %v724 = vld [vmem:[%s283 + $0x14] sm:$0xf]
        %v725 = vsel %vm708, %v693, %v724
        %726 = vst [vmem:[%s283 + $0x14] sm:$0xf] %v725
        %v727 = vld [vmem:[%s283 + $0x18] sm:$0xf]
        %v728 = vsel %vm708, %v695, %v727
        %729 = vst [vmem:[%s283 + $0x18] sm:$0xf] %v728
        %v730 = vld [vmem:[%s283 + $0x1c] sm:$0xf]
        %v731 = vsel %vm708, %v697, %v730
        %732 = vst [vmem:[%s283 + $0x1c] sm:$0xf] %v731
        %s733 = smul.u32 %s501, 48
        %s734 = smul.addr %s733, 4
        %s735 = scalar_lea.vmem %s3, %s734
        %v736 = vld [vmem:[%s735] sm:$0xf]
        %v737 = vld [vmem:[%s735 + $0x4] sm:$0xf]
        %v738 = vld [vmem:[%s735 + $0x8] sm:$0xf]
        %v739 = vld [vmem:[%s735 + $0xc] sm:$0xf]
        %v740 = vld [vmem:[%s735 + $0x10] sm:$0xf]
        %v741 = vld [vmem:[%s735 + $0x14] sm:$0xf]
        %v742 = vld [vmem:[%s735 + $0x18] sm:$0xf]
        %v743 = vld [vmem:[%s735 + $0x1c] sm:$0xf]
        %v744 = vld [vmem:[%s735 + $0x20] sm:$0xf]
        %v745 = vld [vmem:[%s735 + $0x24] sm:$0xf]
        %v746 = vld [vmem:[%s735 + $0x28] sm:$0xf]
        %v747 = vld [vmem:[%s735 + $0x2c] sm:$0xf]
        %v748 = vld [vmem:[%s735 + $0x30] sm:$0xf]
        %v749 = vld [vmem:[%s735 + $0x34] sm:$0xf]
        %v750 = vld [vmem:[%s735 + $0x38] sm:$0xf]
        %v751 = vld [vmem:[%s735 + $0x3c] sm:$0xf]
        %v752 = vld [vmem:[%s735 + $0x40] sm:$0xf]
        %v753 = vld [vmem:[%s735 + $0x44] sm:$0xf]
        %v754 = vld [vmem:[%s735 + $0x48] sm:$0xf]
        %v755 = vld [vmem:[%s735 + $0x4c] sm:$0xf]
        %v756 = vld [vmem:[%s735 + $0x50] sm:$0xf]
        %v757 = vld [vmem:[%s735 + $0x54] sm:$0xf]
        %v758 = vld [vmem:[%s735 + $0x58] sm:$0xf]
        %v759 = vld [vmem:[%s735 + $0x5c] sm:$0xf]
        %v760 = vld [vmem:[%s735 + $0x60] sm:$0xf]
        %v761 = vld [vmem:[%s735 + $0x64] sm:$0xf]
        %v762 = vld [vmem:[%s735 + $0x68] sm:$0xf]
        %v763 = vld [vmem:[%s735 + $0x6c] sm:$0xf]
        %v764 = vld [vmem:[%s735 + $0x70] sm:$0xf]
        %v765 = vld [vmem:[%s735 + $0x74] sm:$0xf]
        %v766 = vld [vmem:[%s735 + $0x78] sm:$0xf]
        %v767 = vld [vmem:[%s735 + $0x7c] sm:$0xf]
        %v768 = vld [vmem:[%s735 + $0x80] sm:$0xf]
        %v769 = vld [vmem:[%s735 + $0x84] sm:$0xf]
        %v770 = vld [vmem:[%s735 + $0x88] sm:$0xf]
        %v771 = vld [vmem:[%s735 + $0x8c] sm:$0xf]
        %v772 = vld [vmem:[%s735 + $0x90] sm:$0xf]
        %v773 = vld [vmem:[%s735 + $0x94] sm:$0xf]
        %v774 = vld [vmem:[%s735 + $0x98] sm:$0xf]
        %v775 = vld [vmem:[%s735 + $0x9c] sm:$0xf]
        %v776 = vld [vmem:[%s735 + $0xa0] sm:$0xf]
        %v777 = vld [vmem:[%s735 + $0xa4] sm:$0xf]
        %v778 = vld [vmem:[%s735 + $0xa8] sm:$0xf]
        %v779 = vld [vmem:[%s735 + $0xac] sm:$0xf]
        %v780 = vld [vmem:[%s735 + $0xb0] sm:$0xf]
        %v781 = vld [vmem:[%s735 + $0xb4] sm:$0xf]
        %v782 = vld [vmem:[%s735 + $0xb8] sm:$0xf]
        %v783 = vld [vmem:[%s735 + $0xbc] sm:$0xf]
        %s784 = scalar_lea.vmem %s4, %s501
        %v785 = vld [vmem:[%s784] sm:$0x1]
        %v786 = vld [vmem:[#allocation2] sm:$0xf]
        %v787 = vld [vmem:[#allocation2 + $0x4] sm:$0xf]
        %v788 = vld [vmem:[#allocation2 + $0x8] sm:$0xf]
        %v789 = vld [vmem:[#allocation2 + $0xc] sm:$0xf]
        %v790 = vld [vmem:[#allocation2 + $0x10] sm:$0xf]
        %v791 = vld [vmem:[#allocation2 + $0x14] sm:$0xf]
        %v792 = vld [vmem:[#allocation2 + $0x18] sm:$0xf]
        %v793 = vld [vmem:[#allocation2 + $0x1c] sm:$0xf]
        %v802 = vunpack.c.l.b16 %v786
        %v803 = vunpack.c.l.b16 %v787
        %v804 = vunpack.c.l.b16 %v788
        %v805 = vunpack.c.l.b16 %v789
        %v806 = vunpack.c.l.b16 %v790
        %v807 = vunpack.c.l.b16 %v791
        %v808 = vunpack.c.l.b16 %v792
        %v809 = vunpack.c.l.b16 %v793
        %v810 = vpack.c.b16 %v803, %v802
        %v811 = vpack.c.b16 %v805, %v804
        %v812 = vpack.c.b16 %v807, %v806
        %v813 = vpack.c.b16 %v809, %v808
        %v834 = vunpack.c.l.b16 %v736
        %v835 = vunpack.c.l.b16 %v737
        %v836 = vunpack.c.l.b16 %v738
        %v837 = vunpack.c.l.b16 %v739
        %v838 = vunpack.c.l.b16 %v740
        %v839 = vunpack.c.l.b16 %v741
        %v840 = vunpack.c.l.b16 %v742
        %v841 = vunpack.c.l.b16 %v743
        %v842 = vunpack.c.l.b16 %v744
        %v843 = vunpack.c.l.b16 %v745
        %v844 = vunpack.c.l.b16 %v746
        %v845 = vunpack.c.l.b16 %v747
        %v846 = vunpack.c.l.b16 %v748
        %v847 = vunpack.c.l.b16 %v749
        %v848 = vunpack.c.l.b16 %v750
        %v849 = vunpack.c.l.b16 %v751
        %v850 = vpack.c.b16 %v835, %v834
        %v851 = vpack.c.b16 %v837, %v836
        %v852 = vpack.c.b16 %v839, %v838
        %v853 = vpack.c.b16 %v841, %v840
        %v854 = vpack.c.b16 %v843, %v842
        %v855 = vpack.c.b16 %v845, %v844
        %v856 = vpack.c.b16 %v847, %v846
        %v857 = vpack.c.b16 %v849, %v848
        %866 = vmatprep.subr.bf16.mxu0 0
        %867 = vmatpush1.bf16.msra.mxu0 %v857
        %868 = vmatprep.subr.bf16.mxu0 0
        %869 = vmatpush1.bf16.msra.mxu0 %v856
        %870 = vmatprep.subr.bf16.mxu0 0
        %871 = vmatpush1.bf16.msra.mxu0 %v855
        %872 = vmatprep.subr.bf16.mxu0 0
        %873 = vmatpush1.bf16.msra.mxu0 %v854
        %874 = vmatprep.subr.bf16.mxu0 0
        %875 = vmatpush1.bf16.msra.mxu0 %v853
        %876 = vmatprep.subr.bf16.mxu0 0
        %877 = vmatpush1.bf16.msra.mxu0 %v852
        %878 = vmatprep.subr.bf16.mxu0 0
        %879 = vmatpush1.bf16.msra.mxu0 %v851
        %880 = vmatprep.subr.bf16.mxu0 0
        %881 = vmatpush1.bf16.msra.mxu0 %v850
        %882 = vmatprep.subr.bf16.mxu0 0
        %883 = vmatpush2.bf16.msra.mxu0 0
        %884 = vmatprep.subr.bf16.mxu0 0
        %885 = vmatpush2.bf16.msra.mxu0 0
        %886 = vmatprep.subr.bf16.mxu0 0
        %887 = vmatpush2.bf16.msra.mxu0 0
        %888 = vmatprep.subr.bf16.mxu0 0
        %889 = vmatpush2.bf16.msra.mxu0 0
        %890 = vmatprep.subr.bf16.mxu0 0
        %891 = vmatpush2.bf16.msra.mxu0 0
        %892 = vmatprep.subr.bf16.mxu0 0
        %893 = vmatpush2.bf16.msra.mxu0 0
        %894 = vmatprep.subr.bf16.mxu0 0
        %895 = vmatpush2.bf16.msra.mxu0 0
        %896 = vmatprep.subr.bf16.mxu0 0
        %897 = vmatpush2.bf16.msra.mxu0 0
        %898 = vmatprep.mubr.bf16.mxu0 0
        %899 = vmatmul.mubr.bf16.gmra.mxu0 %v810
        %v900 = vpop.f32.mrf.mxu0
        %v901 = vadd.f32 0.0, %v900
        %v902 = vpop.f32.mrf.mxu0
        %v903 = vpop.f32.mrf.mxu0
        %v904 = vadd.f32 0.0, %v903
        %v905 = vpop.f32.mrf.mxu0
        %906 = vmatprep.mubr.bf16.mxu0 0
        %907 = vmatmul.mubr.bf16.gmra.mxu0 %v811
        %v908 = vpop.f32.mrf.mxu0
        %v909 = vadd.f32 0.0, %v908
        %v910 = vpop.f32.mrf.mxu0
        %v911 = vpop.f32.mrf.mxu0
        %v912 = vadd.f32 0.0, %v911
        %v913 = vpop.f32.mrf.mxu0
        %914 = vmatprep.mubr.bf16.mxu0 0
        %915 = vmatmul.mubr.bf16.gmra.mxu0 %v812
        %v916 = vpop.f32.mrf.mxu0
        %v917 = vadd.f32 0.0, %v916
        %v918 = vpop.f32.mrf.mxu0
        %v919 = vpop.f32.mrf.mxu0
        %v920 = vadd.f32 0.0, %v919
        %v921 = vpop.f32.mrf.mxu0
        %922 = vmatprep.mubr.bf16.mxu0 0
        %923 = vmatmul.mubr.bf16.gmra.mxu0 %v813
        %v924 = vpop.f32.mrf.mxu0
        %v925 = vadd.f32 0.0, %v924
        %v926 = vpop.f32.mrf.mxu0
        %v927 = vpop.f32.mrf.mxu0
        %v928 = vadd.f32 0.0, %v927
        %v929 = vpop.f32.mrf.mxu0
        %930 = vdwg.mxu0
        %v932 = vlaneseq
        %v933 = vshrl.u32 %v932, 7
        %v934 = vsub.s32 0, %v933
        %v935 = vrot.slane %v785, %v934
        %v937 = vadd.f32 %v935, %v901
        %v938 = vadd.f32 %v935, %v904
        %v939 = vadd.f32 %v935, %v909
        %v940 = vadd.f32 %v935, %v912
        %v941 = vadd.f32 %v935, %v917
        %v942 = vadd.f32 %v935, %v920
        %v943 = vadd.f32 %v935, %v925
        %v944 = vadd.f32 %v935, %v928
        %v945 = vld [vmem:[%s283] sm:$0xf]
        %v946 = vld [vmem:[%s283 + $0x4] sm:$0xf]
        %v947 = vld [vmem:[%s283 + $0x8] sm:$0xf]
        %v948 = vld [vmem:[%s283 + $0xc] sm:$0xf]
        %v949 = vld [vmem:[%s283 + $0x10] sm:$0xf]
        %v950 = vld [vmem:[%s283 + $0x14] sm:$0xf]
        %v951 = vld [vmem:[%s283 + $0x18] sm:$0xf]
        %v952 = vld [vmem:[%s283 + $0x1c] sm:$0xf]
        %v961 = vunpack.c.l.b16 %v945
        %v962 = vunpack.c.l.b16 %v946
        %v963 = vunpack.c.l.b16 %v947
        %v964 = vunpack.c.l.b16 %v948
        %v965 = vunpack.c.l.b16 %v949
        %v966 = vunpack.c.l.b16 %v950
        %v967 = vunpack.c.l.b16 %v951
        %v968 = vunpack.c.l.b16 %v952
        %v969 = vpack.c.b16 %v962, %v961
        %v970 = vpack.c.b16 %v964, %v963
        %v971 = vpack.c.b16 %v966, %v965
        %v972 = vpack.c.b16 %v968, %v967
        %v993 = vunpack.c.l.b16 %v752
        %v994 = vunpack.c.l.b16 %v753
        %v995 = vunpack.c.l.b16 %v754
        %v996 = vunpack.c.l.b16 %v755
        %v997 = vunpack.c.l.b16 %v756
        %v998 = vunpack.c.l.b16 %v757
        %v999 = vunpack.c.l.b16 %v758
        %v1000 = vunpack.c.l.b16 %v759
        %v1001 = vunpack.c.l.b16 %v760
        %v1002 = vunpack.c.l.b16 %v761
        %v1003 = vunpack.c.l.b16 %v762
        %v1004 = vunpack.c.l.b16 %v763
        %v1005 = vunpack.c.l.b16 %v764
        %v1006 = vunpack.c.l.b16 %v765
        %v1007 = vunpack.c.l.b16 %v766
        %v1008 = vunpack.c.l.b16 %v767
        %v1009 = vpack.c.b16 %v994, %v993
        %v1010 = vpack.c.b16 %v996, %v995
        %v1011 = vpack.c.b16 %v998, %v997
        %v1012 = vpack.c.b16 %v1000, %v999
        %v1013 = vpack.c.b16 %v1002, %v1001
        %v1014 = vpack.c.b16 %v1004, %v1003
        %v1015 = vpack.c.b16 %v1006, %v1005
        %v1016 = vpack.c.b16 %v1008, %v1007
        %1025 = vmatprep.subr.bf16.mxu0 0
        %1026 = vmatpush1.bf16.msra.mxu0 %v1016
        %1027 = vmatprep.subr.bf16.mxu0 0
        %1028 = vmatpush1.bf16.msra.mxu0 %v1015
        %1029 = vmatprep.subr.bf16.mxu0 0
        %1030 = vmatpush1.bf16.msra.mxu0 %v1014
        %1031 = vmatprep.subr.bf16.mxu0 0
        %1032 = vmatpush1.bf16.msra.mxu0 %v1013
        %1033 = vmatprep.subr.bf16.mxu0 0
        %1034 = vmatpush1.bf16.msra.mxu0 %v1012
        %1035 = vmatprep.subr.bf16.mxu0 0
        %1036 = vmatpush1.bf16.msra.mxu0 %v1011
        %1037 = vmatprep.subr.bf16.mxu0 0
        %1038 = vmatpush1.bf16.msra.mxu0 %v1010
        %1039 = vmatprep.subr.bf16.mxu0 0
        %1040 = vmatpush1.bf16.msra.mxu0 %v1009
        %1041 = vmatprep.subr.bf16.mxu0 0
        %1042 = vmatpush2.bf16.msra.mxu0 0
        %1043 = vmatprep.subr.bf16.mxu0 0
        %1044 = vmatpush2.bf16.msra.mxu0 0
        %1045 = vmatprep.subr.bf16.mxu0 0
        %1046 = vmatpush2.bf16.msra.mxu0 0
        %1047 = vmatprep.subr.bf16.mxu0 0
        %1048 = vmatpush2.bf16.msra.mxu0 0
        %1049 = vmatprep.subr.bf16.mxu0 0
        %1050 = vmatpush2.bf16.msra.mxu0 0
        %1051 = vmatprep.subr.bf16.mxu0 0
        %1052 = vmatpush2.bf16.msra.mxu0 0
        %1053 = vmatprep.subr.bf16.mxu0 0
        %1054 = vmatpush2.bf16.msra.mxu0 0
        %1055 = vmatprep.subr.bf16.mxu0 0
        %1056 = vmatpush2.bf16.msra.mxu0 0
        %1057 = vmatprep.mubr.bf16.mxu0 0
        %1058 = vmatmul.mubr.bf16.gmra.mxu0 %v969
        %v1059 = vpop.f32.mrf.mxu0
        %v1060 = vadd.f32 0.0, %v1059
        %v1061 = vpop.f32.mrf.mxu0
        %v1062 = vpop.f32.mrf.mxu0
        %v1063 = vadd.f32 0.0, %v1062
        %v1064 = vpop.f32.mrf.mxu0
        %1065 = vmatprep.mubr.bf16.mxu0 0
        %1066 = vmatmul.mubr.bf16.gmra.mxu0 %v970
        %v1067 = vpop.f32.mrf.mxu0
        %v1068 = vadd.f32 0.0, %v1067
        %v1069 = vpop.f32.mrf.mxu0
        %v1070 = vpop.f32.mrf.mxu0
        %v1071 = vadd.f32 0.0, %v1070
        %v1072 = vpop.f32.mrf.mxu0
        %1073 = vmatprep.mubr.bf16.mxu0 0
        %1074 = vmatmul.mubr.bf16.gmra.mxu0 %v971
        %v1075 = vpop.f32.mrf.mxu0
        %v1076 = vadd.f32 0.0, %v1075
        %v1077 = vpop.f32.mrf.mxu0
        %v1078 = vpop.f32.mrf.mxu0
        %v1079 = vadd.f32 0.0, %v1078
        %v1080 = vpop.f32.mrf.mxu0
        %1081 = vmatprep.mubr.bf16.mxu0 0
        %1082 = vmatmul.mubr.bf16.gmra.mxu0 %v972
        %v1083 = vpop.f32.mrf.mxu0
        %v1084 = vadd.f32 0.0, %v1083
        %v1085 = vpop.f32.mrf.mxu0
        %v1086 = vpop.f32.mrf.mxu0
        %v1087 = vadd.f32 0.0, %v1086
        %v1088 = vpop.f32.mrf.mxu0
        %1089 = vdwg.mxu0
        %v1090 = vadd.f32 %v937, %v1060
        %v1091 = vadd.f32 %v938, %v1063
        %v1092 = vadd.f32 %v939, %v1068
        %v1093 = vadd.f32 %v940, %v1071
        %v1094 = vadd.f32 %v941, %v1076
        %v1095 = vadd.f32 %v942, %v1079
        %v1096 = vadd.f32 %v943, %v1084
        %v1097 = vadd.f32 %v944, %v1087
        %s1098 = scalar_lea.vmem [#allocation2], 8
        %v1099 = vld [vmem:[%s1098] sm:$0xf]
        %v1100 = vld [vmem:[%s1098 + $0x4] sm:$0xf]
        %v1101 = vld [vmem:[%s1098 + $0x8] sm:$0xf]
        %v1102 = vld [vmem:[%s1098 + $0xc] sm:$0xf]
        %v1103 = vld [vmem:[%s1098 + $0x10] sm:$0xf]
        %v1104 = vld [vmem:[%s1098 + $0x14] sm:$0xf]
        %v1105 = vld [vmem:[%s1098 + $0x18] sm:$0xf]
        %v1106 = vld [vmem:[%s1098 + $0x1c] sm:$0xf]
        %v1115 = vunpack.c.l.b16 %v1099
        %v1116 = vunpack.c.l.b16 %v1100
        %v1117 = vunpack.c.l.b16 %v1101
        %v1118 = vunpack.c.l.b16 %v1102
        %v1119 = vunpack.c.l.b16 %v1103
        %v1120 = vunpack.c.l.b16 %v1104
        %v1121 = vunpack.c.l.b16 %v1105
        %v1122 = vunpack.c.l.b16 %v1106
        %v1123 = vpack.c.b16 %v1116, %v1115
        %v1124 = vpack.c.b16 %v1118, %v1117
        %v1125 = vpack.c.b16 %v1120, %v1119
        %v1126 = vpack.c.b16 %v1122, %v1121
        %v1147 = vunpack.c.l.b16 %v768
        %v1148 = vunpack.c.l.b16 %v769
        %v1149 = vunpack.c.l.b16 %v770
        %v1150 = vunpack.c.l.b16 %v771
        %v1151 = vunpack.c.l.b16 %v772
        %v1152 = vunpack.c.l.b16 %v773
        %v1153 = vunpack.c.l.b16 %v774
        %v1154 = vunpack.c.l.b16 %v775
        %v1155 = vunpack.c.l.b16 %v776
        %v1156 = vunpack.c.l.b16 %v777
        %v1157 = vunpack.c.l.b16 %v778
        %v1158 = vunpack.c.l.b16 %v779
        %v1159 = vunpack.c.l.b16 %v780
        %v1160 = vunpack.c.l.b16 %v781
        %v1161 = vunpack.c.l.b16 %v782
        %v1162 = vunpack.c.l.b16 %v783
        %v1163 = vpack.c.b16 %v1148, %v1147
        %v1164 = vpack.c.b16 %v1150, %v1149
        %v1165 = vpack.c.b16 %v1152, %v1151
        %v1166 = vpack.c.b16 %v1154, %v1153
        %v1167 = vpack.c.b16 %v1156, %v1155
        %v1168 = vpack.c.b16 %v1158, %v1157
        %v1169 = vpack.c.b16 %v1160, %v1159
        %v1170 = vpack.c.b16 %v1162, %v1161
        %1179 = vmatprep.subr.bf16.mxu0 0
        %1180 = vmatpush1.bf16.msra.mxu0 %v1170
        %1181 = vmatprep.subr.bf16.mxu0 0
        %1182 = vmatpush1.bf16.msra.mxu0 %v1169
        %1183 = vmatprep.subr.bf16.mxu0 0
        %1184 = vmatpush1.bf16.msra.mxu0 %v1168
        %1185 = vmatprep.subr.bf16.mxu0 0
        %1186 = vmatpush1.bf16.msra.mxu0 %v1167
        %1187 = vmatprep.subr.bf16.mxu0 0
        %1188 = vmatpush1.bf16.msra.mxu0 %v1166
        %1189 = vmatprep.subr.bf16.mxu0 0
        %1190 = vmatpush1.bf16.msra.mxu0 %v1165
        %1191 = vmatprep.subr.bf16.mxu0 0
        %1192 = vmatpush1.bf16.msra.mxu0 %v1164
        %1193 = vmatprep.subr.bf16.mxu0 0
        %1194 = vmatpush1.bf16.msra.mxu0 %v1163
        %1195 = vmatprep.subr.bf16.mxu0 0
        %1196 = vmatpush2.bf16.msra.mxu0 0
        %1197 = vmatprep.subr.bf16.mxu0 0
        %1198 = vmatpush2.bf16.msra.mxu0 0
        %1199 = vmatprep.subr.bf16.mxu0 0
        %1200 = vmatpush2.bf16.msra.mxu0 0
        %1201 = vmatprep.subr.bf16.mxu0 0
        %1202 = vmatpush2.bf16.msra.mxu0 0
        %1203 = vmatprep.subr.bf16.mxu0 0
        %1204 = vmatpush2.bf16.msra.mxu0 0
        %1205 = vmatprep.subr.bf16.mxu0 0
        %1206 = vmatpush2.bf16.msra.mxu0 0
        %1207 = vmatprep.subr.bf16.mxu0 0
        %1208 = vmatpush2.bf16.msra.mxu0 0
        %1209 = vmatprep.subr.bf16.mxu0 0
        %1210 = vmatpush2.bf16.msra.mxu0 0
        %1211 = vmatprep.mubr.bf16.mxu0 0
        %1212 = vmatmul.mubr.bf16.gmra.mxu0 %v1123
        %v1213 = vpop.f32.mrf.mxu0
        %v1214 = vadd.f32 0.0, %v1213
        %v1215 = vpop.f32.mrf.mxu0
        %v1216 = vpop.f32.mrf.mxu0
        %v1217 = vadd.f32 0.0, %v1216
        %v1218 = vpop.f32.mrf.mxu0
        %1219 = vmatprep.mubr.bf16.mxu0 0
        %1220 = vmatmul.mubr.bf16.gmra.mxu0 %v1124
        %v1221 = vpop.f32.mrf.mxu0
        %v1222 = vadd.f32 0.0, %v1221
        %v1223 = vpop.f32.mrf.mxu0
        %v1224 = vpop.f32.mrf.mxu0
        %v1225 = vadd.f32 0.0, %v1224
        %v1226 = vpop.f32.mrf.mxu0
        %1227 = vmatprep.mubr.bf16.mxu0 0
        %1228 = vmatmul.mubr.bf16.gmra.mxu0 %v1125
        %v1229 = vpop.f32.mrf.mxu0
        %v1230 = vadd.f32 0.0, %v1229
        %v1231 = vpop.f32.mrf.mxu0
        %v1232 = vpop.f32.mrf.mxu0
        %v1233 = vadd.f32 0.0, %v1232
        %v1234 = vpop.f32.mrf.mxu0
        %1235 = vmatprep.mubr.bf16.mxu0 0
        %1236 = vmatmul.mubr.bf16.gmra.mxu0 %v1126
        %v1237 = vpop.f32.mrf.mxu0
        %v1238 = vadd.f32 0.0, %v1237
        %v1239 = vpop.f32.mrf.mxu0
        %v1240 = vpop.f32.mrf.mxu0
        %v1241 = vadd.f32 0.0, %v1240
        %v1242 = vpop.f32.mrf.mxu0
        %1243 = vdwg.mxu0
        %v1244 = vadd.f32 %v1090, %v1214
        %v1245 = vadd.f32 %v1091, %v1217
        %v1246 = vadd.f32 %v1092, %v1222
        %v1247 = vadd.f32 %v1093, %v1225
        %v1248 = vadd.f32 %v1094, %v1230
        %v1249 = vadd.f32 %v1095, %v1233
        %v1250 = vadd.f32 %v1096, %v1238
        %v1251 = vadd.f32 %v1097, %v1241
        %v1252 = vmax.f32 %v1244, 0.0
        %v1253 = vmax.f32 %v1245, 0.0
        %v1254 = vmax.f32 %v1246, 0.0
        %v1255 = vmax.f32 %v1247, 0.0
        %v1256 = vmax.f32 %v1248, 0.0
        %v1257 = vmax.f32 %v1249, 0.0
        %v1258 = vmax.f32 %v1250, 0.0
        %v1259 = vmax.f32 %v1251, 0.0
        %s1260 = sadd.s32 %s501, 1
        %v1261 = vpack.c.bf16 %v1253, %v1252
        %v1262 = vpack.c.bf16 %v1255, %v1254
        %v1263 = vpack.c.bf16 %v1257, %v1256
        %v1264 = vpack.c.bf16 %v1259, %v1258
        %v1269 = vunpack.c.l.b16 %v1261
        %v1270 = vunpack.c.h.b16 %v1261
        %v1271 = vunpack.c.l.b16 %v1262
        %v1272 = vunpack.c.h.b16 %v1262
        %v1273 = vunpack.c.l.b16 %v1263
        %v1274 = vunpack.c.h.b16 %v1263
        %v1275 = vunpack.c.l.b16 %v1264
        %v1276 = vunpack.c.h.b16 %v1264
        %v1277 = vpack.c.b16 %v1269, %v1269
        %v1278 = vpack.c.b16 %v1270, %v1270
        %v1279 = vpack.c.b16 %v1271, %v1271
        %v1280 = vpack.c.b16 %v1272, %v1272
        %v1281 = vpack.c.b16 %v1273, %v1273
        %v1282 = vpack.c.b16 %v1274, %v1274
        %v1283 = vpack.c.b16 %v1275, %v1275
        %v1284 = vpack.c.b16 %v1276, %v1276
        %1285 = vrot.lane.b32.xlu0 %v1277, 32
        %v1286 = vpop.permute.xlu0 %1285
        %1287 = vrot.lane.b32.xlu0 %v1278, 32
        %v1288 = vpop.permute.xlu0 %1287
        %1289 = vrot.lane.b32.xlu0 %v1279, 32
        %v1290 = vpop.permute.xlu0 %1289
        %1291 = vrot.lane.b32.xlu0 %v1280, 32
        %v1292 = vpop.permute.xlu0 %1291
        %1293 = vrot.lane.b32.xlu0 %v1281, 32
        %v1294 = vpop.permute.xlu0 %1293
        %1295 = vrot.lane.b32.xlu0 %v1282, 32
        %v1296 = vpop.permute.xlu0 %1295
        %1297 = vrot.lane.b32.xlu0 %v1283, 32
        %v1298 = vpop.permute.xlu0 %1297
        %1299 = vrot.lane.b32.xlu0 %v1284, 32
        %v1300 = vpop.permute.xlu0 %1299
        %1309 = vst.msk [vmem:[%s283] sm:$0xf] %vm550, %v1286
        %1310 = vst.msk [vmem:[%s283 + $0x4] sm:$0xf] %vm550, %v1288
        %1311 = vst.msk [vmem:[%s283 + $0x8] sm:$0xf] %vm550, %v1290
        %1312 = vst.msk [vmem:[%s283 + $0xc] sm:$0xf] %vm550, %v1292
        %1313 = vst.msk [vmem:[%s283 + $0x10] sm:$0xf] %vm550, %v1294
        %1314 = vst.msk [vmem:[%s283 + $0x14] sm:$0xf] %vm550, %v1296
        %1315 = vst.msk [vmem:[%s283 + $0x18] sm:$0xf] %vm550, %v1298
        %1316 = vst.msk [vmem:[%s283 + $0x1c] sm:$0xf] %vm550, %v1300
        %v1318 = vshrl.u32 %v1277, 16
        %v1320 = vrot.slane %v1318, 7
        %v1321 = vshll.u32 %v1277, 16
        %v1323 = vor.u32 %v1320, %v1321
        %v1325 = vshrl.u32 %v1278, 16
        %v1327 = vrot.slane %v1325, 7
        %v1328 = vshll.u32 %v1278, 16
        %v1330 = vor.u32 %v1327, %v1328
        %v1332 = vshrl.u32 %v1279, 16
        %v1334 = vrot.slane %v1332, 7
        %v1335 = vshll.u32 %v1279, 16
        %v1337 = vor.u32 %v1334, %v1335
        %v1339 = vshrl.u32 %v1280, 16
        %v1341 = vrot.slane %v1339, 7
        %v1342 = vshll.u32 %v1280, 16
        %v1344 = vor.u32 %v1341, %v1342
        %v1346 = vshrl.u32 %v1281, 16
        %v1348 = vrot.slane %v1346, 7
        %v1349 = vshll.u32 %v1281, 16
        %v1351 = vor.u32 %v1348, %v1349
        %v1353 = vshrl.u32 %v1282, 16
        %v1355 = vrot.slane %v1353, 7
        %v1356 = vshll.u32 %v1282, 16
        %v1358 = vor.u32 %v1355, %v1356
        %v1360 = vshrl.u32 %v1283, 16
        %v1362 = vrot.slane %v1360, 7
        %v1363 = vshll.u32 %v1283, 16
        %v1365 = vor.u32 %v1362, %v1363
        %v1367 = vshrl.u32 %v1284, 16
        %v1369 = vrot.slane %v1367, 7
        %v1370 = vshll.u32 %v1284, 16
        %v1372 = vor.u32 %v1369, %v1370
        %v1381 = vld [vmem:[%s283] sm:$0xf]
        %v1382 = vsel %vm625, %v1323, %v1381
        %1383 = vst [vmem:[%s283] sm:$0xf] %v1382
        %v1384 = vld [vmem:[%s283 + $0x4] sm:$0xf]
        %v1385 = vsel %vm625, %v1330, %v1384
        %1386 = vst [vmem:[%s283 + $0x4] sm:$0xf] %v1385
        %v1387 = vld [vmem:[%s283 + $0x8] sm:$0xf]
        %v1388 = vsel %vm625, %v1337, %v1387
        %1389 = vst [vmem:[%s283 + $0x8] sm:$0xf] %v1388
        %v1390 = vld [vmem:[%s283 + $0xc] sm:$0xf]
        %v1391 = vsel %vm625, %v1344, %v1390
        %1392 = vst [vmem:[%s283 + $0xc] sm:$0xf] %v1391
        %v1393 = vld [vmem:[%s283 + $0x10] sm:$0xf]
        %v1394 = vsel %vm625, %v1351, %v1393
        %1395 = vst [vmem:[%s283 + $0x10] sm:$0xf] %v1394
        %v1396 = vld [vmem:[%s283 + $0x14] sm:$0xf]
        %v1397 = vsel %vm625, %v1358, %v1396
        %1398 = vst [vmem:[%s283 + $0x14] sm:$0xf] %v1397
        %v1399 = vld [vmem:[%s283 + $0x18] sm:$0xf]
        %v1400 = vsel %vm625, %v1365, %v1399
        %1401 = vst [vmem:[%s283 + $0x18] sm:$0xf] %v1400
        %v1402 = vld [vmem:[%s283 + $0x1c] sm:$0xf]
        %v1403 = vsel %vm625, %v1372, %v1402
        %1404 = vst [vmem:[%s283 + $0x1c] sm:$0xf] %v1403
        %v1405 = vrot.slane %v1318, 4
        %v1406 = vrot.slane %v1321, 5
        %v1407 = vor.u32 %v1405, %v1406
        %v1408 = vrot.slane %v1407, 4
        %v1409 = vrot.slane %v1325, 4
        %v1410 = vrot.slane %v1328, 5
        %v1411 = vor.u32 %v1409, %v1410
        %v1412 = vrot.slane %v1411, 4
        %v1413 = vrot.slane %v1332, 4
        %v1414 = vrot.slane %v1335, 5
        %v1415 = vor.u32 %v1413, %v1414
        %v1416 = vrot.slane %v1415, 4
        %v1417 = vrot.slane %v1339, 4
        %v1418 = vrot.slane %v1342, 5
        %v1419 = vor.u32 %v1417, %v1418
        %v1420 = vrot.slane %v1419, 4
        %v1421 = vrot.slane %v1346, 4
        %v1422 = vrot.slane %v1349, 5
        %v1423 = vor.u32 %v1421, %v1422
        %v1424 = vrot.slane %v1423, 4
        %v1425 = vrot.slane %v1353, 4
        %v1426 = vrot.slane %v1356, 5
        %v1427 = vor.u32 %v1425, %v1426
        %v1428 = vrot.slane %v1427, 4
        %v1429 = vrot.slane %v1360, 4
        %v1430 = vrot.slane %v1363, 5
        %v1431 = vor.u32 %v1429, %v1430
        %v1432 = vrot.slane %v1431, 4
        %v1433 = vrot.slane %v1367, 4
        %v1434 = vrot.slane %v1370, 5
        %v1435 = vor.u32 %v1433, %v1434
        %v1436 = vrot.slane %v1435, 4
        %1437 = vrot.lane.b32.xlu0 %v1408, 64
        %v1438 = vpop.permute.xlu0 %1437
        %1439 = vrot.lane.b32.xlu0 %v1412, 64
        %v1440 = vpop.permute.xlu0 %1439
        %1441 = vrot.lane.b32.xlu0 %v1416, 64
        %v1442 = vpop.permute.xlu0 %1441
        %1443 = vrot.lane.b32.xlu0 %v1420, 64
        %v1444 = vpop.permute.xlu0 %1443
        %1445 = vrot.lane.b32.xlu0 %v1424, 64
        %v1446 = vpop.permute.xlu0 %1445
        %1447 = vrot.lane.b32.xlu0 %v1428, 64
        %v1448 = vpop.permute.xlu0 %1447
        %1449 = vrot.lane.b32.xlu0 %v1432, 64
        %v1450 = vpop.permute.xlu0 %1449
        %1451 = vrot.lane.b32.xlu0 %v1436, 64
        %v1452 = vpop.permute.xlu0 %1451
        %v1461 = vld [vmem:[%s283] sm:$0xf]
        %v1462 = vsel %vm708, %v1438, %v1461
        %1463 = vst [vmem:[%s283] sm:$0xf] %v1462
        %v1464 = vld [vmem:[%s283 + $0x4] sm:$0xf]
        %v1465 = vsel %vm708, %v1440, %v1464
        %1466 = vst [vmem:[%s283 + $0x4] sm:$0xf] %v1465
        %v1467 = vld [vmem:[%s283 + $0x8] sm:$0xf]
        %v1468 = vsel %vm708, %v1442, %v1467
        %1469 = vst [vmem:[%s283 + $0x8] sm:$0xf] %v1468
        %v1470 = vld [vmem:[%s283 + $0xc] sm:$0xf]
        %v1471 = vsel %vm708, %v1444, %v1470
        %1472 = vst [vmem:[%s283 + $0xc] sm:$0xf] %v1471
        %v1473 = vld [vmem:[%s283 + $0x10] sm:$0xf]
        %v1474 = vsel %vm708, %v1446, %v1473
        %1475 = vst [vmem:[%s283 + $0x10] sm:$0xf] %v1474
        %v1476 = vld [vmem:[%s283 + $0x14] sm:$0xf]
        %v1477 = vsel %vm708, %v1448, %v1476
        %1478 = vst [vmem:[%s283 + $0x14] sm:$0xf] %v1477
        %v1479 = vld [vmem:[%s283 + $0x18] sm:$0xf]
        %v1480 = vsel %vm708, %v1450, %v1479
        %1481 = vst [vmem:[%s283 + $0x18] sm:$0xf] %v1480
        %v1482 = vld [vmem:[%s283 + $0x1c] sm:$0xf]
        %v1483 = vsel %vm708, %v1452, %v1482
        %1484 = vst [vmem:[%s283 + $0x1c] sm:$0xf] %v1483
        %s1485 = smul.u32 %s1260, 48
        %s1486 = smul.addr %s1485, 4
        %s1487 = scalar_lea.vmem %s3, %s1486
        %v1488 = vld [vmem:[%s1487] sm:$0xf]
        %v1489 = vld [vmem:[%s1487 + $0x4] sm:$0xf]
        %v1490 = vld [vmem:[%s1487 + $0x8] sm:$0xf]
        %v1491 = vld [vmem:[%s1487 + $0xc] sm:$0xf]
        %v1492 = vld [vmem:[%s1487 + $0x10] sm:$0xf]
        %v1493 = vld [vmem:[%s1487 + $0x14] sm:$0xf]
        %v1494 = vld [vmem:[%s1487 + $0x18] sm:$0xf]
        %v1495 = vld [vmem:[%s1487 + $0x1c] sm:$0xf]
        %v1496 = vld [vmem:[%s1487 + $0x20] sm:$0xf]
        %v1497 = vld [vmem:[%s1487 + $0x24] sm:$0xf]
        %v1498 = vld [vmem:[%s1487 + $0x28] sm:$0xf]
        %v1499 = vld [vmem:[%s1487 + $0x2c] sm:$0xf]
        %v1500 = vld [vmem:[%s1487 + $0x30] sm:$0xf]
        %v1501 = vld [vmem:[%s1487 + $0x34] sm:$0xf]
        %v1502 = vld [vmem:[%s1487 + $0x38] sm:$0xf]
        %v1503 = vld [vmem:[%s1487 + $0x3c] sm:$0xf]
        %v1504 = vld [vmem:[%s1487 + $0x40] sm:$0xf]
        %v1505 = vld [vmem:[%s1487 + $0x44] sm:$0xf]
        %v1506 = vld [vmem:[%s1487 + $0x48] sm:$0xf]
        %v1507 = vld [vmem:[%s1487 + $0x4c] sm:$0xf]
        %v1508 = vld [vmem:[%s1487 + $0x50] sm:$0xf]
        %v1509 = vld [vmem:[%s1487 + $0x54] sm:$0xf]
        %v1510 = vld [vmem:[%s1487 + $0x58] sm:$0xf]
        %v1511 = vld [vmem:[%s1487 + $0x5c] sm:$0xf]
        %v1512 = vld [vmem:[%s1487 + $0x60] sm:$0xf]
        %v1513 = vld [vmem:[%s1487 + $0x64] sm:$0xf]
        %v1514 = vld [vmem:[%s1487 + $0x68] sm:$0xf]
        %v1515 = vld [vmem:[%s1487 + $0x6c] sm:$0xf]
        %v1516 = vld [vmem:[%s1487 + $0x70] sm:$0xf]
        %v1517 = vld [vmem:[%s1487 + $0x74] sm:$0xf]
        %v1518 = vld [vmem:[%s1487 + $0x78] sm:$0xf]
        %v1519 = vld [vmem:[%s1487 + $0x7c] sm:$0xf]
        %v1520 = vld [vmem:[%s1487 + $0x80] sm:$0xf]
        %v1521 = vld [vmem:[%s1487 + $0x84] sm:$0xf]
        %v1522 = vld [vmem:[%s1487 + $0x88] sm:$0xf]
        %v1523 = vld [vmem:[%s1487 + $0x8c] sm:$0xf]
        %v1524 = vld [vmem:[%s1487 + $0x90] sm:$0xf]
        %v1525 = vld [vmem:[%s1487 + $0x94] sm:$0xf]
        %v1526 = vld [vmem:[%s1487 + $0x98] sm:$0xf]
        %v1527 = vld [vmem:[%s1487 + $0x9c] sm:$0xf]
        %v1528 = vld [vmem:[%s1487 + $0xa0] sm:$0xf]
        %v1529 = vld [vmem:[%s1487 + $0xa4] sm:$0xf]
        %v1530 = vld [vmem:[%s1487 + $0xa8] sm:$0xf]
        %v1531 = vld [vmem:[%s1487 + $0xac] sm:$0xf]
        %v1532 = vld [vmem:[%s1487 + $0xb0] sm:$0xf]
        %v1533 = vld [vmem:[%s1487 + $0xb4] sm:$0xf]
        %v1534 = vld [vmem:[%s1487 + $0xb8] sm:$0xf]
        %v1535 = vld [vmem:[%s1487 + $0xbc] sm:$0xf]
        %s1536 = scalar_lea.vmem %s4, %s1260
        %v1537 = vld [vmem:[%s1536] sm:$0x1]
        %v1538 = vld [vmem:[#allocation2] sm:$0xf]
        %v1539 = vld [vmem:[#allocation2 + $0x4] sm:$0xf]
        %v1540 = vld [vmem:[#allocation2 + $0x8] sm:$0xf]
        %v1541 = vld [vmem:[#allocation2 + $0xc] sm:$0xf]
        %v1542 = vld [vmem:[#allocation2 + $0x10] sm:$0xf]
        %v1543 = vld [vmem:[#allocation2 + $0x14] sm:$0xf]
        %v1544 = vld [vmem:[#allocation2 + $0x18] sm:$0xf]
        %v1545 = vld [vmem:[#allocation2 + $0x1c] sm:$0xf]
        %v1554 = vunpack.c.l.b16 %v1538
        %v1555 = vunpack.c.l.b16 %v1539
        %v1556 = vunpack.c.l.b16 %v1540
        %v1557 = vunpack.c.l.b16 %v1541
        %v1558 = vunpack.c.l.b16 %v1542
        %v1559 = vunpack.c.l.b16 %v1543
        %v1560 = vunpack.c.l.b16 %v1544
        %v1561 = vunpack.c.l.b16 %v1545
        %v1562 = vpack.c.b16 %v1555, %v1554
        %v1563 = vpack.c.b16 %v1557, %v1556
        %v1564 = vpack.c.b16 %v1559, %v1558
        %v1565 = vpack.c.b16 %v1561, %v1560
        %v1586 = vunpack.c.l.b16 %v1488
        %v1587 = vunpack.c.l.b16 %v1489
        %v1588 = vunpack.c.l.b16 %v1490
        %v1589 = vunpack.c.l.b16 %v1491
        %v1590 = vunpack.c.l.b16 %v1492
        %v1591 = vunpack.c.l.b16 %v1493
        %v1592 = vunpack.c.l.b16 %v1494
        %v1593 = vunpack.c.l.b16 %v1495
        %v1594 = vunpack.c.l.b16 %v1496
        %v1595 = vunpack.c.l.b16 %v1497
        %v1596 = vunpack.c.l.b16 %v1498
        %v1597 = vunpack.c.l.b16 %v1499
        %v1598 = vunpack.c.l.b16 %v1500
        %v1599 = vunpack.c.l.b16 %v1501
        %v1600 = vunpack.c.l.b16 %v1502
        %v1601 = vunpack.c.l.b16 %v1503
        %v1602 = vpack.c.b16 %v1587, %v1586
        %v1603 = vpack.c.b16 %v1589, %v1588
        %v1604 = vpack.c.b16 %v1591, %v1590
        %v1605 = vpack.c.b16 %v1593, %v1592
        %v1606 = vpack.c.b16 %v1595, %v1594
        %v1607 = vpack.c.b16 %v1597, %v1596
        %v1608 = vpack.c.b16 %v1599, %v1598
        %v1609 = vpack.c.b16 %v1601, %v1600
        %1618 = vmatprep.subr.bf16.mxu0 0
        %1619 = vmatpush1.bf16.msra.mxu0 %v1609
        %1620 = vmatprep.subr.bf16.mxu0 0
        %1621 = vmatpush1.bf16.msra.mxu0 %v1608
        %1622 = vmatprep.subr.bf16.mxu0 0
        %1623 = vmatpush1.bf16.msra.mxu0 %v1607
        %1624 = vmatprep.subr.bf16.mxu0 0
        %1625 = vmatpush1.bf16.msra.mxu0 %v1606
        %1626 = vmatprep.subr.bf16.mxu0 0
        %1627 = vmatpush1.bf16.msra.mxu0 %v1605
        %1628 = vmatprep.subr.bf16.mxu0 0
        %1629 = vmatpush1.bf16.msra.mxu0 %v1604
        %1630 = vmatprep.subr.bf16.mxu0 0
        %1631 = vmatpush1.bf16.msra.mxu0 %v1603
        %1632 = vmatprep.subr.bf16.mxu0 0
        %1633 = vmatpush1.bf16.msra.mxu0 %v1602
        %1634 = vmatprep.subr.bf16.mxu0 0
        %1635 = vmatpush2.bf16.msra.mxu0 0
        %1636 = vmatprep.subr.bf16.mxu0 0
        %1637 = vmatpush2.bf16.msra.mxu0 0
        %1638 = vmatprep.subr.bf16.mxu0 0
        %1639 = vmatpush2.bf16.msra.mxu0 0
        %1640 = vmatprep.subr.bf16.mxu0 0
        %1641 = vmatpush2.bf16.msra.mxu0 0
        %1642 = vmatprep.subr.bf16.mxu0 0
        %1643 = vmatpush2.bf16.msra.mxu0 0
        %1644 = vmatprep.subr.bf16.mxu0 0
        %1645 = vmatpush2.bf16.msra.mxu0 0
        %1646 = vmatprep.subr.bf16.mxu0 0
        %1647 = vmatpush2.bf16.msra.mxu0 0
        %1648 = vmatprep.subr.bf16.mxu0 0
        %1649 = vmatpush2.bf16.msra.mxu0 0
        %1650 = vmatprep.mubr.bf16.mxu0 0
        %1651 = vmatmul.mubr.bf16.gmra.mxu0 %v1562
        %v1652 = vpop.f32.mrf.mxu0
        %v1653 = vadd.f32 0.0, %v1652
        %v1654 = vpop.f32.mrf.mxu0
        %v1655 = vpop.f32.mrf.mxu0
        %v1656 = vadd.f32 0.0, %v1655
        %v1657 = vpop.f32.mrf.mxu0
        %1658 = vmatprep.mubr.bf16.mxu0 0
        %1659 = vmatmul.mubr.bf16.gmra.mxu0 %v1563
        %v1660 = vpop.f32.mrf.mxu0
        %v1661 = vadd.f32 0.0, %v1660
        %v1662 = vpop.f32.mrf.mxu0
        %v1663 = vpop.f32.mrf.mxu0
        %v1664 = vadd.f32 0.0, %v1663
        %v1665 = vpop.f32.mrf.mxu0
        %1666 = vmatprep.mubr.bf16.mxu0 0
        %1667 = vmatmul.mubr.bf16.gmra.mxu0 %v1564
        %v1668 = vpop.f32.mrf.mxu0
        %v1669 = vadd.f32 0.0, %v1668
        %v1670 = vpop.f32.mrf.mxu0
        %v1671 = vpop.f32.mrf.mxu0
        %v1672 = vadd.f32 0.0, %v1671
        %v1673 = vpop.f32.mrf.mxu0
        %1674 = vmatprep.mubr.bf16.mxu0 0
        %1675 = vmatmul.mubr.bf16.gmra.mxu0 %v1565
        %v1676 = vpop.f32.mrf.mxu0
        %v1677 = vadd.f32 0.0, %v1676
        %v1678 = vpop.f32.mrf.mxu0
        %v1679 = vpop.f32.mrf.mxu0
        %v1680 = vadd.f32 0.0, %v1679
        %v1681 = vpop.f32.mrf.mxu0
        %1682 = vdwg.mxu0
        %v1684 = vlaneseq
        %v1685 = vshrl.u32 %v1684, 7
        %v1686 = vsub.s32 0, %v1685
        %v1687 = vrot.slane %v1537, %v1686
        %v1689 = vadd.f32 %v1687, %v1653
        %v1690 = vadd.f32 %v1687, %v1656
        %v1691 = vadd.f32 %v1687, %v1661
        %v1692 = vadd.f32 %v1687, %v1664
        %v1693 = vadd.f32 %v1687, %v1669
        %v1694 = vadd.f32 %v1687, %v1672
        %v1695 = vadd.f32 %v1687, %v1677
        %v1696 = vadd.f32 %v1687, %v1680
        %v1697 = vld [vmem:[%s283] sm:$0xf]
        %v1698 = vld [vmem:[%s283 + $0x4] sm:$0xf]
        %v1699 = vld [vmem:[%s283 + $0x8] sm:$0xf]
        %v1700 = vld [vmem:[%s283 + $0xc] sm:$0xf]
        %v1701 = vld [vmem:[%s283 + $0x10] sm:$0xf]
        %v1702 = vld [vmem:[%s283 + $0x14] sm:$0xf]
        %v1703 = vld [vmem:[%s283 + $0x18] sm:$0xf]
        %v1704 = vld [vmem:[%s283 + $0x1c] sm:$0xf]
        %v1713 = vunpack.c.l.b16 %v1697
        %v1714 = vunpack.c.l.b16 %v1698
        %v1715 = vunpack.c.l.b16 %v1699
        %v1716 = vunpack.c.l.b16 %v1700
        %v1717 = vunpack.c.l.b16 %v1701
        %v1718 = vunpack.c.l.b16 %v1702
        %v1719 = vunpack.c.l.b16 %v1703
        %v1720 = vunpack.c.l.b16 %v1704
        %v1721 = vpack.c.b16 %v1714, %v1713
        %v1722 = vpack.c.b16 %v1716, %v1715
        %v1723 = vpack.c.b16 %v1718, %v1717
        %v1724 = vpack.c.b16 %v1720, %v1719
        %v1745 = vunpack.c.l.b16 %v1504
        %v1746 = vunpack.c.l.b16 %v1505
        %v1747 = vunpack.c.l.b16 %v1506
        %v1748 = vunpack.c.l.b16 %v1507
        %v1749 = vunpack.c.l.b16 %v1508
        %v1750 = vunpack.c.l.b16 %v1509
        %v1751 = vunpack.c.l.b16 %v1510
        %v1752 = vunpack.c.l.b16 %v1511
        %v1753 = vunpack.c.l.b16 %v1512
        %v1754 = vunpack.c.l.b16 %v1513
        %v1755 = vunpack.c.l.b16 %v1514
        %v1756 = vunpack.c.l.b16 %v1515
        %v1757 = vunpack.c.l.b16 %v1516
        %v1758 = vunpack.c.l.b16 %v1517
        %v1759 = vunpack.c.l.b16 %v1518
        %v1760 = vunpack.c.l.b16 %v1519
        %v1761 = vpack.c.b16 %v1746, %v1745
        %v1762 = vpack.c.b16 %v1748, %v1747
        %v1763 = vpack.c.b16 %v1750, %v1749
        %v1764 = vpack.c.b16 %v1752, %v1751
        %v1765 = vpack.c.b16 %v1754, %v1753
        %v1766 = vpack.c.b16 %v1756, %v1755
        %v1767 = vpack.c.b16 %v1758, %v1757
        %v1768 = vpack.c.b16 %v1760, %v1759
        %1777 = vmatprep.subr.bf16.mxu0 0
        %1778 = vmatpush1.bf16.msra.mxu0 %v1768
        %1779 = vmatprep.subr.bf16.mxu0 0
        %1780 = vmatpush1.bf16.msra.mxu0 %v1767
        %1781 = vmatprep.subr.bf16.mxu0 0
        %1782 = vmatpush1.bf16.msra.mxu0 %v1766
        %1783 = vmatprep.subr.bf16.mxu0 0
        %1784 = vmatpush1.bf16.msra.mxu0 %v1765
        %1785 = vmatprep.subr.bf16.mxu0 0
        %1786 = vmatpush1.bf16.msra.mxu0 %v1764
        %1787 = vmatprep.subr.bf16.mxu0 0
        %1788 = vmatpush1.bf16.msra.mxu0 %v1763
        %1789 = vmatprep.subr.bf16.mxu0 0
        %1790 = vmatpush1.bf16.msra.mxu0 %v1762
        %1791 = vmatprep.subr.bf16.mxu0 0
        %1792 = vmatpush1.bf16.msra.mxu0 %v1761
        %1793 = vmatprep.subr.bf16.mxu0 0
        %1794 = vmatpush2.bf16.msra.mxu0 0
        %1795 = vmatprep.subr.bf16.mxu0 0
        %1796 = vmatpush2.bf16.msra.mxu0 0
        %1797 = vmatprep.subr.bf16.mxu0 0
        %1798 = vmatpush2.bf16.msra.mxu0 0
        %1799 = vmatprep.subr.bf16.mxu0 0
        %1800 = vmatpush2.bf16.msra.mxu0 0
        %1801 = vmatprep.subr.bf16.mxu0 0
        %1802 = vmatpush2.bf16.msra.mxu0 0
        %1803 = vmatprep.subr.bf16.mxu0 0
        %1804 = vmatpush2.bf16.msra.mxu0 0
        %1805 = vmatprep.subr.bf16.mxu0 0
        %1806 = vmatpush2.bf16.msra.mxu0 0
        %1807 = vmatprep.subr.bf16.mxu0 0
        %1808 = vmatpush2.bf16.msra.mxu0 0
        %1809 = vmatprep.mubr.bf16.mxu0 0
        %1810 = vmatmul.mubr.bf16.gmra.mxu0 %v1721
        %v1811 = vpop.f32.mrf.mxu0
        %v1812 = vadd.f32 0.0, %v1811
        %v1813 = vpop.f32.mrf.mxu0
        %v1814 = vpop.f32.mrf.mxu0
        %v1815 = vadd.f32 0.0, %v1814
        %v1816 = vpop.f32.mrf.mxu0
        %1817 = vmatprep.mubr.bf16.mxu0 0
        %1818 = vmatmul.mubr.bf16.gmra.mxu0 %v1722
        %v1819 = vpop.f32.mrf.mxu0
        %v1820 = vadd.f32 0.0, %v1819
        %v1821 = vpop.f32.mrf.mxu0
        %v1822 = vpop.f32.mrf.mxu0
        %v1823 = vadd.f32 0.0, %v1822
        %v1824 = vpop.f32.mrf.mxu0
        %1825 = vmatprep.mubr.bf16.mxu0 0
        %1826 = vmatmul.mubr.bf16.gmra.mxu0 %v1723
        %v1827 = vpop.f32.mrf.mxu0
        %v1828 = vadd.f32 0.0, %v1827
        %v1829 = vpop.f32.mrf.mxu0
        %v1830 = vpop.f32.mrf.mxu0
        %v1831 = vadd.f32 0.0, %v1830
        %v1832 = vpop.f32.mrf.mxu0
        %1833 = vmatprep.mubr.bf16.mxu0 0
        %1834 = vmatmul.mubr.bf16.gmra.mxu0 %v1724
        %v1835 = vpop.f32.mrf.mxu0
        %v1836 = vadd.f32 0.0, %v1835
        %v1837 = vpop.f32.mrf.mxu0
        %v1838 = vpop.f32.mrf.mxu0
        %v1839 = vadd.f32 0.0, %v1838
        %v1840 = vpop.f32.mrf.mxu0
        %1841 = vdwg.mxu0
        %v1842 = vadd.f32 %v1689, %v1812
        %v1843 = vadd.f32 %v1690, %v1815
        %v1844 = vadd.f32 %v1691, %v1820
        %v1845 = vadd.f32 %v1692, %v1823
        %v1846 = vadd.f32 %v1693, %v1828
        %v1847 = vadd.f32 %v1694, %v1831
        %v1848 = vadd.f32 %v1695, %v1836
        %v1849 = vadd.f32 %v1696, %v1839
        %v1850 = vld [vmem:[%s1098] sm:$0xf]
        %v1851 = vld [vmem:[%s1098 + $0x4] sm:$0xf]
        %v1852 = vld [vmem:[%s1098 + $0x8] sm:$0xf]
        %v1853 = vld [vmem:[%s1098 + $0xc] sm:$0xf]
        %v1854 = vld [vmem:[%s1098 + $0x10] sm:$0xf]
        %v1855 = vld [vmem:[%s1098 + $0x14] sm:$0xf]
        %v1856 = vld [vmem:[%s1098 + $0x18] sm:$0xf]
        %v1857 = vld [vmem:[%s1098 + $0x1c] sm:$0xf]
        %v1866 = vunpack.c.l.b16 %v1850
        %v1867 = vunpack.c.l.b16 %v1851
        %v1868 = vunpack.c.l.b16 %v1852
        %v1869 = vunpack.c.l.b16 %v1853
        %v1870 = vunpack.c.l.b16 %v1854
        %v1871 = vunpack.c.l.b16 %v1855
        %v1872 = vunpack.c.l.b16 %v1856
        %v1873 = vunpack.c.l.b16 %v1857
        %v1874 = vpack.c.b16 %v1867, %v1866
        %v1875 = vpack.c.b16 %v1869, %v1868
        %v1876 = vpack.c.b16 %v1871, %v1870
        %v1877 = vpack.c.b16 %v1873, %v1872
        %v1898 = vunpack.c.l.b16 %v1520
        %v1899 = vunpack.c.l.b16 %v1521
        %v1900 = vunpack.c.l.b16 %v1522
        %v1901 = vunpack.c.l.b16 %v1523
        %v1902 = vunpack.c.l.b16 %v1524
        %v1903 = vunpack.c.l.b16 %v1525
        %v1904 = vunpack.c.l.b16 %v1526
        %v1905 = vunpack.c.l.b16 %v1527
        %v1906 = vunpack.c.l.b16 %v1528
        %v1907 = vunpack.c.l.b16 %v1529
        %v1908 = vunpack.c.l.b16 %v1530
        %v1909 = vunpack.c.l.b16 %v1531
        %v1910 = vunpack.c.l.b16 %v1532
        %v1911 = vunpack.c.l.b16 %v1533
        %v1912 = vunpack.c.l.b16 %v1534
        %v1913 = vunpack.c.l.b16 %v1535
        %v1914 = vpack.c.b16 %v1899, %v1898
        %v1915 = vpack.c.b16 %v1901, %v1900
        %v1916 = vpack.c.b16 %v1903, %v1902
        %v1917 = vpack.c.b16 %v1905, %v1904
        %v1918 = vpack.c.b16 %v1907, %v1906
        %v1919 = vpack.c.b16 %v1909, %v1908
        %v1920 = vpack.c.b16 %v1911, %v1910
        %v1921 = vpack.c.b16 %v1913, %v1912
        %1930 = vmatprep.subr.bf16.mxu0 0
        %1931 = vmatpush1.bf16.msra.mxu0 %v1921
        %1932 = vmatprep.subr.bf16.mxu0 0
        %1933 = vmatpush1.bf16.msra.mxu0 %v1920
        %1934 = vmatprep.subr.bf16.mxu0 0
        %1935 = vmatpush1.bf16.msra.mxu0 %v1919
        %1936 = vmatprep.subr.bf16.mxu0 0
        %1937 = vmatpush1.bf16.msra.mxu0 %v1918
        %1938 = vmatprep.subr.bf16.mxu0 0
        %1939 = vmatpush1.bf16.msra.mxu0 %v1917
        %1940 = vmatprep.subr.bf16.mxu0 0
        %1941 = vmatpush1.bf16.msra.mxu0 %v1916
        %1942 = vmatprep.subr.bf16.mxu0 0
        %1943 = vmatpush1.bf16.msra.mxu0 %v1915
        %1944 = vmatprep.subr.bf16.mxu0 0
        %1945 = vmatpush1.bf16.msra.mxu0 %v1914
        %1946 = vmatprep.subr.bf16.mxu0 0
        %1947 = vmatpush2.bf16.msra.mxu0 0
        %1948 = vmatprep.subr.bf16.mxu0 0
        %1949 = vmatpush2.bf16.msra.mxu0 0
        %1950 = vmatprep.subr.bf16.mxu0 0
        %1951 = vmatpush2.bf16.msra.mxu0 0
        %1952 = vmatprep.subr.bf16.mxu0 0
        %1953 = vmatpush2.bf16.msra.mxu0 0
        %1954 = vmatprep.subr.bf16.mxu0 0
        %1955 = vmatpush2.bf16.msra.mxu0 0
        %1956 = vmatprep.subr.bf16.mxu0 0
        %1957 = vmatpush2.bf16.msra.mxu0 0
        %1958 = vmatprep.subr.bf16.mxu0 0
        %1959 = vmatpush2.bf16.msra.mxu0 0
        %1960 = vmatprep.subr.bf16.mxu0 0
        %1961 = vmatpush2.bf16.msra.mxu0 0
        %1962 = vmatprep.mubr.bf16.mxu0 0
        %1963 = vmatmul.mubr.bf16.gmra.mxu0 %v1874
        %v1964 = vpop.f32.mrf.mxu0
        %v1965 = vadd.f32 0.0, %v1964
        %v1966 = vpop.f32.mrf.mxu0
        %v1967 = vpop.f32.mrf.mxu0
        %v1968 = vadd.f32 0.0, %v1967
        %v1969 = vpop.f32.mrf.mxu0
        %1970 = vmatprep.mubr.bf16.mxu0 0
        %1971 = vmatmul.mubr.bf16.gmra.mxu0 %v1875
        %v1972 = vpop.f32.mrf.mxu0
        %v1973 = vadd.f32 0.0, %v1972
        %v1974 = vpop.f32.mrf.mxu0
        %v1975 = vpop.f32.mrf.mxu0
        %v1976 = vadd.f32 0.0, %v1975
        %v1977 = vpop.f32.mrf.mxu0
        %1978 = vmatprep.mubr.bf16.mxu0 0
        %1979 = vmatmul.mubr.bf16.gmra.mxu0 %v1876
        %v1980 = vpop.f32.mrf.mxu0
        %v1981 = vadd.f32 0.0, %v1980
        %v1982 = vpop.f32.mrf.mxu0
        %v1983 = vpop.f32.mrf.mxu0
        %v1984 = vadd.f32 0.0, %v1983
        %v1985 = vpop.f32.mrf.mxu0
        %1986 = vmatprep.mubr.bf16.mxu0 0
        %1987 = vmatmul.mubr.bf16.gmra.mxu0 %v1877
        %v1988 = vpop.f32.mrf.mxu0
        %v1989 = vadd.f32 0.0, %v1988
        %v1990 = vpop.f32.mrf.mxu0
        %v1991 = vpop.f32.mrf.mxu0
        %v1992 = vadd.f32 0.0, %v1991
        %v1993 = vpop.f32.mrf.mxu0
        %1994 = vdwg.mxu0
        %v1995 = vadd.f32 %v1842, %v1965
        %v1996 = vadd.f32 %v1843, %v1968
        %v1997 = vadd.f32 %v1844, %v1973
        %v1998 = vadd.f32 %v1845, %v1976
        %v1999 = vadd.f32 %v1846, %v1981
        %v2000 = vadd.f32 %v1847, %v1984
        %v2001 = vadd.f32 %v1848, %v1989
        %v2002 = vadd.f32 %v1849, %v1992
        %v2003 = vadd.f32 %v1995, %v493
        %v2004 = vadd.f32 %v1996, %v494
        %v2005 = vadd.f32 %v1997, %v495
        %v2006 = vadd.f32 %v1998, %v496
        %v2007 = vadd.f32 %v1999, %v497
        %v2008 = vadd.f32 %v2000, %v498
        %v2009 = vadd.f32 %v2001, %v499
        %v2010 = vadd.f32 %v2002, %v500
      $region53: #{estnet_forward_pallas.2} parent=47 // loop_footer
        %s492 = sadd.s32 1, %s488
      $region54: #{estnet_forward_pallas.2} parent=47 // loop_footer_branch
        %487 = sbr.rel target = $region50
      $region55: #{estnet_forward_pallas.2} parent=47 // loop_exit
        _
      %v2011 = vpack.c.bf16 %v494, %v493
      %v2012 = vpack.c.bf16 %v496, %v495
      %v2013 = vpack.c.bf16 %v498, %v497
      %v2014 = vpack.c.bf16 %v500, %v499
      %v2019 = vunpack.c.l.b16 %v2011
      %v2020 = vunpack.c.h.b16 %v2011
      %v2021 = vunpack.c.l.b16 %v2012
      %v2022 = vunpack.c.h.b16 %v2012
      %v2023 = vunpack.c.l.b16 %v2013
      %v2024 = vunpack.c.h.b16 %v2013
      %v2025 = vunpack.c.l.b16 %v2014
      %v2026 = vunpack.c.h.b16 %v2014
      %v2027 = vpack.c.b16 %v2019, %v2019
      %v2028 = vpack.c.b16 %v2020, %v2020
      %v2029 = vpack.c.b16 %v2021, %v2021
      %v2030 = vpack.c.b16 %v2022, %v2022
      %v2031 = vpack.c.b16 %v2023, %v2023
      %v2032 = vpack.c.b16 %v2024, %v2024
      %v2033 = vpack.c.b16 %v2025, %v2025
      %v2034 = vpack.c.b16 %v2026, %v2026
      %2035 = vrot.lane.b32.xlu0 %v2027, 32
      %v2036 = vpop.permute.xlu0 %2035
      %2037 = vrot.lane.b32.xlu0 %v2028, 32
      %v2038 = vpop.permute.xlu0 %2037
      %2039 = vrot.lane.b32.xlu0 %v2029, 32
      %v2040 = vpop.permute.xlu0 %2039
      %2041 = vrot.lane.b32.xlu0 %v2030, 32
      %v2042 = vpop.permute.xlu0 %2041
      %2043 = vrot.lane.b32.xlu0 %v2031, 32
      %v2044 = vpop.permute.xlu0 %2043
      %2045 = vrot.lane.b32.xlu0 %v2032, 32
      %v2046 = vpop.permute.xlu0 %2045
      %2047 = vrot.lane.b32.xlu0 %v2033, 32
      %v2048 = vpop.permute.xlu0 %2047
      %2049 = vrot.lane.b32.xlu0 %v2034, 32
      %v2050 = vpop.permute.xlu0 %2049
      %vm2059 = vcmask 519424
      %2060 = vst.msk [vmem:[%s283] sm:$0xf] %vm2059, %v2036
      %2061 = vst.msk [vmem:[%s283 + $0x4] sm:$0xf] %vm2059, %v2038
      %2062 = vst.msk [vmem:[%s283 + $0x8] sm:$0xf] %vm2059, %v2040
      %2063 = vst.msk [vmem:[%s283 + $0xc] sm:$0xf] %vm2059, %v2042
      %2064 = vst.msk [vmem:[%s283 + $0x10] sm:$0xf] %vm2059, %v2044
      %2065 = vst.msk [vmem:[%s283 + $0x14] sm:$0xf] %vm2059, %v2046
      %2066 = vst.msk [vmem:[%s283 + $0x18] sm:$0xf] %vm2059, %v2048
      %2067 = vst.msk [vmem:[%s283 + $0x1c] sm:$0xf] %vm2059, %v2050
      %v2069 = vshrl.u32 %v2027, 16
      %v2071 = vrot.slane %v2069, 7
      %v2072 = vshll.u32 %v2027, 16
      %v2074 = vor.u32 %v2071, %v2072
      %v2076 = vshrl.u32 %v2028, 16
      %v2078 = vrot.slane %v2076, 7
      %v2079 = vshll.u32 %v2028, 16
      %v2081 = vor.u32 %v2078, %v2079
      %v2083 = vshrl.u32 %v2029, 16
      %v2085 = vrot.slane %v2083, 7
      %v2086 = vshll.u32 %v2029, 16
      %v2088 = vor.u32 %v2085, %v2086
      %v2090 = vshrl.u32 %v2030, 16
      %v2092 = vrot.slane %v2090, 7
      %v2093 = vshll.u32 %v2030, 16
      %v2095 = vor.u32 %v2092, %v2093
      %v2097 = vshrl.u32 %v2031, 16
      %v2099 = vrot.slane %v2097, 7
      %v2100 = vshll.u32 %v2031, 16
      %v2102 = vor.u32 %v2099, %v2100
      %v2104 = vshrl.u32 %v2032, 16
      %v2106 = vrot.slane %v2104, 7
      %v2107 = vshll.u32 %v2032, 16
      %v2109 = vor.u32 %v2106, %v2107
      %v2111 = vshrl.u32 %v2033, 16
      %v2113 = vrot.slane %v2111, 7
      %v2114 = vshll.u32 %v2033, 16
      %v2116 = vor.u32 %v2113, %v2114
      %v2118 = vshrl.u32 %v2034, 16
      %v2120 = vrot.slane %v2118, 7
      %v2121 = vshll.u32 %v2034, 16
      %v2123 = vor.u32 %v2120, %v2121
      %vm2132 = vcmask 257024
      %vm2133 = vsmask.f32 7938
      %vm2134 = vmand %vm2132, %vm2133
      %v2135 = vld [vmem:[%s283] sm:$0xf]
      %v2136 = vsel %vm2134, %v2074, %v2135
      %2137 = vst [vmem:[%s283] sm:$0xf] %v2136
      %v2138 = vld [vmem:[%s283 + $0x4] sm:$0xf]
      %v2139 = vsel %vm2134, %v2081, %v2138
      %2140 = vst [vmem:[%s283 + $0x4] sm:$0xf] %v2139
      %v2141 = vld [vmem:[%s283 + $0x8] sm:$0xf]
      %v2142 = vsel %vm2134, %v2088, %v2141
      %2143 = vst [vmem:[%s283 + $0x8] sm:$0xf] %v2142
      %v2144 = vld [vmem:[%s283 + $0xc] sm:$0xf]
      %v2145 = vsel %vm2134, %v2095, %v2144
      %2146 = vst [vmem:[%s283 + $0xc] sm:$0xf] %v2145
      %v2147 = vld [vmem:[%s283 + $0x10] sm:$0xf]
      %v2148 = vsel %vm2134, %v2102, %v2147
      %2149 = vst [vmem:[%s283 + $0x10] sm:$0xf] %v2148
      %v2150 = vld [vmem:[%s283 + $0x14] sm:$0xf]
      %v2151 = vsel %vm2134, %v2109, %v2150
      %2152 = vst [vmem:[%s283 + $0x14] sm:$0xf] %v2151
      %v2153 = vld [vmem:[%s283 + $0x18] sm:$0xf]
      %v2154 = vsel %vm2134, %v2116, %v2153
      %2155 = vst [vmem:[%s283 + $0x18] sm:$0xf] %v2154
      %v2156 = vld [vmem:[%s283 + $0x1c] sm:$0xf]
      %v2157 = vsel %vm2134, %v2123, %v2156
      %2158 = vst [vmem:[%s283 + $0x1c] sm:$0xf] %v2157
      %v2159 = vrot.slane %v2069, 4
      %v2160 = vrot.slane %v2072, 5
      %v2161 = vor.u32 %v2159, %v2160
      %v2162 = vrot.slane %v2161, 4
      %v2163 = vrot.slane %v2076, 4
      %v2164 = vrot.slane %v2079, 5
      %v2165 = vor.u32 %v2163, %v2164
      %v2166 = vrot.slane %v2165, 4
      %v2167 = vrot.slane %v2083, 4
      %v2168 = vrot.slane %v2086, 5
      %v2169 = vor.u32 %v2167, %v2168
      %v2170 = vrot.slane %v2169, 4
      %v2171 = vrot.slane %v2090, 4
      %v2172 = vrot.slane %v2093, 5
      %v2173 = vor.u32 %v2171, %v2172
      %v2174 = vrot.slane %v2173, 4
      %v2175 = vrot.slane %v2097, 4
      %v2176 = vrot.slane %v2100, 5
      %v2177 = vor.u32 %v2175, %v2176
      %v2178 = vrot.slane %v2177, 4
      %v2179 = vrot.slane %v2104, 4
      %v2180 = vrot.slane %v2107, 5
      %v2181 = vor.u32 %v2179, %v2180
      %v2182 = vrot.slane %v2181, 4
      %v2183 = vrot.slane %v2111, 4
      %v2184 = vrot.slane %v2114, 5
      %v2185 = vor.u32 %v2183, %v2184
      %v2186 = vrot.slane %v2185, 4
      %v2187 = vrot.slane %v2118, 4
      %v2188 = vrot.slane %v2121, 5
      %v2189 = vor.u32 %v2187, %v2188
      %v2190 = vrot.slane %v2189, 4
      %2191 = vrot.lane.b32.xlu0 %v2162, 64
      %v2192 = vpop.permute.xlu0 %2191
      %2193 = vrot.lane.b32.xlu0 %v2166, 64
      %v2194 = vpop.permute.xlu0 %2193
      %2195 = vrot.lane.b32.xlu0 %v2170, 64
      %v2196 = vpop.permute.xlu0 %2195
      %2197 = vrot.lane.b32.xlu0 %v2174, 64
      %v2198 = vpop.permute.xlu0 %2197
      %2199 = vrot.lane.b32.xlu0 %v2178, 64
      %v2200 = vpop.permute.xlu0 %2199
      %2201 = vrot.lane.b32.xlu0 %v2182, 64
      %v2202 = vpop.permute.xlu0 %2201
      %2203 = vrot.lane.b32.xlu0 %v2186, 64
      %v2204 = vpop.permute.xlu0 %2203
      %2205 = vrot.lane.b32.xlu0 %v2190, 64
      %v2206 = vpop.permute.xlu0 %2205
      %vm2215 = vcmask 781824
      %vm2216 = vsmask.f32 3328
      %vm2217 = vmand %vm2215, %vm2216
      %v2218 = vld [vmem:[%s283] sm:$0xf]
      %v2219 = vsel %vm2217, %v2192, %v2218
      %2220 = vst [vmem:[%s283] sm:$0xf] %v2219
      %v2221 = vld [vmem:[%s283 + $0x4] sm:$0xf]
      %v2222 = vsel %vm2217, %v2194, %v2221
      %2223 = vst [vmem:[%s283 + $0x4] sm:$0xf] %v2222
      %v2224 = vld [vmem:[%s283 + $0x8] sm:$0xf]
      %v2225 = vsel %vm2217, %v2196, %v2224
      %2226 = vst [vmem:[%s283 + $0x8] sm:$0xf] %v2225
      %v2227 = vld [vmem:[%s283 + $0xc] sm:$0xf]
      %v2228 = vsel %vm2217, %v2198, %v2227
      %2229 = vst [vmem:[%s283 + $0xc] sm:$0xf] %v2228
      %v2230 = vld [vmem:[%s283 + $0x10] sm:$0xf]
      %v2231 = vsel %vm2217, %v2200, %v2230
      %2232 = vst [vmem:[%s283 + $0x10] sm:$0xf] %v2231
      %v2233 = vld [vmem:[%s283 + $0x14] sm:$0xf]
      %v2234 = vsel %vm2217, %v2202, %v2233
      %2235 = vst [vmem:[%s283 + $0x14] sm:$0xf] %v2234
      %v2236 = vld [vmem:[%s283 + $0x18] sm:$0xf]
      %v2237 = vsel %vm2217, %v2204, %v2236
      %2238 = vst [vmem:[%s283 + $0x18] sm:$0xf] %v2237
      %v2239 = vld [vmem:[%s283 + $0x1c] sm:$0xf]
      %v2240 = vsel %vm2217, %v2206, %v2239
      %2241 = vst [vmem:[%s283 + $0x1c] sm:$0xf] %v2240
      %s2242 = scalar_lea.vmem %s3, 768
      %v2243 = vld [vmem:[%s2242] sm:$0xf]
      %v2244 = vld [vmem:[%s2242 + $0x4] sm:$0xf]
      %v2245 = vld [vmem:[%s2242 + $0x8] sm:$0xf]
      %v2246 = vld [vmem:[%s2242 + $0xc] sm:$0xf]
      %v2247 = vld [vmem:[%s2242 + $0x10] sm:$0xf]
      %v2248 = vld [vmem:[%s2242 + $0x14] sm:$0xf]
      %v2249 = vld [vmem:[%s2242 + $0x18] sm:$0xf]
      %v2250 = vld [vmem:[%s2242 + $0x1c] sm:$0xf]
      %v2251 = vld [vmem:[%s2242 + $0x20] sm:$0xf]
      %v2252 = vld [vmem:[%s2242 + $0x24] sm:$0xf]
      %v2253 = vld [vmem:[%s2242 + $0x28] sm:$0xf]
      %v2254 = vld [vmem:[%s2242 + $0x2c] sm:$0xf]
      %v2255 = vld [vmem:[%s2242 + $0x30] sm:$0xf]
      %v2256 = vld [vmem:[%s2242 + $0x34] sm:$0xf]
      %v2257 = vld [vmem:[%s2242 + $0x38] sm:$0xf]
      %v2258 = vld [vmem:[%s2242 + $0x3c] sm:$0xf]
      %v2259 = vld [vmem:[%s2242 + $0x40] sm:$0xf]
      %v2260 = vld [vmem:[%s2242 + $0x44] sm:$0xf]
      %v2261 = vld [vmem:[%s2242 + $0x48] sm:$0xf]
      %v2262 = vld [vmem:[%s2242 + $0x4c] sm:$0xf]
      %v2263 = vld [vmem:[%s2242 + $0x50] sm:$0xf]
      %v2264 = vld [vmem:[%s2242 + $0x54] sm:$0xf]
      %v2265 = vld [vmem:[%s2242 + $0x58] sm:$0xf]
      %v2266 = vld [vmem:[%s2242 + $0x5c] sm:$0xf]
      %v2267 = vld [vmem:[%s2242 + $0x60] sm:$0xf]
      %v2268 = vld [vmem:[%s2242 + $0x64] sm:$0xf]
      %v2269 = vld [vmem:[%s2242 + $0x68] sm:$0xf]
      %v2270 = vld [vmem:[%s2242 + $0x6c] sm:$0xf]
      %v2271 = vld [vmem:[%s2242 + $0x70] sm:$0xf]
      %v2272 = vld [vmem:[%s2242 + $0x74] sm:$0xf]
      %v2273 = vld [vmem:[%s2242 + $0x78] sm:$0xf]
      %v2274 = vld [vmem:[%s2242 + $0x7c] sm:$0xf]
      %v2275 = vld [vmem:[%s2242 + $0x80] sm:$0xf]
      %v2276 = vld [vmem:[%s2242 + $0x84] sm:$0xf]
      %v2277 = vld [vmem:[%s2242 + $0x88] sm:$0xf]
      %v2278 = vld [vmem:[%s2242 + $0x8c] sm:$0xf]
      %v2279 = vld [vmem:[%s2242 + $0x90] sm:$0xf]
      %v2280 = vld [vmem:[%s2242 + $0x94] sm:$0xf]
      %v2281 = vld [vmem:[%s2242 + $0x98] sm:$0xf]
      %v2282 = vld [vmem:[%s2242 + $0x9c] sm:$0xf]
      %v2283 = vld [vmem:[%s2242 + $0xa0] sm:$0xf]
      %v2284 = vld [vmem:[%s2242 + $0xa4] sm:$0xf]
      %v2285 = vld [vmem:[%s2242 + $0xa8] sm:$0xf]
      %v2286 = vld [vmem:[%s2242 + $0xac] sm:$0xf]
      %v2287 = vld [vmem:[%s2242 + $0xb0] sm:$0xf]
      %v2288 = vld [vmem:[%s2242 + $0xb4] sm:$0xf]
      %v2289 = vld [vmem:[%s2242 + $0xb8] sm:$0xf]
      %v2290 = vld [vmem:[%s2242 + $0xbc] sm:$0xf]
      %s2291 = scalar_lea.vmem %s4, 4
      %v2292 = vld [vmem:[%s2291] sm:$0x1]
      %v2293 = vld [vmem:[#allocation2] sm:$0xf]
      %v2294 = vld [vmem:[#allocation2 + $0x4] sm:$0xf]
      %v2295 = vld [vmem:[#allocation2 + $0x8] sm:$0xf]
      %v2296 = vld [vmem:[#allocation2 + $0xc] sm:$0xf]
      %v2297 = vld [vmem:[#allocation2 + $0x10] sm:$0xf]
      %v2298 = vld [vmem:[#allocation2 + $0x14] sm:$0xf]
      %v2299 = vld [vmem:[#allocation2 + $0x18] sm:$0xf]
      %v2300 = vld [vmem:[#allocation2 + $0x1c] sm:$0xf]
      %v2309 = vunpack.c.l.b16 %v2293
      %v2310 = vunpack.c.l.b16 %v2294
      %v2311 = vunpack.c.l.b16 %v2295
      %v2312 = vunpack.c.l.b16 %v2296
      %v2313 = vunpack.c.l.b16 %v2297
      %v2314 = vunpack.c.l.b16 %v2298
      %v2315 = vunpack.c.l.b16 %v2299
      %v2316 = vunpack.c.l.b16 %v2300
      %v2317 = vpack.c.b16 %v2310, %v2309
      %v2318 = vpack.c.b16 %v2312, %v2311
      %v2319 = vpack.c.b16 %v2314, %v2313
      %v2320 = vpack.c.b16 %v2316, %v2315
      %v2341 = vunpack.c.l.b16 %v2243
      %v2342 = vunpack.c.l.b16 %v2244
      %v2343 = vunpack.c.l.b16 %v2245
      %v2344 = vunpack.c.l.b16 %v2246
      %v2345 = vunpack.c.l.b16 %v2247
      %v2346 = vunpack.c.l.b16 %v2248
      %v2347 = vunpack.c.l.b16 %v2249
      %v2348 = vunpack.c.l.b16 %v2250
      %v2349 = vunpack.c.l.b16 %v2251
      %v2350 = vunpack.c.l.b16 %v2252
      %v2351 = vunpack.c.l.b16 %v2253
      %v2352 = vunpack.c.l.b16 %v2254
      %v2353 = vunpack.c.l.b16 %v2255
      %v2354 = vunpack.c.l.b16 %v2256
      %v2355 = vunpack.c.l.b16 %v2257
      %v2356 = vunpack.c.l.b16 %v2258
      %v2357 = vpack.c.b16 %v2342, %v2341
      %v2358 = vpack.c.b16 %v2344, %v2343
      %v2359 = vpack.c.b16 %v2346, %v2345
      %v2360 = vpack.c.b16 %v2348, %v2347
      %v2361 = vpack.c.b16 %v2350, %v2349
      %v2362 = vpack.c.b16 %v2352, %v2351
      %v2363 = vpack.c.b16 %v2354, %v2353
      %v2364 = vpack.c.b16 %v2356, %v2355
      %2373 = vmatprep.subr.bf16.mxu0 0
      %2374 = vmatpush1.bf16.msra.mxu0 %v2364
      %2375 = vmatprep.subr.bf16.mxu0 0
      %2376 = vmatpush1.bf16.msra.mxu0 %v2363
      %2377 = vmatprep.subr.bf16.mxu0 0
      %2378 = vmatpush1.bf16.msra.mxu0 %v2362
      %2379 = vmatprep.subr.bf16.mxu0 0
      %2380 = vmatpush1.bf16.msra.mxu0 %v2361
      %2381 = vmatprep.subr.bf16.mxu0 0
      %2382 = vmatpush1.bf16.msra.mxu0 %v2360
      %2383 = vmatprep.subr.bf16.mxu0 0
      %2384 = vmatpush1.bf16.msra.mxu0 %v2359
      %2385 = vmatprep.subr.bf16.mxu0 0
      %2386 = vmatpush1.bf16.msra.mxu0 %v2358
      %2387 = vmatprep.subr.bf16.mxu0 0
      %2388 = vmatpush1.bf16.msra.mxu0 %v2357
      %2389 = vmatprep.subr.bf16.mxu0 0
      %2390 = vmatpush2.bf16.msra.mxu0 0
      %2391 = vmatprep.subr.bf16.mxu0 0
      %2392 = vmatpush2.bf16.msra.mxu0 0
      %2393 = vmatprep.subr.bf16.mxu0 0
      %2394 = vmatpush2.bf16.msra.mxu0 0
      %2395 = vmatprep.subr.bf16.mxu0 0
      %2396 = vmatpush2.bf16.msra.mxu0 0
      %2397 = vmatprep.subr.bf16.mxu0 0
      %2398 = vmatpush2.bf16.msra.mxu0 0
      %2399 = vmatprep.subr.bf16.mxu0 0
      %2400 = vmatpush2.bf16.msra.mxu0 0
      %2401 = vmatprep.subr.bf16.mxu0 0
      %2402 = vmatpush2.bf16.msra.mxu0 0
      %2403 = vmatprep.subr.bf16.mxu0 0
      %2404 = vmatpush2.bf16.msra.mxu0 0
      %2405 = vmatprep.mubr.bf16.mxu0 0
      %2406 = vmatmul.mubr.bf16.gmra.mxu0 %v2317
      %v2407 = vpop.f32.mrf.mxu0
      %v2408 = vadd.f32 0.0, %v2407
      %v2409 = vpop.f32.mrf.mxu0
      %v2410 = vpop.f32.mrf.mxu0
      %v2411 = vadd.f32 0.0, %v2410
      %v2412 = vpop.f32.mrf.mxu0
      %2413 = vmatprep.mubr.bf16.mxu0 0
      %2414 = vmatmul.mubr.bf16.gmra.mxu0 %v2318
      %v2415 = vpop.f32.mrf.mxu0
      %v2416 = vadd.f32 0.0, %v2415
      %v2417 = vpop.f32.mrf.mxu0
      %v2418 = vpop.f32.mrf.mxu0
      %v2419 = vadd.f32 0.0, %v2418
      %v2420 = vpop.f32.mrf.mxu0
      %2421 = vmatprep.mubr.bf16.mxu0 0
      %2422 = vmatmul.mubr.bf16.gmra.mxu0 %v2319
      %v2423 = vpop.f32.mrf.mxu0
      %v2424 = vadd.f32 0.0, %v2423
      %v2425 = vpop.f32.mrf.mxu0
      %v2426 = vpop.f32.mrf.mxu0
      %v2427 = vadd.f32 0.0, %v2426
      %v2428 = vpop.f32.mrf.mxu0
      %2429 = vmatprep.mubr.bf16.mxu0 0
      %2430 = vmatmul.mubr.bf16.gmra.mxu0 %v2320
      %v2431 = vpop.f32.mrf.mxu0
      %v2432 = vadd.f32 0.0, %v2431
      %v2433 = vpop.f32.mrf.mxu0
      %v2434 = vpop.f32.mrf.mxu0
      %v2435 = vadd.f32 0.0, %v2434
      %v2436 = vpop.f32.mrf.mxu0
      %2437 = vdwg.mxu0
      %v2439 = vlaneseq
      %v2440 = vshrl.u32 %v2439, 7
      %v2441 = vsub.s32 0, %v2440
      %v2442 = vrot.slane %v2292, %v2441
      %v2444 = vadd.f32 %v2442, %v2408
      %v2445 = vadd.f32 %v2442, %v2411
      %v2446 = vadd.f32 %v2442, %v2416
      %v2447 = vadd.f32 %v2442, %v2419
      %v2448 = vadd.f32 %v2442, %v2424
      %v2449 = vadd.f32 %v2442, %v2427
      %v2450 = vadd.f32 %v2442, %v2432
      %v2451 = vadd.f32 %v2442, %v2435
      %v2452 = vld [vmem:[%s283] sm:$0xf]
      %v2453 = vld [vmem:[%s283 + $0x4] sm:$0xf]
      %v2454 = vld [vmem:[%s283 + $0x8] sm:$0xf]
      %v2455 = vld [vmem:[%s283 + $0xc] sm:$0xf]
      %v2456 = vld [vmem:[%s283 + $0x10] sm:$0xf]
      %v2457 = vld [vmem:[%s283 + $0x14] sm:$0xf]
      %v2458 = vld [vmem:[%s283 + $0x18] sm:$0xf]
      %v2459 = vld [vmem:[%s283 + $0x1c] sm:$0xf]
      %v2468 = vunpack.c.l.b16 %v2452
      %v2469 = vunpack.c.l.b16 %v2453
      %v2470 = vunpack.c.l.b16 %v2454
      %v2471 = vunpack.c.l.b16 %v2455
      %v2472 = vunpack.c.l.b16 %v2456
      %v2473 = vunpack.c.l.b16 %v2457
      %v2474 = vunpack.c.l.b16 %v2458
      %v2475 = vunpack.c.l.b16 %v2459
      %v2476 = vpack.c.b16 %v2469, %v2468
      %v2477 = vpack.c.b16 %v2471, %v2470
      %v2478 = vpack.c.b16 %v2473, %v2472
      %v2479 = vpack.c.b16 %v2475, %v2474
      %v2500 = vunpack.c.l.b16 %v2259
      %v2501 = vunpack.c.l.b16 %v2260
      %v2502 = vunpack.c.l.b16 %v2261
      %v2503 = vunpack.c.l.b16 %v2262
      %v2504 = vunpack.c.l.b16 %v2263
      %v2505 = vunpack.c.l.b16 %v2264
      %v2506 = vunpack.c.l.b16 %v2265
      %v2507 = vunpack.c.l.b16 %v2266
      %v2508 = vunpack.c.l.b16 %v2267
      %v2509 = vunpack.c.l.b16 %v2268
      %v2510 = vunpack.c.l.b16 %v2269
      %v2511 = vunpack.c.l.b16 %v2270
      %v2512 = vunpack.c.l.b16 %v2271
      %v2513 = vunpack.c.l.b16 %v2272
      %v2514 = vunpack.c.l.b16 %v2273
      %v2515 = vunpack.c.l.b16 %v2274
      %v2516 = vpack.c.b16 %v2501, %v2500
      %v2517 = vpack.c.b16 %v2503, %v2502
      %v2518 = vpack.c.b16 %v2505, %v2504
      %v2519 = vpack.c.b16 %v2507, %v2506
      %v2520 = vpack.c.b16 %v2509, %v2508
      %v2521 = vpack.c.b16 %v2511, %v2510
      %v2522 = vpack.c.b16 %v2513, %v2512
      %v2523 = vpack.c.b16 %v2515, %v2514
      %2532 = vmatprep.subr.bf16.mxu0 0
      %2533 = vmatpush1.bf16.msra.mxu0 %v2523
      %2534 = vmatprep.subr.bf16.mxu0 0
      %2535 = vmatpush1.bf16.msra.mxu0 %v2522
      %2536 = vmatprep.subr.bf16.mxu0 0
      %2537 = vmatpush1.bf16.msra.mxu0 %v2521
      %2538 = vmatprep.subr.bf16.mxu0 0
      %2539 = vmatpush1.bf16.msra.mxu0 %v2520
      %2540 = vmatprep.subr.bf16.mxu0 0
      %2541 = vmatpush1.bf16.msra.mxu0 %v2519
      %2542 = vmatprep.subr.bf16.mxu0 0
      %2543 = vmatpush1.bf16.msra.mxu0 %v2518
      %2544 = vmatprep.subr.bf16.mxu0 0
      %2545 = vmatpush1.bf16.msra.mxu0 %v2517
      %2546 = vmatprep.subr.bf16.mxu0 0
      %2547 = vmatpush1.bf16.msra.mxu0 %v2516
      %2548 = vmatprep.subr.bf16.mxu0 0
      %2549 = vmatpush2.bf16.msra.mxu0 0
      %2550 = vmatprep.subr.bf16.mxu0 0
      %2551 = vmatpush2.bf16.msra.mxu0 0
      %2552 = vmatprep.subr.bf16.mxu0 0
      %2553 = vmatpush2.bf16.msra.mxu0 0
      %2554 = vmatprep.subr.bf16.mxu0 0
      %2555 = vmatpush2.bf16.msra.mxu0 0
      %2556 = vmatprep.subr.bf16.mxu0 0
      %2557 = vmatpush2.bf16.msra.mxu0 0
      %2558 = vmatprep.subr.bf16.mxu0 0
      %2559 = vmatpush2.bf16.msra.mxu0 0
      %2560 = vmatprep.subr.bf16.mxu0 0
      %2561 = vmatpush2.bf16.msra.mxu0 0
      %2562 = vmatprep.subr.bf16.mxu0 0
      %2563 = vmatpush2.bf16.msra.mxu0 0
      %2564 = vmatprep.mubr.bf16.mxu0 0
      %2565 = vmatmul.mubr.bf16.gmra.mxu0 %v2476
      %v2566 = vpop.f32.mrf.mxu0
      %v2567 = vadd.f32 0.0, %v2566
      %v2568 = vpop.f32.mrf.mxu0
      %v2569 = vpop.f32.mrf.mxu0
      %v2570 = vadd.f32 0.0, %v2569
      %v2571 = vpop.f32.mrf.mxu0
      %2572 = vmatprep.mubr.bf16.mxu0 0
      %2573 = vmatmul.mubr.bf16.gmra.mxu0 %v2477
      %v2574 = vpop.f32.mrf.mxu0
      %v2575 = vadd.f32 0.0, %v2574
      %v2576 = vpop.f32.mrf.mxu0
      %v2577 = vpop.f32.mrf.mxu0
      %v2578 = vadd.f32 0.0, %v2577
      %v2579 = vpop.f32.mrf.mxu0
      %2580 = vmatprep.mubr.bf16.mxu0 0
      %2581 = vmatmul.mubr.bf16.gmra.mxu0 %v2478
      %v2582 = vpop.f32.mrf.mxu0
      %v2583 = vadd.f32 0.0, %v2582
      %v2584 = vpop.f32.mrf.mxu0
      %v2585 = vpop.f32.mrf.mxu0
      %v2586 = vadd.f32 0.0, %v2585
      %v2587 = vpop.f32.mrf.mxu0
      %2588 = vmatprep.mubr.bf16.mxu0 0
      %2589 = vmatmul.mubr.bf16.gmra.mxu0 %v2479
      %v2590 = vpop.f32.mrf.mxu0
      %v2591 = vadd.f32 0.0, %v2590
      %v2592 = vpop.f32.mrf.mxu0
      %v2593 = vpop.f32.mrf.mxu0
      %v2594 = vadd.f32 0.0, %v2593
      %v2595 = vpop.f32.mrf.mxu0
      %2596 = vdwg.mxu0
      %v2597 = vadd.f32 %v2444, %v2567
      %v2598 = vadd.f32 %v2445, %v2570
      %v2599 = vadd.f32 %v2446, %v2575
      %v2600 = vadd.f32 %v2447, %v2578
      %v2601 = vadd.f32 %v2448, %v2583
      %v2602 = vadd.f32 %v2449, %v2586
      %v2603 = vadd.f32 %v2450, %v2591
      %v2604 = vadd.f32 %v2451, %v2594
      %s2605 = scalar_lea.vmem [#allocation2], 8
      %v2606 = vld [vmem:[%s2605] sm:$0xf]
      %v2607 = vld [vmem:[%s2605 + $0x4] sm:$0xf]
      %v2608 = vld [vmem:[%s2605 + $0x8] sm:$0xf]
      %v2609 = vld [vmem:[%s2605 + $0xc] sm:$0xf]
      %v2610 = vld [vmem:[%s2605 + $0x10] sm:$0xf]
      %v2611 = vld [vmem:[%s2605 + $0x14] sm:$0xf]
      %v2612 = vld [vmem:[%s2605 + $0x18] sm:$0xf]
      %v2613 = vld [vmem:[%s2605 + $0x1c] sm:$0xf]
      %v2622 = vunpack.c.l.b16 %v2606
      %v2623 = vunpack.c.l.b16 %v2607
      %v2624 = vunpack.c.l.b16 %v2608
      %v2625 = vunpack.c.l.b16 %v2609
      %v2626 = vunpack.c.l.b16 %v2610
      %v2627 = vunpack.c.l.b16 %v2611
      %v2628 = vunpack.c.l.b16 %v2612
      %v2629 = vunpack.c.l.b16 %v2613
      %v2630 = vpack.c.b16 %v2623, %v2622
      %v2631 = vpack.c.b16 %v2625, %v2624
      %v2632 = vpack.c.b16 %v2627, %v2626
      %v2633 = vpack.c.b16 %v2629, %v2628
      %v2654 = vunpack.c.l.b16 %v2275
      %v2655 = vunpack.c.l.b16 %v2276
      %v2656 = vunpack.c.l.b16 %v2277
      %v2657 = vunpack.c.l.b16 %v2278
      %v2658 = vunpack.c.l.b16 %v2279
      %v2659 = vunpack.c.l.b16 %v2280
      %v2660 = vunpack.c.l.b16 %v2281
      %v2661 = vunpack.c.l.b16 %v2282
      %v2662 = vunpack.c.l.b16 %v2283
      %v2663 = vunpack.c.l.b16 %v2284
      %v2664 = vunpack.c.l.b16 %v2285
      %v2665 = vunpack.c.l.b16 %v2286
      %v2666 = vunpack.c.l.b16 %v2287
      %v2667 = vunpack.c.l.b16 %v2288
      %v2668 = vunpack.c.l.b16 %v2289
      %v2669 = vunpack.c.l.b16 %v2290
      %v2670 = vpack.c.b16 %v2655, %v2654
      %v2671 = vpack.c.b16 %v2657, %v2656
      %v2672 = vpack.c.b16 %v2659, %v2658
      %v2673 = vpack.c.b16 %v2661, %v2660
      %v2674 = vpack.c.b16 %v2663, %v2662
      %v2675 = vpack.c.b16 %v2665, %v2664
      %v2676 = vpack.c.b16 %v2667, %v2666
      %v2677 = vpack.c.b16 %v2669, %v2668
      %2686 = vmatprep.subr.bf16.mxu0 0
      %2687 = vmatpush1.bf16.msra.mxu0 %v2677
      %2688 = vmatprep.subr.bf16.mxu0 0
      %2689 = vmatpush1.bf16.msra.mxu0 %v2676
      %2690 = vmatprep.subr.bf16.mxu0 0
      %2691 = vmatpush1.bf16.msra.mxu0 %v2675
      %2692 = vmatprep.subr.bf16.mxu0 0
      %2693 = vmatpush1.bf16.msra.mxu0 %v2674
      %2694 = vmatprep.subr.bf16.mxu0 0
      %2695 = vmatpush1.bf16.msra.mxu0 %v2673
      %2696 = vmatprep.subr.bf16.mxu0 0
      %2697 = vmatpush1.bf16.msra.mxu0 %v2672
      %2698 = vmatprep.subr.bf16.mxu0 0
      %2699 = vmatpush1.bf16.msra.mxu0 %v2671
      %2700 = vmatprep.subr.bf16.mxu0 0
      %2701 = vmatpush1.bf16.msra.mxu0 %v2670
      %2702 = vmatprep.subr.bf16.mxu0 0
      %2703 = vmatpush2.bf16.msra.mxu0 0
      %2704 = vmatprep.subr.bf16.mxu0 0
      %2705 = vmatpush2.bf16.msra.mxu0 0
      %2706 = vmatprep.subr.bf16.mxu0 0
      %2707 = vmatpush2.bf16.msra.mxu0 0
      %2708 = vmatprep.subr.bf16.mxu0 0
      %2709 = vmatpush2.bf16.msra.mxu0 0
      %2710 = vmatprep.subr.bf16.mxu0 0
      %2711 = vmatpush2.bf16.msra.mxu0 0
      %2712 = vmatprep.subr.bf16.mxu0 0
      %2713 = vmatpush2.bf16.msra.mxu0 0
      %2714 = vmatprep.subr.bf16.mxu0 0
      %2715 = vmatpush2.bf16.msra.mxu0 0
      %2716 = vmatprep.subr.bf16.mxu0 0
      %2717 = vmatpush2.bf16.msra.mxu0 0
      %2718 = vmatprep.mubr.bf16.mxu0 0
      %2719 = vmatmul.mubr.bf16.gmra.mxu0 %v2630
      %v2720 = vpop.f32.mrf.mxu0
      %v2721 = vadd.f32 0.0, %v2720
      %v2722 = vpop.f32.mrf.mxu0
      %v2723 = vpop.f32.mrf.mxu0
      %v2724 = vadd.f32 0.0, %v2723
      %v2725 = vpop.f32.mrf.mxu0
      %2726 = vmatprep.mubr.bf16.mxu0 0
      %2727 = vmatmul.mubr.bf16.gmra.mxu0 %v2631
      %v2728 = vpop.f32.mrf.mxu0
      %v2729 = vadd.f32 0.0, %v2728
      %v2730 = vpop.f32.mrf.mxu0
      %v2731 = vpop.f32.mrf.mxu0
      %v2732 = vadd.f32 0.0, %v2731
      %v2733 = vpop.f32.mrf.mxu0
      %2734 = vmatprep.mubr.bf16.mxu0 0
      %2735 = vmatmul.mubr.bf16.gmra.mxu0 %v2632
      %v2736 = vpop.f32.mrf.mxu0
      %v2737 = vadd.f32 0.0, %v2736
      %v2738 = vpop.f32.mrf.mxu0
      %v2739 = vpop.f32.mrf.mxu0
      %v2740 = vadd.f32 0.0, %v2739
      %v2741 = vpop.f32.mrf.mxu0
      %2742 = vmatprep.mubr.bf16.mxu0 0
      %2743 = vmatmul.mubr.bf16.gmra.mxu0 %v2633
      %v2744 = vpop.f32.mrf.mxu0
      %v2745 = vadd.f32 0.0, %v2744
      %v2746 = vpop.f32.mrf.mxu0
      %v2747 = vpop.f32.mrf.mxu0
      %v2748 = vadd.f32 0.0, %v2747
      %v2749 = vpop.f32.mrf.mxu0
      %2750 = vdwg.mxu0
      %v2751 = vadd.f32 %v2597, %v2721
      %v2752 = vadd.f32 %v2598, %v2724
      %v2753 = vadd.f32 %v2599, %v2729
      %v2754 = vadd.f32 %v2600, %v2732
      %v2755 = vadd.f32 %v2601, %v2737
      %v2756 = vadd.f32 %v2602, %v2740
      %v2757 = vadd.f32 %v2603, %v2745
      %v2758 = vadd.f32 %v2604, %v2748
      %v2759 = vadd.f32 %v2751, %v479
      %v2760 = vadd.f32 %v2752, %v480
      %v2761 = vadd.f32 %v2753, %v481
      %v2762 = vadd.f32 %v2754, %v482
      %v2763 = vadd.f32 %v2755, %v483
      %v2764 = vadd.f32 %v2756, %v484
      %v2765 = vadd.f32 %v2757, %v485
      %v2766 = vadd.f32 %v2758, %v486
      %v2767 = vld [vmem:[%s6] sm:$0x3]
      %v2768 = vpack.c.bf16 %v2760, %v2759
      %v2769 = vpack.c.bf16 %v2762, %v2761
      %v2770 = vpack.c.bf16 %v2764, %v2763
      %v2771 = vpack.c.bf16 %v2766, %v2765
      %v2772 = vld [vmem:[%s5] sm:$0xff]
      %v2773 = vld [vmem:[%s5 + $0x8] sm:$0xff]
      %v2774 = vld [vmem:[%s5 + $0x10] sm:$0xff]
      %v2775 = vld [vmem:[%s5 + $0x18] sm:$0xff]
      %v2780 = vunpack.c.l.b16 %v2772
      %v2781 = vunpack.c.h.b16 %v2772
      %v2782 = vunpack.c.l.b16 %v2773
      %v2783 = vunpack.c.h.b16 %v2773
      %v2784 = vunpack.c.l.b16 %v2774
      %v2785 = vunpack.c.h.b16 %v2774
      %v2786 = vunpack.c.l.b16 %v2775
      %v2787 = vunpack.c.h.b16 %v2775
      %v2788 = vpack.c.b16 %v2782, %v2780
      %v2789 = vpack.c.b16 %v2783, %v2781
      %v2790 = vpack.c.b16 %v2786, %v2784
      %v2791 = vpack.c.b16 %v2787, %v2785
      %vm2796 = vcmask 261120
      %v2798 = vsel %vm2796, %v2768, 0
      %v2801 = vsel %vm2796, %v2769, 0
      %v2804 = vsel %vm2796, %v2770, 0
      %v2807 = vsel %vm2796, %v2771, 0
      %2809 = vmatprep.subr.bf16.mxu0 0
      %2810 = vmatpush1.bf16.msra.mxu0 0
      %2811 = vmatprep.subr.bf16.mxu0 0
      %2812 = vmatpush1.bf16.msra.mxu0 0
      %2813 = vmatprep.subr.bf16.mxu0 0
      %2814 = vmatpush1.bf16.msra.mxu0 0
      %2815 = vmatprep.subr.bf16.mxu0 0
      %2816 = vmatpush1.bf16.msra.mxu0 0
      %2817 = vmatprep.subr.bf16.mxu0 0
      %2818 = vmatpush1.bf16.msra.mxu0 0
      %2819 = vmatprep.subr.bf16.mxu0 0
      %2820 = vmatpush1.bf16.msra.mxu0 0
      %2821 = vmatprep.subr.bf16.mxu0 %v2791
      %2822 = vmatpush1.bf16.msra.mxu0 %v2790
      %2823 = vmatprep.subr.bf16.mxu0 %v2789
      %2824 = vmatpush1.bf16.msra.mxu0 %v2788
      %2825 = vmatprep.subr.bf16.mxu0 0
      %2826 = vmatpush2.bf16.msra.mxu0 0
      %2827 = vmatprep.subr.bf16.mxu0 0
      %2828 = vmatpush2.bf16.msra.mxu0 0
      %2829 = vmatprep.subr.bf16.mxu0 0
      %2830 = vmatpush2.bf16.msra.mxu0 0
      %2831 = vmatprep.subr.bf16.mxu0 0
      %2832 = vmatpush2.bf16.msra.mxu0 0
      %2833 = vmatprep.subr.bf16.mxu0 0
      %2834 = vmatpush2.bf16.msra.mxu0 0
      %2835 = vmatprep.subr.bf16.mxu0 0
      %2836 = vmatpush2.bf16.msra.mxu0 0
      %2837 = vmatprep.subr.bf16.mxu0 0
      %2838 = vmatpush2.bf16.msra.mxu0 0
      %2839 = vmatprep.subr.bf16.mxu0 0
      %2840 = vmatpush2.bf16.msra.mxu0 0
      %2841 = vmatprep.mubr.bf16.mxu0 0
      %2842 = vmatmul.mubr.bf16.gmra.mxu0 %v2798
      %v2843 = vpop.f32.mrf.mxu0
      %v2844 = vadd.f32 0.0, %v2843
      %v2845 = vpop.f32.mrf.mxu0
      %v2846 = vadd.f32 0.0, %v2845
      %v2847 = vpop.f32.mrf.mxu0
      %v2848 = vadd.f32 0.0, %v2847
      %v2849 = vpop.f32.mrf.mxu0
      %v2850 = vadd.f32 0.0, %v2849
      %2851 = vmatprep.mubr.bf16.mxu0 0
      %2852 = vmatmul.mubr.bf16.gmra.mxu0 %v2801
      %v2853 = vpop.f32.mrf.mxu0
      %v2854 = vadd.f32 0.0, %v2853
      %v2855 = vpop.f32.mrf.mxu0
      %v2856 = vadd.f32 0.0, %v2855
      %v2857 = vpop.f32.mrf.mxu0
      %v2858 = vadd.f32 0.0, %v2857
      %v2859 = vpop.f32.mrf.mxu0
      %v2860 = vadd.f32 0.0, %v2859
      %2861 = vmatprep.mubr.bf16.mxu0 0
      %2862 = vmatmul.mubr.bf16.gmra.mxu0 %v2804
      %v2863 = vpop.f32.mrf.mxu0
      %v2864 = vadd.f32 0.0, %v2863
      %v2865 = vpop.f32.mrf.mxu0
      %v2866 = vadd.f32 0.0, %v2865
      %v2867 = vpop.f32.mrf.mxu0
      %v2868 = vadd.f32 0.0, %v2867
      %v2869 = vpop.f32.mrf.mxu0
      %v2870 = vadd.f32 0.0, %v2869
      %2871 = vmatprep.mubr.bf16.mxu0 0
      %2872 = vmatmul.mubr.bf16.gmra.mxu0 %v2807
      %v2873 = vpop.f32.mrf.mxu0
      %v2874 = vadd.f32 0.0, %v2873
      %v2875 = vpop.f32.mrf.mxu0
      %v2876 = vadd.f32 0.0, %v2875
      %v2877 = vpop.f32.mrf.mxu0
      %v2878 = vadd.f32 0.0, %v2877
      %v2879 = vpop.f32.mrf.mxu0
      %v2880 = vadd.f32 0.0, %v2879
      %2881 = vdwg.mxu0
      %v2883 = vlaneseq
      %v2884 = vshrl.u32 %v2883, 7
      %v2885 = vsub.s32 0, %v2884
      %v2886 = vrot.slane %v2767, %v2885
      %v2887 = vlaneseq
      %v2888 = vshrl.u32 %v2887, 7
      %v2889 = vsub.s32 1, %v2888
      %v2890 = vrot.slane %v2767, %v2889
      %v2893 = vadd.f32 %v2886, %v2844
      %v2894 = vadd.f32 %v2890, %v2846
      %v2895 = vadd.f32 %v2886, %v2848
      %v2896 = vadd.f32 %v2890, %v2850
      %v2897 = vadd.f32 %v2886, %v2854
      %v2898 = vadd.f32 %v2890, %v2856
      %v2899 = vadd.f32 %v2886, %v2858
      %v2900 = vadd.f32 %v2890, %v2860
      %v2901 = vadd.f32 %v2886, %v2864
      %v2902 = vadd.f32 %v2890, %v2866
      %v2903 = vadd.f32 %v2886, %v2868
      %v2904 = vadd.f32 %v2890, %v2870
      %v2905 = vadd.f32 %v2886, %v2874
      %v2906 = vadd.f32 %v2890, %v2876
      %v2907 = vadd.f32 %v2886, %v2878
      %v2908 = vadd.f32 %v2890, %v2880
      %v2909 = vmax.f32 %v2893, 0.0
      %v2910 = vmax.f32 %v2894, 0.0
      %v2911 = vmax.f32 %v2895, 0.0
      %v2912 = vmax.f32 %v2896, 0.0
      %v2913 = vmax.f32 %v2897, 0.0
      %v2914 = vmax.f32 %v2898, 0.0
      %v2915 = vmax.f32 %v2899, 0.0
      %v2916 = vmax.f32 %v2900, 0.0
      %v2917 = vmax.f32 %v2901, 0.0
      %v2918 = vmax.f32 %v2902, 0.0
      %v2919 = vmax.f32 %v2903, 0.0
      %v2920 = vmax.f32 %v2904, 0.0
      %v2921 = vmax.f32 %v2905, 0.0
      %v2922 = vmax.f32 %v2906, 0.0
      %v2923 = vmax.f32 %v2907, 0.0
      %v2924 = vmax.f32 %v2908, 0.0
      %v2925 = vpack.c.bf16 %v2911, %v2909
      %v2926 = vpack.c.bf16 %v2912, %v2910
      %v2927 = vpack.c.bf16 %v2915, %v2913
      %v2928 = vpack.c.bf16 %v2916, %v2914
      %v2929 = vpack.c.bf16 %v2919, %v2917
      %v2930 = vpack.c.bf16 %v2920, %v2918
      %v2931 = vpack.c.bf16 %v2923, %v2921
      %v2932 = vpack.c.bf16 %v2924, %v2922
      %v2941 = vunpack.c.l.b16 %v2925
      %v2942 = vunpack.c.l.b16 %v2926
      %v2943 = vunpack.c.h.b16 %v2925
      %v2944 = vunpack.c.h.b16 %v2926
      %v2945 = vunpack.c.l.b16 %v2927
      %v2946 = vunpack.c.l.b16 %v2928
      %v2947 = vunpack.c.h.b16 %v2927
      %v2948 = vunpack.c.h.b16 %v2928
      %v2949 = vunpack.c.l.b16 %v2929
      %v2950 = vunpack.c.l.b16 %v2930
      %v2951 = vunpack.c.h.b16 %v2929
      %v2952 = vunpack.c.h.b16 %v2930
      %v2953 = vunpack.c.l.b16 %v2931
      %v2954 = vunpack.c.l.b16 %v2932
      %v2955 = vunpack.c.h.b16 %v2931
      %v2956 = vunpack.c.h.b16 %v2932
      %v2957 = vpack.c.b16 %v2942, %v2941
      %v2958 = vpack.c.b16 %v2944, %v2943
      %v2959 = vpack.c.b16 %v2946, %v2945
      %v2960 = vpack.c.b16 %v2948, %v2947
      %v2961 = vpack.c.b16 %v2950, %v2949
      %v2962 = vpack.c.b16 %v2952, %v2951
      %v2963 = vpack.c.b16 %v2954, %v2953
      %v2964 = vpack.c.b16 %v2956, %v2955
      %2973 = vst [vmem:[%s278] sm:$0xff] %v2957
      %2974 = vst [vmem:[%s278 + $0x8] sm:$0xff] %v2958
      %2975 = vst [vmem:[%s278 + $0x10] sm:$0xff] %v2959
      %2976 = vst [vmem:[%s278 + $0x18] sm:$0xff] %v2960
      %2977 = vst [vmem:[%s278 + $0x20] sm:$0xff] %v2961
      %2978 = vst [vmem:[%s278 + $0x28] sm:$0xff] %v2962
      %2979 = vst [vmem:[%s278 + $0x30] sm:$0xff] %v2963
      %2980 = vst [vmem:[%s278 + $0x38] sm:$0xff] %v2964
      %p2981 = scmp.lt.s32.totalorder %s18, 1
      %s2982 = scalar_select %p2981, %s18, 1
      %s2983 = smul.addr %s2982, 16
      %s2984 = smul.addr %s2983, 4
      %s2985 = scalar_lea.vmem %s7, %s2984
      // Predicated region
      $region56: #{estnet_forward_pallas.2} parent=47 // pred_check
        %p2986 = pneg %p188
      $region57: #{estnet_forward_pallas.2} parent=47 // pred_check_branch
        %2988 = sbr.rel (%p2986) target = $region59
      $region58: #{estnet_forward_pallas.2} parent=47 // pred_region
        _
      $region59: #{estnet_forward_pallas.2} parent=47 // pred_fallthru
        _
    $region48: #{estnet_forward_pallas.2} parent=5 // pred_fallthru
      _
    %p2989 = scmp.le.s32.totalorder 2, %s13
    // Predicated region
    $region60: #{estnet_forward_pallas.2} parent=5 // pred_check
      %p2990 = pneg %p2989
    $region61: #{estnet_forward_pallas.2} parent=5 // pred_check_branch
      %2992 = sbr.rel (%p2990) target = $region63
    $region62: #{estnet_forward_pallas.2} parent=5 // pred_region
      %s2993 = ssub.s32 %s13, 2
      // Predicated region
      $region64: #{estnet_forward_pallas.2} parent=62 // pred_check
        %p2994 = pneg %p194
      $region65: #{estnet_forward_pallas.2} parent=62 // pred_check_branch
        %2996 = sbr.rel (%p2994) target = $region67
      $region66: #{estnet_forward_pallas.2} parent=62 // pred_region
        %p2997 = scmp.lt.s32.totalorder %s19, 1
        %s2998 = scalar_select %p2997, %s19, 1
        %s2999 = smul.addr %s2998, 16
        %s3000 = smul.addr %s2999, 4
        %s3001 = scalar_lea.vmem %s7, %s3000
      $region67: #{estnet_forward_pallas.2} parent=62 // pred_fallthru
        _
    $region63: #{estnet_forward_pallas.2} parent=5 // pred_fallthru
      _
  $region6: #{estnet_forward_pallas.2} parent=0 // loop_footer
    %s17 = sadd.s32 1, %s13
  $region7: #{estnet_forward_pallas.2} parent=0 // loop_footer_branch
    %12 = sbr.rel target = $region3
  $region8: #{estnet_forward_pallas.2} parent=0 // loop_exit
    _

// kernel: estnet_forward_pallas.3
$region0: #{estnet_forward_pallas.3}
  #allocation0 [shape = 'u32[]', space=smem, size = 0x4, offset = 0x4, fixed_abs, tag = 'smem constant byte address 0x4 - core index']
  #allocation1 [shape = 'u32[144,128]{1,0:T(1,128)}', space=vmem, size = 0x12000, scoped, tag = 'internal scratch']
  #allocation2 [shape = 'bf16[18,16,256]{2,1,0:T(8,128)(2,1)}', space=vmem, size = 0x24000, scoped, tag = 'scratch operand']
  %s0 = inlined_call_operand.vmem [shape: bf16[2,16,16,64], index: 0, kind: input, shape index: {}]
  %s1 = inlined_call_operand.vmem [shape: bf16[3,256,6], index: 1, kind: input, shape index: {}]
  %s2 = inlined_call_operand.vmem [shape: f32[1,6], index: 2, kind: input, shape index: {}]
  %s3 = inlined_call_operand.vmem [shape: f32[2,256,6], index: 3, kind: output, shape index: {}]
  %s4 = sld [smem:[#allocation0]]
  $region45: #{estnet_forward_pallas.3} parent=0
    _
  %s6 = ssub.s32 1, %s4
  %s7 = scalar_select 0, %s6, %s4
  loop: start=0, step=1, limit=4
  $region2: #{estnet_forward_pallas.3} parent=0 // loop_pre_header
    _
  $region3: #{estnet_forward_pallas.3} parent=0 // loop_header
    %s9 = sphi 0, %s13
    %p10 = scmp.ge.s32.totalorder %s9, 4
    %s19 = sphi 0, %s21
    %s22 = sphi 0, %s19
    %s23 = sphi 0, %s22
    %s39 = sphi 0, %s23
    %s43 = sphi 0, %s43
    %s45 = sphi 0, %s43
    %s46 = sphi 0, %s45
    %s60 = sphi 0, %s46
    %s64 = sphi 0, %s64
    %s66 = sphi 0, %s64
    %s67 = sphi 0, %s66
    %s81 = sphi 0, %s67
    %s87 = sphi 0, %s89
    %s90 = sphi 0, %s87
    %s91 = sphi 0, %s90
    %s107 = sphi 0, %s91
  $region4: #{estnet_forward_pallas.3} parent=0 // loop_header_branch
    %12 = sbr.rel (%p10) target = $region8
  $region5: #{estnet_forward_pallas.3} parent=0 // loop_body
    %s14 = ssub.s32 %s9, 1
    %s15 = ssub.s32 %s9, 2
    %s16 = sadd.s32 %s9, 1
    %s17 = ssub.s32 %s9, %s16
    %p18 = scmp.eq.s32.totalorder %s17, 0
    %s20 = sadd.s32 %s19, 1
    %s21 = scalar_select %p18, %s19, %s20
    %p24 = pneg %p18
    %p25 = scmp.eq.s32.totalorder %s9, 1
    %p26 = por %p24, %p25
    %p27 = scmp.ne.s32.totalorder %s19, %s22
    %p28 = scmp.eq.s32.totalorder %s9, 0
    %p29 = por %p27, %p28
    %p30 = scmp.ne.s32.totalorder %s19, %s22
    %p31 = scmp.eq.s32.totalorder %s14, 1
    %p32 = por %p30, %p31
    %p33 = scmp.ne.s32.totalorder %s22, %s23
    %p34 = scmp.eq.s32.totalorder %s14, 0
    %p35 = por %p33, %p34
    %p36 = scmp.ne.s32.totalorder %s22, %s23
    %p37 = scmp.eq.s32.totalorder %s15, 1
    %p38 = por %p36, %p37
    %p40 = scmp.ne.s32.totalorder %s23, %s39
    %p41 = scmp.eq.s32.totalorder %s15, 0
    %p42 = por %p40, %p41
    %s44 = sadd.s32 %s43, 1
    %p47 = scmp.eq.s32.totalorder %s9, 1
    %p48 = scmp.ne.s32.totalorder %s43, %s45
    %p49 = scmp.eq.s32.totalorder %s9, 0
    %p50 = por %p48, %p49
    %p51 = scmp.ne.s32.totalorder %s43, %s45
    %p52 = scmp.eq.s32.totalorder %s14, 1
    %p53 = por %p51, %p52
    %p54 = scmp.ne.s32.totalorder %s45, %s46
    %p55 = scmp.eq.s32.totalorder %s14, 0
    %p56 = por %p54, %p55
    %p57 = scmp.ne.s32.totalorder %s45, %s46
    %p58 = scmp.eq.s32.totalorder %s15, 1
    %p59 = por %p57, %p58
    %p61 = scmp.ne.s32.totalorder %s46, %s60
    %p62 = scmp.eq.s32.totalorder %s15, 0
    %p63 = por %p61, %p62
    %s65 = sadd.s32 %s64, 1
    %p68 = scmp.eq.s32.totalorder %s9, 1
    %p69 = scmp.ne.s32.totalorder %s64, %s66
    %p70 = scmp.eq.s32.totalorder %s9, 0
    %p71 = por %p69, %p70
    %p72 = scmp.ne.s32.totalorder %s64, %s66
    %p73 = scmp.eq.s32.totalorder %s14, 1
    %p74 = por %p72, %p73
    %p75 = scmp.ne.s32.totalorder %s66, %s67
    %p76 = scmp.eq.s32.totalorder %s14, 0
    %p77 = por %p75, %p76
    %p78 = scmp.ne.s32.totalorder %s66, %s67
    %p79 = scmp.eq.s32.totalorder %s15, 1
    %p80 = por %p78, %p79
    %p82 = scmp.ne.s32.totalorder %s67, %s81
    %p83 = scmp.eq.s32.totalorder %s15, 0
    %p84 = por %p82, %p83
    %s85 = ssub.s32 %s9, %s16
    %p86 = scmp.eq.s32.totalorder %s85, 0
    %s88 = sadd.s32 %s87, 1
    %s89 = scalar_select %p86, %s87, %s88
    %p92 = pneg %p86
    %p93 = scmp.eq.s32.totalorder %s9, 1
    %p94 = por %p92, %p93
    %p95 = scmp.ne.s32.totalorder %s87, %s90
    %p96 = scmp.eq.s32.totalorder %s9, 0
    %p97 = por %p95, %p96
    %p98 = scmp.ne.s32.totalorder %s87, %s90
    %p99 = scmp.eq.s32.totalorder %s14, 1
    %p100 = por %p98, %p99
    %p101 = scmp.ne.s32.totalorder %s90, %s91
    %p102 = scmp.eq.s32.totalorder %s14, 0
    %p103 = por %p101, %p102
    %p104 = scmp.ne.s32.totalorder %s90, %s91
    %p105 = scmp.eq.s32.totalorder %s15, 1
    %p106 = por %p104, %p105
    %p108 = scmp.ne.s32.totalorder %s91, %s107
    %p109 = scmp.eq.s32.totalorder %s15, 0
    %p110 = por %p108, %p109
    %p111 = scmp.le.s32.totalorder 1, %s9
    %p112 = scmp.lt.s32.totalorder %s9, 3
    %p113 = pnand %p111, %p112
    %p114 = pneg %p113
    // Predicated region
    $region9: #{estnet_forward_pallas.3} parent=5 // pred_check
      _
    $region10: #{estnet_forward_pallas.3} parent=5 // pred_check_branch
      %116 = sbr.rel (%p113) target = $region12
    $region11: #{estnet_forward_pallas.3} parent=5 // pred_region
      %s117 = ssub.s32 %s9, 1
      // Predicated region
      $region13: #{estnet_forward_pallas.3} parent=11 // pred_check
        %p118 = pneg %p56
      $region14: #{estnet_forward_pallas.3} parent=11 // pred_check_branch
        %120 = sbr.rel (%p118) target = $region16
      $region15: #{estnet_forward_pallas.3} parent=11 // pred_region
        _
      $region16: #{estnet_forward_pallas.3} parent=11 // pred_fallthru
        _
      // Predicated region
      $region17: #{estnet_forward_pallas.3} parent=11 // pred_check
        %p121 = pneg %p77
      $region18: #{estnet_forward_pallas.3} parent=11 // pred_check_branch
        %123 = sbr.rel (%p121) target = $region20
      $region19: #{estnet_forward_pallas.3} parent=11 // pred_region
        _
      $region20: #{estnet_forward_pallas.3} parent=11 // pred_fallthru
        _
    $region12: #{estnet_forward_pallas.3} parent=5 // pred_fallthru
      _
    %p124 = scmp.lt.s32.totalorder %s9, 2
    // Predicated region
    $region21: #{estnet_forward_pallas.3} parent=5 // pred_check
      %p125 = pneg %p124
    $region22: #{estnet_forward_pallas.3} parent=5 // pred_check_branch
      %127 = sbr.rel (%p125) target = $region24
    $region23: #{estnet_forward_pallas.3} parent=5 // pred_region
      // Predicated region
      $region25: #{estnet_forward_pallas.3} parent=23 // pred_check
        %p128 = pneg %p29
      $region26: #{estnet_forward_pallas.3} parent=23 // pred_check_branch
        %130 = sbr.rel (%p128) target = $region28
      $region27: #{estnet_forward_pallas.3} parent=23 // pred_region
        %p131 = scmp.lt.s32.totalorder %s9, 1
        %s132 = scalar_select %p131, %s9, 1
        %s133 = smul.addr %s132, 32
        %s134 = smul.addr %s133, 4
        %s135 = scalar_lea.vmem %s0, %s134
      $region28: #{estnet_forward_pallas.3} parent=23 // pred_fallthru
        _
    $region24: #{estnet_forward_pallas.3} parent=5 // pred_fallthru
      _
    %p136 = scmp.le.s32.totalorder 1, %s9
    %p137 = scmp.lt.s32.totalorder %s9, 3
    %p138 = pnand %p136, %p137
    %p139 = pneg %p138
    // Predicated region
    $region29: #{estnet_forward_pallas.3} parent=5 // pred_check
      _
    $region30: #{estnet_forward_pallas.3} parent=5 // pred_check_branch
      %141 = sbr.rel (%p138) target = $region32
    $region31: #{estnet_forward_pallas.3} parent=5 // pred_region
      %s142 = ssub.s32 %s9, 1
      %p143 = scmp.lt.s32.totalorder %s14, 1
      %s144 = scalar_select %p143, %s14, 1
      %s145 = smul.addr %s144, 32
      %s146 = smul.addr %s145, 4
      %s147 = scalar_lea.vmem %s0, %s146
      %p148 = pneg %p35
      %p149 = pneg %p32
      %p150 = pneg %p56
      %p151 = pneg %p53
      %p152 = pneg %p77
      %p153 = pneg %p74
      %p154 = pneg %p103
      %p155 = pneg %p100
      %p156 = scmp.lt.s32.totalorder %s14, 1
      %s157 = scalar_select %p156, %s14, 1
      %s158 = smul.addr %s157, 32
      %s159 = smul.addr %s158, 8
      %s160 = scalar_lea.vmem %s3, %s159
      %p161 = scmp.lt.s32.totalorder %s14, 1
      %s162 = scalar_select %p161, %s14, 1
      %s163 = smul.addr %s162, 32
      %s164 = smul.addr %s163, 4
      %s165 = scalar_lea.vmem %s0, %s164
      %p166 = scmp.lt.s32.totalorder %s14, 1
      %s167 = scalar_select %p166, %s14, 1
      %s168 = smul.addr %s167, 32
      %s169 = smul.addr %s168, 8
      %s170 = scalar_lea.vmem %s3, %s169
      %172 = vst [vmem:[#allocation2] sm:$0xff] 0
      %173 = vst [vmem:[#allocation2 + $0x8] sm:$0xff] 0
      %s174 = scalar_lea.vmem [#allocation2], 272
      %175 = vst [vmem:[%s174] sm:$0xff] 0
      %176 = vst [vmem:[%s174 + $0x8] sm:$0xff] 0
      %s177 = scalar_lea.vmem [#allocation2], 16
      %vm178 = vcmask 1043968
      %179 = vst.msk [vmem:[%s177 + $0x4] sm:$0xf] %vm178, 0
      %180 = vst.msk [vmem:[%s177 + $0xc] sm:$0xf] %vm178, 0
      %181 = vst.msk [vmem:[%s177 + $0x14] sm:$0xf] %vm178, 0
      %182 = vst.msk [vmem:[%s177 + $0x1c] sm:$0xf] %vm178, 0
      %183 = vst.msk [vmem:[%s177 + $0x24] sm:$0xf] %vm178, 0
      %184 = vst.msk [vmem:[%s177 + $0x2c] sm:$0xf] %vm178, 0
      %185 = vst.msk [vmem:[%s177 + $0x34] sm:$0xf] %vm178, 0
      %186 = vst.msk [vmem:[%s177 + $0x3c] sm:$0xf] %vm178, 0
      %187 = vst.msk [vmem:[%s177 + $0x44] sm:$0xf] %vm178, 0
      %188 = vst.msk [vmem:[%s177 + $0x4c] sm:$0xf] %vm178, 0
      %189 = vst.msk [vmem:[%s177 + $0x54] sm:$0xf] %vm178, 0
      %190 = vst.msk [vmem:[%s177 + $0x5c] sm:$0xf] %vm178, 0
      %191 = vst.msk [vmem:[%s177 + $0x64] sm:$0xf] %vm178, 0
      %192 = vst.msk [vmem:[%s177 + $0x6c] sm:$0xf] %vm178, 0
      %193 = vst.msk [vmem:[%s177 + $0x74] sm:$0xf] %vm178, 0
      %194 = vst.msk [vmem:[%s177 + $0x7c] sm:$0xf] %vm178, 0
      %195 = vst.msk [vmem:[%s177 + $0x84] sm:$0xf] %vm178, 0
      %196 = vst.msk [vmem:[%s177 + $0x8c] sm:$0xf] %vm178, 0
      %197 = vst.msk [vmem:[%s177 + $0x94] sm:$0xf] %vm178, 0
      %198 = vst.msk [vmem:[%s177 + $0x9c] sm:$0xf] %vm178, 0
      %199 = vst.msk [vmem:[%s177 + $0xa4] sm:$0xf] %vm178, 0
      %200 = vst.msk [vmem:[%s177 + $0xac] sm:$0xf] %vm178, 0
      %201 = vst.msk [vmem:[%s177 + $0xb4] sm:$0xf] %vm178, 0
      %202 = vst.msk [vmem:[%s177 + $0xbc] sm:$0xf] %vm178, 0
      %203 = vst.msk [vmem:[%s177 + $0xc4] sm:$0xf] %vm178, 0
      %204 = vst.msk [vmem:[%s177 + $0xcc] sm:$0xf] %vm178, 0
      %205 = vst.msk [vmem:[%s177 + $0xd4] sm:$0xf] %vm178, 0
      %206 = vst.msk [vmem:[%s177 + $0xdc] sm:$0xf] %vm178, 0
      %207 = vst.msk [vmem:[%s177 + $0xe4] sm:$0xf] %vm178, 0
      %208 = vst.msk [vmem:[%s177 + $0xec] sm:$0xf] %vm178, 0
      %209 = vst.msk [vmem:[%s177 + $0xf4] sm:$0xf] %vm178, 0
      %210 = vst.msk [vmem:[%s177 + $0xfc] sm:$0xf] %vm178, 0
      %vm211 = vcmask 516096
      %vm212 = vsmask.f32 256
      %vm213 = vmand %vm211, %vm212
      %v214 = vld [vmem:[%s177] sm:$0x1]
      %v215 = vsel %vm213, 0, %v214
      %216 = vst [vmem:[%s177] sm:$0x1] %v215
      %v217 = vld [vmem:[%s177 + $0x10] sm:$0x1]
      %v218 = vsel %vm213, 0, %v217
      %219 = vst [vmem:[%s177 + $0x10] sm:$0x1] %v218
      %v220 = vld [vmem:[%s177 + $0x20] sm:$0x1]
      %v221 = vsel %vm213, 0, %v220
      %222 = vst [vmem:[%s177 + $0x20] sm:$0x1] %v221
      %v223 = vld [vmem:[%s177 + $0x30] sm:$0x1]
      %v224 = vsel %vm213, 0, %v223
      %225 = vst [vmem:[%s177 + $0x30] sm:$0x1] %v224
      %v226 = vld [vmem:[%s177 + $0x40] sm:$0x1]
      %v227 = vsel %vm213, 0, %v226
      %228 = vst [vmem:[%s177 + $0x40] sm:$0x1] %v227
      %v229 = vld [vmem:[%s177 + $0x50] sm:$0x1]
      %v230 = vsel %vm213, 0, %v229
      %231 = vst [vmem:[%s177 + $0x50] sm:$0x1] %v230
      %v232 = vld [vmem:[%s177 + $0x60] sm:$0x1]
      %v233 = vsel %vm213, 0, %v232
      %234 = vst [vmem:[%s177 + $0x60] sm:$0x1] %v233
      %v235 = vld [vmem:[%s177 + $0x70] sm:$0x1]
      %v236 = vsel %vm213, 0, %v235
      %237 = vst [vmem:[%s177 + $0x70] sm:$0x1] %v236
      %v238 = vld [vmem:[%s177 + $0x80] sm:$0x1]
      %v239 = vsel %vm213, 0, %v238
      %240 = vst [vmem:[%s177 + $0x80] sm:$0x1] %v239
      %v241 = vld [vmem:[%s177 + $0x90] sm:$0x1]
      %v242 = vsel %vm213, 0, %v241
      %243 = vst [vmem:[%s177 + $0x90] sm:$0x1] %v242
      %v244 = vld [vmem:[%s177 + $0xa0] sm:$0x1]
      %v245 = vsel %vm213, 0, %v244
      %246 = vst [vmem:[%s177 + $0xa0] sm:$0x1] %v245
      %v247 = vld [vmem:[%s177 + $0xb0] sm:$0x1]
      %v248 = vsel %vm213, 0, %v247
      %249 = vst [vmem:[%s177 + $0xb0] sm:$0x1] %v248
      %v250 = vld [vmem:[%s177 + $0xc0] sm:$0x1]
      %v251 = vsel %vm213, 0, %v250
      %252 = vst [vmem:[%s177 + $0xc0] sm:$0x1] %v251
      %v253 = vld [vmem:[%s177 + $0xd0] sm:$0x1]
      %v254 = vsel %vm213, 0, %v253
      %255 = vst [vmem:[%s177 + $0xd0] sm:$0x1] %v254
      %v256 = vld [vmem:[%s177 + $0xe0] sm:$0x1]
      %v257 = vsel %vm213, 0, %v256
      %258 = vst [vmem:[%s177 + $0xe0] sm:$0x1] %v257
      %v259 = vld [vmem:[%s177 + $0xf0] sm:$0x1]
      %v260 = vsel %vm213, 0, %v259
      %261 = vst [vmem:[%s177 + $0xf0] sm:$0x1] %v260
      %vm262 = vcmask 519171
      %vm263 = vsmask.f32 7950
      %vm264 = vmand %vm262, %vm263
      %v265 = vld [vmem:[%s177 + $0xc] sm:$0x8]
      %v266 = vsel %vm264, 0, %v265
      %267 = vst [vmem:[%s177 + $0xc] sm:$0x8] %v266
      %v268 = vld [vmem:[%s177 + $0x1c] sm:$0x8]
      %v269 = vsel %vm264, 0, %v268
      %270 = vst [vmem:[%s177 + $0x1c] sm:$0x8] %v269
      %v271 = vld [vmem:[%s177 + $0x2c] sm:$0x8]
      %v272 = vsel %vm264, 0, %v271
      %273 = vst [vmem:[%s177 + $0x2c] sm:$0x8] %v272
      %v274 = vld [vmem:[%s177 + $0x3c] sm:$0x8]
      %v275 = vsel %vm264, 0, %v274
      %276 = vst [vmem:[%s177 + $0x3c] sm:$0x8] %v275
      %v277 = vld [vmem:[%s177 + $0x4c] sm:$0x8]
      %v278 = vsel %vm264, 0, %v277
      %279 = vst [vmem:[%s177 + $0x4c] sm:$0x8] %v278
      %v280 = vld [vmem:[%s177 + $0x5c] sm:$0x8]
      %v281 = vsel %vm264, 0, %v280
      %282 = vst [vmem:[%s177 + $0x5c] sm:$0x8] %v281
      %v283 = vld [vmem:[%s177 + $0x6c] sm:$0x8]
      %v284 = vsel %vm264, 0, %v283
      %285 = vst [vmem:[%s177 + $0x6c] sm:$0x8] %v284
      %v286 = vld [vmem:[%s177 + $0x7c] sm:$0x8]
      %v287 = vsel %vm264, 0, %v286
      %288 = vst [vmem:[%s177 + $0x7c] sm:$0x8] %v287
      %v289 = vld [vmem:[%s177 + $0x8c] sm:$0x8]
      %v290 = vsel %vm264, 0, %v289
      %291 = vst [vmem:[%s177 + $0x8c] sm:$0x8] %v290
      %v292 = vld [vmem:[%s177 + $0x9c] sm:$0x8]
      %v293 = vsel %vm264, 0, %v292
      %294 = vst [vmem:[%s177 + $0x9c] sm:$0x8] %v293
      %v295 = vld [vmem:[%s177 + $0xac] sm:$0x8]
      %v296 = vsel %vm264, 0, %v295
      %297 = vst [vmem:[%s177 + $0xac] sm:$0x8] %v296
      %v298 = vld [vmem:[%s177 + $0xbc] sm:$0x8]
      %v299 = vsel %vm264, 0, %v298
      %300 = vst [vmem:[%s177 + $0xbc] sm:$0x8] %v299
      %v301 = vld [vmem:[%s177 + $0xcc] sm:$0x8]
      %v302 = vsel %vm264, 0, %v301
      %303 = vst [vmem:[%s177 + $0xcc] sm:$0x8] %v302
      %v304 = vld [vmem:[%s177 + $0xdc] sm:$0x8]
      %v305 = vsel %vm264, 0, %v304
      %306 = vst [vmem:[%s177 + $0xdc] sm:$0x8] %v305
      %v307 = vld [vmem:[%s177 + $0xec] sm:$0x8]
      %v308 = vsel %vm264, 0, %v307
      %309 = vst [vmem:[%s177 + $0xec] sm:$0x8] %v308
      %v310 = vld [vmem:[%s177 + $0xfc] sm:$0x8]
      %v311 = vsel %vm264, 0, %v310
      %312 = vst [vmem:[%s177 + $0xfc] sm:$0x8] %v311
      %v313 = vld [vmem:[%s165] sm:$0xf]
      %v314 = vld [vmem:[%s165 + $0x4] sm:$0xf]
      %v315 = vld [vmem:[%s165 + $0x8] sm:$0xf]
      %v316 = vld [vmem:[%s165 + $0xc] sm:$0xf]
      %v317 = vld [vmem:[%s165 + $0x10] sm:$0xf]
      %v318 = vld [vmem:[%s165 + $0x14] sm:$0xf]
      %v319 = vld [vmem:[%s165 + $0x18] sm:$0xf]
      %v320 = vld [vmem:[%s165 + $0x1c] sm:$0xf]
      %v321 = vld [vmem:[%s165 + $0x20] sm:$0xf]
      %v322 = vld [vmem:[%s165 + $0x24] sm:$0xf]
      %v323 = vld [vmem:[%s165 + $0x28] sm:$0xf]
      %v324 = vld [vmem:[%s165 + $0x2c] sm:$0xf]
      %v325 = vld [vmem:[%s165 + $0x30] sm:$0xf]
      %v326 = vld [vmem:[%s165 + $0x34] sm:$0xf]
      %v327 = vld [vmem:[%s165 + $0x38] sm:$0xf]
      %v328 = vld [vmem:[%s165 + $0x3c] sm:$0xf]
      %v329 = vld [vmem:[%s165 + $0x40] sm:$0xf]
      %v330 = vld [vmem:[%s165 + $0x44] sm:$0xf]
      %v331 = vld [vmem:[%s165 + $0x48] sm:$0xf]
      %v332 = vld [vmem:[%s165 + $0x4c] sm:$0xf]
      %v333 = vld [vmem:[%s165 + $0x50] sm:$0xf]
      %v334 = vld [vmem:[%s165 + $0x54] sm:$0xf]
      %v335 = vld [vmem:[%s165 + $0x58] sm:$0xf]
      %v336 = vld [vmem:[%s165 + $0x5c] sm:$0xf]
      %v337 = vld [vmem:[%s165 + $0x60] sm:$0xf]
      %v338 = vld [vmem:[%s165 + $0x64] sm:$0xf]
      %v339 = vld [vmem:[%s165 + $0x68] sm:$0xf]
      %v340 = vld [vmem:[%s165 + $0x6c] sm:$0xf]
      %v341 = vld [vmem:[%s165 + $0x70] sm:$0xf]
      %v342 = vld [vmem:[%s165 + $0x74] sm:$0xf]
      %v343 = vld [vmem:[%s165 + $0x78] sm:$0xf]
      %v344 = vld [vmem:[%s165 + $0x7c] sm:$0xf]
      %377 = vrot.lane.b32.xlu0 %v313, 64
      %v378 = vpop.permute.xlu0 %377
      %379 = vrot.lane.b32.xlu0 %v314, 64
      %v380 = vpop.permute.xlu0 %379
      %381 = vrot.lane.b32.xlu0 %v315, 64
      %v382 = vpop.permute.xlu0 %381
      %383 = vrot.lane.b32.xlu0 %v316, 64
      %v384 = vpop.permute.xlu0 %383
      %385 = vrot.lane.b32.xlu0 %v317, 64
      %v386 = vpop.permute.xlu0 %385
      %387 = vrot.lane.b32.xlu0 %v318, 64
      %v388 = vpop.permute.xlu0 %387
      %389 = vrot.lane.b32.xlu0 %v319, 64
      %v390 = vpop.permute.xlu0 %389
      %391 = vrot.lane.b32.xlu0 %v320, 64
      %v392 = vpop.permute.xlu0 %391
      %393 = vrot.lane.b32.xlu0 %v321, 64
      %v394 = vpop.permute.xlu0 %393
      %395 = vrot.lane.b32.xlu0 %v322, 64
      %v396 = vpop.permute.xlu0 %395
      %397 = vrot.lane.b32.xlu0 %v323, 64
      %v398 = vpop.permute.xlu0 %397
      %399 = vrot.lane.b32.xlu0 %v324, 64
      %v400 = vpop.permute.xlu0 %399
      %401 = vrot.lane.b32.xlu0 %v325, 64
      %v402 = vpop.permute.xlu0 %401
      %403 = vrot.lane.b32.xlu0 %v326, 64
      %v404 = vpop.permute.xlu0 %403
      %405 = vrot.lane.b32.xlu0 %v327, 64
      %v406 = vpop.permute.xlu0 %405
      %407 = vrot.lane.b32.xlu0 %v328, 64
      %v408 = vpop.permute.xlu0 %407
      %409 = vrot.lane.b32.xlu0 %v329, 64
      %v410 = vpop.permute.xlu0 %409
      %411 = vrot.lane.b32.xlu0 %v330, 64
      %v412 = vpop.permute.xlu0 %411
      %413 = vrot.lane.b32.xlu0 %v331, 64
      %v414 = vpop.permute.xlu0 %413
      %415 = vrot.lane.b32.xlu0 %v332, 64
      %v416 = vpop.permute.xlu0 %415
      %417 = vrot.lane.b32.xlu0 %v333, 64
      %v418 = vpop.permute.xlu0 %417
      %419 = vrot.lane.b32.xlu0 %v334, 64
      %v420 = vpop.permute.xlu0 %419
      %421 = vrot.lane.b32.xlu0 %v335, 64
      %v422 = vpop.permute.xlu0 %421
      %423 = vrot.lane.b32.xlu0 %v336, 64
      %v424 = vpop.permute.xlu0 %423
      %425 = vrot.lane.b32.xlu0 %v337, 64
      %v426 = vpop.permute.xlu0 %425
      %427 = vrot.lane.b32.xlu0 %v338, 64
      %v428 = vpop.permute.xlu0 %427
      %429 = vrot.lane.b32.xlu0 %v339, 64
      %v430 = vpop.permute.xlu0 %429
      %431 = vrot.lane.b32.xlu0 %v340, 64
      %v432 = vpop.permute.xlu0 %431
      %433 = vrot.lane.b32.xlu0 %v341, 64
      %v434 = vpop.permute.xlu0 %433
      %435 = vrot.lane.b32.xlu0 %v342, 64
      %v436 = vpop.permute.xlu0 %435
      %437 = vrot.lane.b32.xlu0 %v343, 64
      %v438 = vpop.permute.xlu0 %437
      %439 = vrot.lane.b32.xlu0 %v344, 64
      %v440 = vpop.permute.xlu0 %439
      %473 = vst.msk [vmem:[%s177] sm:$0xf] %vm178, %v378
      %474 = vst.msk [vmem:[%s177 + $0x8] sm:$0xf] %vm178, %v380
      %475 = vst.msk [vmem:[%s177 + $0x10] sm:$0xf] %vm178, %v382
      %476 = vst.msk [vmem:[%s177 + $0x18] sm:$0xf] %vm178, %v384
      %477 = vst.msk [vmem:[%s177 + $0x20] sm:$0xf] %vm178, %v386
      %478 = vst.msk [vmem:[%s177 + $0x28] sm:$0xf] %vm178, %v388
      %479 = vst.msk [vmem:[%s177 + $0x30] sm:$0xf] %vm178, %v390
      %480 = vst.msk [vmem:[%s177 + $0x38] sm:$0xf] %vm178, %v392
      %481 = vst.msk [vmem:[%s177 + $0x40] sm:$0xf] %vm178, %v394
      %482 = vst.msk [vmem:[%s177 + $0x48] sm:$0xf] %vm178, %v396
      %483 = vst.msk [vmem:[%s177 + $0x50] sm:$0xf] %vm178, %v398
      %484 = vst.msk [vmem:[%s177 + $0x58] sm:$0xf] %vm178, %v400
      %485 = vst.msk [vmem:[%s177 + $0x60] sm:$0xf] %vm178, %v402
      %486 = vst.msk [vmem:[%s177 + $0x68] sm:$0xf] %vm178, %v404
      %487 = vst.msk [vmem:[%s177 + $0x70] sm:$0xf] %vm178, %v406
      %488 = vst.msk [vmem:[%s177 + $0x78] sm:$0xf] %vm178, %v408
      %489 = vst.msk [vmem:[%s177 + $0x80] sm:$0xf] %vm178, %v410
      %490 = vst.msk [vmem:[%s177 + $0x88] sm:$0xf] %vm178, %v412
      %491 = vst.msk [vmem:[%s177 + $0x90] sm:$0xf] %vm178, %v414
      %492 = vst.msk [vmem:[%s177 + $0x98] sm:$0xf] %vm178, %v416
      %493 = vst.msk [vmem:[%s177 + $0xa0] sm:$0xf] %vm178, %v418
      %494 = vst.msk [vmem:[%s177 + $0xa8] sm:$0xf] %vm178, %v420
      %495 = vst.msk [vmem:[%s177 + $0xb0] sm:$0xf] %vm178, %v422
      %496 = vst.msk [vmem:[%s177 + $0xb8] sm:$0xf] %vm178, %v424
      %497 = vst.msk [vmem:[%s177 + $0xc0] sm:$0xf] %vm178, %v426
      %498 = vst.msk [vmem:[%s177 + $0xc8] sm:$0xf] %vm178, %v428
      %499 = vst.msk [vmem:[%s177 + $0xd0] sm:$0xf] %vm178, %v430
      %500 = vst.msk [vmem:[%s177 + $0xd8] sm:$0xf] %vm178, %v432
      %501 = vst.msk [vmem:[%s177 + $0xe0] sm:$0xf] %vm178, %v434
      %502 = vst.msk [vmem:[%s177 + $0xe8] sm:$0xf] %vm178, %v436
      %503 = vst.msk [vmem:[%s177 + $0xf0] sm:$0xf] %vm178, %v438
      %504 = vst.msk [vmem:[%s177 + $0xf8] sm:$0xf] %vm178, %v440
      %vm505 = vsmask.f32 4368
      %vm506 = vmor %vm212, %vm505
      %v508 = vshrl.u32 %v313, 16
      %v510 = vrot.slane %v508, 7
      %v511 = vshll.u32 %v313, 16
      %v513 = vor.u32 %v510, %v511
      %v514 = vrot.slane %v510, 4
      %v516 = vshrl.u32 %v314, 16
      %v518 = vrot.slane %v516, 7
      %v519 = vshll.u32 %v314, 16
      %v521 = vor.u32 %v518, %v519
      %v522 = vsel %vm506, %v514, %v521
      %v524 = vshrl.u32 %v315, 16
      %v526 = vrot.slane %v524, 7
      %v527 = vshll.u32 %v315, 16
      %v529 = vor.u32 %v526, %v527
      %v530 = vrot.slane %v526, 4
      %v532 = vshrl.u32 %v316, 16
      %v534 = vrot.slane %v532, 7
      %v535 = vshll.u32 %v316, 16
      %v537 = vor.u32 %v534, %v535
      %v538 = vsel %vm506, %v530, %v537
      %v540 = vshrl.u32 %v317, 16
      %v542 = vrot.slane %v540, 7
      %v543 = vshll.u32 %v317, 16
      %v545 = vor.u32 %v542, %v543
      %v546 = vrot.slane %v542, 4
      %v548 = vshrl.u32 %v318, 16
      %v550 = vrot.slane %v548, 7
      %v551 = vshll.u32 %v318, 16
      %v553 = vor.u32 %v550, %v551
      %v554 = vsel %vm506, %v546, %v553
      %v556 = vshrl.u32 %v319, 16
      %v558 = vrot.slane %v556, 7
      %v559 = vshll.u32 %v319, 16
      %v561 = vor.u32 %v558, %v559
      %v562 = vrot.slane %v558, 4
      %v564 = vshrl.u32 %v320, 16
      %v566 = vrot.slane %v564, 7
      %v567 = vshll.u32 %v320, 16
      %v569 = vor.u32 %v566, %v567
      %v570 = vsel %vm506, %v562, %v569
      %v572 = vshrl.u32 %v321, 16
      %v574 = vrot.slane %v572, 7
      %v575 = vshll.u32 %v321, 16
      %v577 = vor.u32 %v574, %v575
      %v578 = vrot.slane %v574, 4
      %v580 = vshrl.u32 %v322, 16
      %v582 = vrot.slane %v580, 7
      %v583 = vshll.u32 %v322, 16
      %v585 = vor.u32 %v582, %v583
      %v586 = vsel %vm506, %v578, %v585
      %v588 = vshrl.u32 %v323, 16
      %v590 = vrot.slane %v588, 7
      %v591 = vshll.u32 %v323, 16
      %v593 = vor.u32 %v590, %v591
      %v594 = vrot.slane %v590, 4
      %v596 = vshrl.u32 %v324, 16
      %v598 = vrot.slane %v596, 7
      %v599 = vshll.u32 %v324, 16
      %v601 = vor.u32 %v598, %v599
      %v602 = vsel %vm506, %v594, %v601
      %v604 = vshrl.u32 %v325, 16
      %v606 = vrot.slane %v604, 7
      %v607 = vshll.u32 %v325, 16
      %v609 = vor.u32 %v606, %v607
      %v610 = vrot.slane %v606, 4
      %v612 = vshrl.u32 %v326, 16
      %v614 = vrot.slane %v612, 7
      %v615 = vshll.u32 %v326, 16
      %v617 = vor.u32 %v614, %v615
      %v618 = vsel %vm506, %v610, %v617
      %v620 = vshrl.u32 %v327, 16
      %v622 = vrot.slane %v620, 7
      %v623 = vshll.u32 %v327, 16
      %v625 = vor.u32 %v622, %v623
      %v626 = vrot.slane %v622, 4
      %v628 = vshrl.u32 %v328, 16
      %v630 = vrot.slane %v628, 7
      %v631 = vshll.u32 %v328, 16
      %v633 = vor.u32 %v630, %v631
      %v634 = vsel %vm506, %v626, %v633
      %v636 = vshrl.u32 %v329, 16
      %v638 = vrot.slane %v636, 7
      %v639 = vshll.u32 %v329, 16
      %v641 = vor.u32 %v638, %v639
      %v642 = vrot.slane %v638, 4
      %v644 = vshrl.u32 %v330, 16
      %v646 = vrot.slane %v644, 7
      %v647 = vshll.u32 %v330, 16
      %v649 = vor.u32 %v646, %v647
      %v650 = vsel %vm506, %v642, %v649
      %v652 = vshrl.u32 %v331, 16
      %v654 = vrot.slane %v652, 7
      %v655 = vshll.u32 %v331, 16
      %v657 = vor.u32 %v654, %v655
      %v658 = vrot.slane %v654, 4
      %v660 = vshrl.u32 %v332, 16
      %v662 = vrot.slane %v660, 7
      %v663 = vshll.u32 %v332, 16
      %v665 = vor.u32 %v662, %v663
      %v666 = vsel %vm506, %v658, %v665
      %v668 = vshrl.u32 %v333, 16
      %v670 = vrot.slane %v668, 7
      %v671 = vshll.u32 %v333, 16
      %v673 = vor.u32 %v670, %v671
      %v674 = vrot.slane %v670, 4
      %v676 = vshrl.u32 %v334, 16
      %v678 = vrot.slane %v676, 7
      %v679 = vshll.u32 %v334, 16
      %v681 = vor.u32 %v678, %v679
      %v682 = vsel %vm506, %v674, %v681
      %v684 = vshrl.u32 %v335, 16
      %v686 = vrot.slane %v684, 7
      %v687 = vshll.u32 %v335, 16
      %v689 = vor.u32 %v686, %v687
      %v690 = vrot.slane %v686, 4
      %v692 = vshrl.u32 %v336, 16
      %v694 = vrot.slane %v692, 7
      %v695 = vshll.u32 %v336, 16
      %v697 = vor.u32 %v694, %v695
      %v698 = vsel %vm506, %v690, %v697
      %v700 = vshrl.u32 %v337, 16
      %v702 = vrot.slane %v700, 7
      %v703 = vshll.u32 %v337, 16
      %v705 = vor.u32 %v702, %v703
      %v706 = vrot.slane %v702, 4
      %v708 = vshrl.u32 %v338, 16
      %v710 = vrot.slane %v708, 7
      %v711 = vshll.u32 %v338, 16
      %v713 = vor.u32 %v710, %v711
      %v714 = vsel %vm506, %v706, %v713
      %v716 = vshrl.u32 %v339, 16
      %v718 = vrot.slane %v716, 7
      %v719 = vshll.u32 %v339, 16
      %v721 = vor.u32 %v718, %v719
      %v722 = vrot.slane %v718, 4
      %v724 = vshrl.u32 %v340, 16
      %v726 = vrot.slane %v724, 7
      %v727 = vshll.u32 %v340, 16
      %v729 = vor.u32 %v726, %v727
      %v730 = vsel %vm506, %v722, %v729
      %v732 = vshrl.u32 %v341, 16
      %v734 = vrot.slane %v732, 7
      %v735 = vshll.u32 %v341, 16
      %v737 = vor.u32 %v734, %v735
      %v738 = vrot.slane %v734, 4
      %v740 = vshrl.u32 %v342, 16
      %v742 = vrot.slane %v740, 7
      %v743 = vshll.u32 %v342, 16
      %v745 = vor.u32 %v742, %v743
      %v746 = vsel %vm506, %v738, %v745
      %v748 = vshrl.u32 %v343, 16
      %v750 = vrot.slane %v748, 7
      %v751 = vshll.u32 %v343, 16
      %v753 = vor.u32 %v750, %v751
      %v754 = vrot.slane %v750, 4
      %v756 = vshrl.u32 %v344, 16
      %v758 = vrot.slane %v756, 7
      %v759 = vshll.u32 %v344, 16
      %v761 = vor.u32 %v758, %v759
      %v762 = vsel %vm506, %v754, %v761
      %vm795 = vcmask 519168
      %vm796 = vsmask.f32 7938
      %vm797 = vmand %vm795, %vm796
      %v798 = vld [vmem:[%s177] sm:$0xf]
      %v799 = vsel %vm797, %v513, %v798
      %800 = vst [vmem:[%s177] sm:$0xf] %v799
      %vm801 = vcmask 519168
      %802 = vst.msk [vmem:[%s177 + $0x8] sm:$0xf] %vm801, %v522
      %v803 = vld [vmem:[%s177 + $0x10] sm:$0xf]
      %v804 = vsel %vm797, %v529, %v803
      %805 = vst [vmem:[%s177 + $0x10] sm:$0xf] %v804
      %806 = vst.msk [vmem:[%s177 + $0x18] sm:$0xf] %vm801, %v538
      %v807 = vld [vmem:[%s177 + $0x20] sm:$0xf]
      %v808 = vsel %vm797, %v545, %v807
      %809 = vst [vmem:[%s177 + $0x20] sm:$0xf] %v808
      %810 = vst.msk [vmem:[%s177 + $0x28] sm:$0xf] %vm801, %v554
      %v811 = vld [vmem:[%s177 + $0x30] sm:$0xf]
      %v812 = vsel %vm797, %v561, %v811
      %813 = vst [vmem:[%s177 + $0x30] sm:$0xf] %v812
      %814 = vst.msk [vmem:[%s177 + $0x38] sm:$0xf] %vm801, %v570
      %v815 = vld [vmem:[%s177 + $0x40] sm:$0xf]
      %v816 = vsel %vm797, %v577, %v815
      %817 = vst [vmem:[%s177 + $0x40] sm:$0xf] %v816
      %818 = vst.msk [vmem:[%s177 + $0x48] sm:$0xf] %vm801, %v586
      %v819 = vld [vmem:[%s177 + $0x50] sm:$0xf]
      %v820 = vsel %vm797, %v593, %v819
      %821 = vst [vmem:[%s177 + $0x50] sm:$0xf] %v820
      %822 = vst.msk [vmem:[%s177 + $0x58] sm:$0xf] %vm801, %v602
      %v823 = vld [vmem:[%s177 + $0x60] sm:$0xf]
      %v824 = vsel %vm797, %v609, %v823
      %825 = vst [vmem:[%s177 + $0x60] sm:$0xf] %v824
      %826 = vst.msk [vmem:[%s177 + $0x68] sm:$0xf] %vm801, %v618
      %v827 = vld [vmem:[%s177 + $0x70] sm:$0xf]
      %v828 = vsel %vm797, %v625, %v827
      %829 = vst [vmem:[%s177 + $0x70] sm:$0xf] %v828
      %830 = vst.msk [vmem:[%s177 + $0x78] sm:$0xf] %vm801, %v634
      %v831 = vld [vmem:[%s177 + $0x80] sm:$0xf]
      %v832 = vsel %vm797, %v641, %v831
      %833 = vst [vmem:[%s177 + $0x80] sm:$0xf] %v832
      %834 = vst.msk [vmem:[%s177 + $0x88] sm:$0xf] %vm801, %v650
      %v835 = vld [vmem:[%s177 + $0x90] sm:$0xf]
      %v836 = vsel %vm797, %v657, %v835
      %837 = vst [vmem:[%s177 + $0x90] sm:$0xf] %v836
      %838 = vst.msk [vmem:[%s177 + $0x98] sm:$0xf] %vm801, %v666
      %v839 = vld [vmem:[%s177 + $0xa0] sm:$0xf]
      %v840 = vsel %vm797, %v673, %v839
      %841 = vst [vmem:[%s177 + $0xa0] sm:$0xf] %v840
      %842 = vst.msk [vmem:[%s177 + $0xa8] sm:$0xf] %vm801, %v682
      %v843 = vld [vmem:[%s177 + $0xb0] sm:$0xf]
      %v844 = vsel %vm797, %v689, %v843
      %845 = vst [vmem:[%s177 + $0xb0] sm:$0xf] %v844
      %846 = vst.msk [vmem:[%s177 + $0xb8] sm:$0xf] %vm801, %v698
      %v847 = vld [vmem:[%s177 + $0xc0] sm:$0xf]
      %v848 = vsel %vm797, %v705, %v847
      %849 = vst [vmem:[%s177 + $0xc0] sm:$0xf] %v848
      %850 = vst.msk [vmem:[%s177 + $0xc8] sm:$0xf] %vm801, %v714
      %v851 = vld [vmem:[%s177 + $0xd0] sm:$0xf]
      %v852 = vsel %vm797, %v721, %v851
      %853 = vst [vmem:[%s177 + $0xd0] sm:$0xf] %v852
      %854 = vst.msk [vmem:[%s177 + $0xd8] sm:$0xf] %vm801, %v730
      %v855 = vld [vmem:[%s177 + $0xe0] sm:$0xf]
      %v856 = vsel %vm797, %v737, %v855
      %857 = vst [vmem:[%s177 + $0xe0] sm:$0xf] %v856
      %858 = vst.msk [vmem:[%s177 + $0xe8] sm:$0xf] %vm801, %v746
      %v859 = vld [vmem:[%s177 + $0xf0] sm:$0xf]
      %v860 = vsel %vm797, %v753, %v859
      %861 = vst [vmem:[%s177 + $0xf0] sm:$0xf] %v860
      %862 = vst.msk [vmem:[%s177 + $0xf8] sm:$0xf] %vm801, %v762
      %vm863 = vsmask.f32 3328
      %vm864 = vsmask.f32 7440
      %vm865 = vmor %vm863, %vm864
      %v866 = vrot.slane %v508, 4
      %v867 = vrot.slane %v511, 5
      %v868 = vor.u32 %v866, %v867
      %v869 = vrot.slane %v868, 4
      %v870 = vrot.slane %v519, 5
      %v871 = vsel %vm865, %v869, %v870
      %v872 = vrot.slane %v516, 4
      %v873 = vor.u32 %v872, %v870
      %v874 = vrot.slane %v873, 4
      %v875 = vrot.slane %v524, 4
      %v876 = vrot.slane %v527, 5
      %v877 = vor.u32 %v875, %v876
      %v878 = vrot.slane %v877, 4
      %v879 = vrot.slane %v535, 5
      %v880 = vsel %vm865, %v878, %v879
      %v881 = vrot.slane %v532, 4
      %v882 = vor.u32 %v881, %v879
      %v883 = vrot.slane %v882, 4
      %v884 = vrot.slane %v540, 4
      %v885 = vrot.slane %v543, 5
      %v886 = vor.u32 %v884, %v885
      %v887 = vrot.slane %v886, 4
      %v888 = vrot.slane %v551, 5
      %v889 = vsel %vm865, %v887, %v888
      %v890 = vrot.slane %v548, 4
      %v891 = vor.u32 %v890, %v888
      %v892 = vrot.slane %v891, 4
      %v893 = vrot.slane %v556, 4
      %v894 = vrot.slane %v559, 5
      %v895 = vor.u32 %v893, %v894
      %v896 = vrot.slane %v895, 4
      %v897 = vrot.slane %v567, 5
      %v898 = vsel %vm865, %v896, %v897
      %v899 = vrot.slane %v564, 4
      %v900 = vor.u32 %v899, %v897
      %v901 = vrot.slane %v900, 4
      %v902 = vrot.slane %v572, 4
      %v903 = vrot.slane %v575, 5
      %v904 = vor.u32 %v902, %v903
      %v905 = vrot.slane %v904, 4
      %v906 = vrot.slane %v583, 5
      %v907 = vsel %vm865, %v905, %v906
      %v908 = vrot.slane %v580, 4
      %v909 = vor.u32 %v908, %v906
      %v910 = vrot.slane %v909, 4
      %v911 = vrot.slane %v588, 4
      %v912 = vrot.slane %v591, 5
      %v913 = vor.u32 %v911, %v912
      %v914 = vrot.slane %v913, 4
      %v915 = vrot.slane %v599, 5
      %v916 = vsel %vm865, %v914, %v915
      %v917 = vrot.slane %v596, 4
      %v918 = vor.u32 %v917, %v915
      %v919 = vrot.slane %v918, 4
      %v920 = vrot.slane %v604, 4
      %v921 = vrot.slane %v607, 5
      %v922 = vor.u32 %v920, %v921
      %v923 = vrot.slane %v922, 4
      %v924 = vrot.slane %v615, 5
      %v925 = vsel %vm865, %v923, %v924
      %v926 = vrot.slane %v612, 4
      %v927 = vor.u32 %v926, %v924
      %v928 = vrot.slane %v927, 4
      %v929 = vrot.slane %v620, 4
      %v930 = vrot.slane %v623, 5
      %v931 = vor.u32 %v929, %v930
      %v932 = vrot.slane %v931, 4
      %v933 = vrot.slane %v631, 5
      %v934 = vsel %vm865, %v932, %v933
      %v935 = vrot.slane %v628, 4
      %v936 = vor.u32 %v935, %v933
      %v937 = vrot.slane %v936, 4
      %v938 = vrot.slane %v636, 4
      %v939 = vrot.slane %v639, 5
      %v940 = vor.u32 %v938, %v939
      %v941 = vrot.slane %v940, 4
      %v942 = vrot.slane %v647, 5
      %v943 = vsel %vm865, %v941, %v942
      %v944 = vrot.slane %v644, 4
      %v945 = vor.u32 %v944, %v942
      %v946 = vrot.slane %v945, 4
      %v947 = vrot.slane %v652, 4
      %v948 = vrot.slane %v655, 5
      %v949 = vor.u32 %v947, %v948
      %v950 = vrot.slane %v949, 4
      %v951 = vrot.slane %v663, 5
      %v952 = vsel %vm865, %v950, %v951
      %v953 = vrot.slane %v660, 4
      %v954 = vor.u32 %v953, %v951
      %v955 = vrot.slane %v954, 4
      %v956 = vrot.slane %v668, 4
      %v957 = vrot.slane %v671, 5
      %v958 = vor.u32 %v956, %v957
      %v959 = vrot.slane %v958, 4
      %v960 = vrot.slane %v679, 5
      %v961 = vsel %vm865, %v959, %v960
      %v962 = vrot.slane %v676, 4
      %v963 = vor.u32 %v962, %v960
      %v964 = vrot.slane %v963, 4
      %v965 = vrot.slane %v684, 4
      %v966 = vrot.slane %v687, 5
      %v967 = vor.u32 %v965, %v966
      %v968 = vrot.slane %v967, 4
      %v969 = vrot.slane %v695, 5
      %v970 = vsel %vm865, %v968, %v969
      %v971 = vrot.slane %v692, 4
      %v972 = vor.u32 %v971, %v969
      %v973 = vrot.slane %v972, 4
      %v974 = vrot.slane %v700, 4
      %v975 = vrot.slane %v703, 5
      %v976 = vor.u32 %v974, %v975
      %v977 = vrot.slane %v976, 4
      %v978 = vrot.slane %v711, 5
      %v979 = vsel %vm865, %v977, %v978
      %v980 = vrot.slane %v708, 4
      %v981 = vor.u32 %v980, %v978
      %v982 = vrot.slane %v981, 4
      %v983 = vrot.slane %v716, 4
      %v984 = vrot.slane %v719, 5
      %v985 = vor.u32 %v983, %v984
      %v986 = vrot.slane %v985, 4
      %v987 = vrot.slane %v727, 5
      %v988 = vsel %vm865, %v986, %v987
      %v989 = vrot.slane %v724, 4
      %v990 = vor.u32 %v989, %v987
      %v991 = vrot.slane %v990, 4
      %v992 = vrot.slane %v732, 4
      %v993 = vrot.slane %v735, 5
      %v994 = vor.u32 %v992, %v993
      %v995 = vrot.slane %v994, 4
      %v996 = vrot.slane %v743, 5
      %v997 = vsel %vm865, %v995, %v996
      %v998 = vrot.slane %v740, 4
      %v999 = vor.u32 %v998, %v996
      %v1000 = vrot.slane %v999, 4
      %v1001 = vrot.slane %v748, 4
      %v1002 = vrot.slane %v751, 5
      %v1003 = vor.u32 %v1001, %v1002
      %v1004 = vrot.slane %v1003, 4
      %v1005 = vrot.slane %v759, 5
      %v1006 = vsel %vm865, %v1004, %v1005
      %v1007 = vrot.slane %v756, 4
      %v1008 = vor.u32 %v1007, %v1005
      %v1009 = vrot.slane %v1008, 4
      %1042 = vst.msk [vmem:[%s177 + $0x4] sm:$0xf] %vm801, %v871
      %vm1043 = vmand %vm795, %vm863
      %v1044 = vld [vmem:[%s177 + $0xc] sm:$0xf]
      %v1045 = vsel %vm1043, %v874, %v1044
      %1046 = vst [vmem:[%s177 + $0xc] sm:$0xf] %v1045
      %1047 = vst.msk [vmem:[%s177 + $0x14] sm:$0xf] %vm801, %v880
      %v1048 = vld [vmem:[%s177 + $0x1c] sm:$0xf]
      %v1049 = vsel %vm1043, %v883, %v1048
      %1050 = vst [vmem:[%s177 + $0x1c] sm:$0xf] %v1049
      %1051 = vst.msk [vmem:[%s177 + $0x24] sm:$0xf] %vm801, %v889
      %v1052 = vld [vmem:[%s177 + $0x2c] sm:$0xf]
      %v1053 = vsel %vm1043, %v892, %v1052
      %1054 = vst [vmem:[%s177 + $0x2c] sm:$0xf] %v1053
      %1055 = vst.msk [vmem:[%s177 + $0x34] sm:$0xf] %vm801, %v898
      %v1056 = vld [vmem:[%s177 + $0x3c] sm:$0xf]
      %v1057 = vsel %vm1043, %v901, %v1056
      %1058 = vst [vmem:[%s177 + $0x3c] sm:$0xf] %v1057
      %1059 = vst.msk [vmem:[%s177 + $0x44] sm:$0xf] %vm801, %v907
      %v1060 = vld [vmem:[%s177 + $0x4c] sm:$0xf]
      %v1061 = vsel %vm1043, %v910, %v1060
      %1062 = vst [vmem:[%s177 + $0x4c] sm:$0xf] %v1061
      %1063 = vst.msk [vmem:[%s177 + $0x54] sm:$0xf] %vm801, %v916
      %v1064 = vld [vmem:[%s177 + $0x5c] sm:$0xf]
      %v1065 = vsel %vm1043, %v919, %v1064
      %1066 = vst [vmem:[%s177 + $0x5c] sm:$0xf] %v1065
      %1067 = vst.msk [vmem:[%s177 + $0x64] sm:$0xf] %vm801, %v925
      %v1068 = vld [vmem:[%s177 + $0x6c] sm:$0xf]
      %v1069 = vsel %vm1043, %v928, %v1068
      %1070 = vst [vmem:[%s177 + $0x6c] sm:$0xf] %v1069
      %1071 = vst.msk [vmem:[%s177 + $0x74] sm:$0xf] %vm801, %v934
      %v1072 = vld [vmem:[%s177 + $0x7c] sm:$0xf]
      %v1073 = vsel %vm1043, %v937, %v1072
      %1074 = vst [vmem:[%s177 + $0x7c] sm:$0xf] %v1073
      %1075 = vst.msk [vmem:[%s177 + $0x84] sm:$0xf] %vm801, %v943
      %v1076 = vld [vmem:[%s177 + $0x8c] sm:$0xf]
      %v1077 = vsel %vm1043, %v946, %v1076
      %1078 = vst [vmem:[%s177 + $0x8c] sm:$0xf] %v1077
      %1079 = vst.msk [vmem:[%s177 + $0x94] sm:$0xf] %vm801, %v952
      %v1080 = vld [vmem:[%s177 + $0x9c] sm:$0xf]
      %v1081 = vsel %vm1043, %v955, %v1080
      %1082 = vst [vmem:[%s177 + $0x9c] sm:$0xf] %v1081
      %1083 = vst.msk [vmem:[%s177 + $0xa4] sm:$0xf] %vm801, %v961
      %v1084 = vld [vmem:[%s177 + $0xac] sm:$0xf]
      %v1085 = vsel %vm1043, %v964, %v1084
      %1086 = vst [vmem:[%s177 + $0xac] sm:$0xf] %v1085
      %1087 = vst.msk [vmem:[%s177 + $0xb4] sm:$0xf] %vm801, %v970
      %v1088 = vld [vmem:[%s177 + $0xbc] sm:$0xf]
      %v1089 = vsel %vm1043, %v973, %v1088
      %1090 = vst [vmem:[%s177 + $0xbc] sm:$0xf] %v1089
      %1091 = vst.msk [vmem:[%s177 + $0xc4] sm:$0xf] %vm801, %v979
      %v1092 = vld [vmem:[%s177 + $0xcc] sm:$0xf]
      %v1093 = vsel %vm1043, %v982, %v1092
      %1094 = vst [vmem:[%s177 + $0xcc] sm:$0xf] %v1093
      %1095 = vst.msk [vmem:[%s177 + $0xd4] sm:$0xf] %vm801, %v988
      %v1096 = vld [vmem:[%s177 + $0xdc] sm:$0xf]
      %v1097 = vsel %vm1043, %v991, %v1096
      %1098 = vst [vmem:[%s177 + $0xdc] sm:$0xf] %v1097
      %1099 = vst.msk [vmem:[%s177 + $0xe4] sm:$0xf] %vm801, %v997
      %v1100 = vld [vmem:[%s177 + $0xec] sm:$0xf]
      %v1101 = vsel %vm1043, %v1000, %v1100
      %1102 = vst [vmem:[%s177 + $0xec] sm:$0xf] %v1101
      %1103 = vst.msk [vmem:[%s177 + $0xf4] sm:$0xf] %vm801, %v1006
      %v1104 = vld [vmem:[%s177 + $0xfc] sm:$0xf]
      %v1105 = vsel %vm1043, %v1009, %v1104
      %1106 = vst [vmem:[%s177 + $0xfc] sm:$0xf] %v1105
      %v1107 = vld [vmem:[%s2] sm:$0x1]
      %v1108 = vld [vmem:[#allocation2] sm:$0xff]
      %v1109 = vld [vmem:[#allocation2 + $0x8] sm:$0xff]
      %v1110 = vld [vmem:[#allocation2 + $0x10] sm:$0xff]
      %v1111 = vld [vmem:[#allocation2 + $0x18] sm:$0xff]
      %v1112 = vld [vmem:[#allocation2 + $0x20] sm:$0xff]
      %v1113 = vld [vmem:[#allocation2 + $0x28] sm:$0xff]
      %v1114 = vld [vmem:[#allocation2 + $0x30] sm:$0xff]
      %v1115 = vld [vmem:[#allocation2 + $0x38] sm:$0xff]
      %v1116 = vld [vmem:[#allocation2 + $0x40] sm:$0xff]
      %v1117 = vld [vmem:[#allocation2 + $0x48] sm:$0xff]
      %v1118 = vld [vmem:[#allocation2 + $0x50] sm:$0xff]
      %v1119 = vld [vmem:[#allocation2 + $0x58] sm:$0xff]
      %v1120 = vld [vmem:[#allocation2 + $0x60] sm:$0xff]
      %v1121 = vld [vmem:[#allocation2 + $0x68] sm:$0xff]
      %v1122 = vld [vmem:[#allocation2 + $0x70] sm:$0xff]
      %v1123 = vld [vmem:[#allocation2 + $0x78] sm:$0xff]
      %v1124 = vld [vmem:[#allocation2 + $0x80] sm:$0xff]
      %v1125 = vld [vmem:[#allocation2 + $0x88] sm:$0xff]
      %v1126 = vld [vmem:[#allocation2 + $0x90] sm:$0xff]
      %v1127 = vld [vmem:[#allocation2 + $0x98] sm:$0xff]
      %v1128 = vld [vmem:[#allocation2 + $0xa0] sm:$0xff]
      %v1129 = vld [vmem:[#allocation2 + $0xa8] sm:$0xff]
      %v1130 = vld [vmem:[#allocation2 + $0xb0] sm:$0xff]
      %v1131 = vld [vmem:[#allocation2 + $0xb8] sm:$0xff]
      %v1132 = vld [vmem:[#allocation2 + $0xc0] sm:$0xff]
      %v1133 = vld [vmem:[#allocation2 + $0xc8] sm:$0xff]
      %v1134 = vld [vmem:[#allocation2 + $0xd0] sm:$0xff]
      %v1135 = vld [vmem:[#allocation2 + $0xd8] sm:$0xff]
      %v1136 = vld [vmem:[#allocation2 + $0xe0] sm:$0xff]
      %v1137 = vld [vmem:[#allocation2 + $0xe8] sm:$0xff]
      %v1138 = vld [vmem:[#allocation2 + $0xf0] sm:$0xff]
      %v1139 = vld [vmem:[#allocation2 + $0xf8] sm:$0xff]
      %v1140 = vld [vmem:[%s1] sm:$0xf]
      %v1141 = vld [vmem:[%s1 + $0x4] sm:$0xf]
      %v1142 = vld [vmem:[%s1 + $0x8] sm:$0xf]
      %v1143 = vld [vmem:[%s1 + $0xc] sm:$0xf]
      %v1144 = vld [vmem:[%s1 + $0x10] sm:$0xf]
      %v1145 = vld [vmem:[%s1 + $0x14] sm:$0xf]
      %v1146 = vld [vmem:[%s1 + $0x18] sm:$0xf]
      %v1147 = vld [vmem:[%s1 + $0x1c] sm:$0xf]
      %v1148 = vld [vmem:[%s1 + $0x20] sm:$0xf]
      %v1149 = vld [vmem:[%s1 + $0x24] sm:$0xf]
      %v1150 = vld [vmem:[%s1 + $0x28] sm:$0xf]
      %v1151 = vld [vmem:[%s1 + $0x2c] sm:$0xf]
      %v1152 = vld [vmem:[%s1 + $0x30] sm:$0xf]
      %v1153 = vld [vmem:[%s1 + $0x34] sm:$0xf]
      %v1154 = vld [vmem:[%s1 + $0x38] sm:$0xf]
      %v1155 = vld [vmem:[%s1 + $0x3c] sm:$0xf]
      %v1156 = vld [vmem:[%s1 + $0x40] sm:$0xf]
      %v1157 = vld [vmem:[%s1 + $0x44] sm:$0xf]
      %v1158 = vld [vmem:[%s1 + $0x48] sm:$0xf]
      %v1159 = vld [vmem:[%s1 + $0x4c] sm:$0xf]
      %v1160 = vld [vmem:[%s1 + $0x50] sm:$0xf]
      %v1161 = vld [vmem:[%s1 + $0x54] sm:$0xf]
      %v1162 = vld [vmem:[%s1 + $0x58] sm:$0xf]
      %v1163 = vld [vmem:[%s1 + $0x5c] sm:$0xf]
      %v1164 = vld [vmem:[%s1 + $0x60] sm:$0xf]
      %v1165 = vld [vmem:[%s1 + $0x64] sm:$0xf]
      %v1166 = vld [vmem:[%s1 + $0x68] sm:$0xf]
      %v1167 = vld [vmem:[%s1 + $0x6c] sm:$0xf]
      %v1168 = vld [vmem:[%s1 + $0x70] sm:$0xf]
      %v1169 = vld [vmem:[%s1 + $0x74] sm:$0xf]
      %v1170 = vld [vmem:[%s1 + $0x78] sm:$0xf]
      %v1171 = vld [vmem:[%s1 + $0x7c] sm:$0xf]
      %v1204 = vunpack.c.l.b16 %v1108
      %v1205 = vunpack.c.h.b16 %v1108
      %v1206 = vunpack.c.l.b16 %v1109
      %v1207 = vunpack.c.h.b16 %v1109
      %v1208 = vunpack.c.l.b16 %v1110
      %v1209 = vunpack.c.h.b16 %v1110
      %v1210 = vunpack.c.l.b16 %v1111
      %v1211 = vunpack.c.h.b16 %v1111
      %v1212 = vunpack.c.l.b16 %v1112
      %v1213 = vunpack.c.h.b16 %v1112
      %v1214 = vunpack.c.l.b16 %v1113
      %v1215 = vunpack.c.h.b16 %v1113
      %v1216 = vunpack.c.l.b16 %v1114
      %v1217 = vunpack.c.h.b16 %v1114
      %v1218 = vunpack.c.l.b16 %v1115
      %v1219 = vunpack.c.h.b16 %v1115
      %v1220 = vunpack.c.l.b16 %v1116
      %v1221 = vunpack.c.h.b16 %v1116
      %v1222 = vunpack.c.l.b16 %v1117
      %v1223 = vunpack.c.h.b16 %v1117
      %v1224 = vunpack.c.l.b16 %v1118
      %v1225 = vunpack.c.h.b16 %v1118
      %v1226 = vunpack.c.l.b16 %v1119
      %v1227 = vunpack.c.h.b16 %v1119
      %v1228 = vunpack.c.l.b16 %v1120
      %v1229 = vunpack.c.h.b16 %v1120
      %v1230 = vunpack.c.l.b16 %v1121
      %v1231 = vunpack.c.h.b16 %v1121
      %v1232 = vunpack.c.l.b16 %v1122
      %v1233 = vunpack.c.h.b16 %v1122
      %v1234 = vunpack.c.l.b16 %v1123
      %v1235 = vunpack.c.h.b16 %v1123
      %v1236 = vunpack.c.l.b16 %v1124
      %v1237 = vunpack.c.h.b16 %v1124
      %v1238 = vunpack.c.l.b16 %v1125
      %v1239 = vunpack.c.h.b16 %v1125
      %v1240 = vunpack.c.l.b16 %v1126
      %v1241 = vunpack.c.h.b16 %v1126
      %v1242 = vunpack.c.l.b16 %v1127
      %v1243 = vunpack.c.h.b16 %v1127
      %v1244 = vunpack.c.l.b16 %v1128
      %v1245 = vunpack.c.h.b16 %v1128
      %v1246 = vunpack.c.l.b16 %v1129
      %v1247 = vunpack.c.h.b16 %v1129
      %v1248 = vunpack.c.l.b16 %v1130
      %v1249 = vunpack.c.h.b16 %v1130
      %v1250 = vunpack.c.l.b16 %v1131
      %v1251 = vunpack.c.h.b16 %v1131
      %v1252 = vunpack.c.l.b16 %v1132
      %v1253 = vunpack.c.h.b16 %v1132
      %v1254 = vunpack.c.l.b16 %v1133
      %v1255 = vunpack.c.h.b16 %v1133
      %v1256 = vunpack.c.l.b16 %v1134
      %v1257 = vunpack.c.h.b16 %v1134
      %v1258 = vunpack.c.l.b16 %v1135
      %v1259 = vunpack.c.h.b16 %v1135
      %v1260 = vunpack.c.l.b16 %v1136
      %v1261 = vunpack.c.h.b16 %v1136
      %v1262 = vunpack.c.l.b16 %v1137
      %v1263 = vunpack.c.h.b16 %v1137
      %v1264 = vunpack.c.l.b16 %v1138
      %v1265 = vunpack.c.h.b16 %v1138
      %v1266 = vunpack.c.l.b16 %v1139
      %v1267 = vunpack.c.h.b16 %v1139
      %v1268 = vpack.c.b16 %v1206, %v1204
      %v1269 = vpack.c.b16 %v1207, %v1205
      %v1270 = vpack.c.b16 %v1210, %v1208
      %v1271 = vpack.c.b16 %v1211, %v1209
      %v1272 = vpack.c.b16 %v1214, %v1212
      %v1273 = vpack.c.b16 %v1215, %v1213
      %v1274 = vpack.c.b16 %v1218, %v1216
      %v1275 = vpack.c.b16 %v1219, %v1217
      %v1276 = vpack.c.b16 %v1222, %v1220
      %v1277 = vpack.c.b16 %v1223, %v1221
      %v1278 = vpack.c.b16 %v1226, %v1224
      %v1279 = vpack.c.b16 %v1227, %v1225
      %v1280 = vpack.c.b16 %v1230, %v1228
      %v1281 = vpack.c.b16 %v1231, %v1229
      %v1282 = vpack.c.b16 %v1234, %v1232
      %v1283 = vpack.c.b16 %v1235, %v1233
      %v1284 = vpack.c.b16 %v1238, %v1236
      %v1285 = vpack.c.b16 %v1239, %v1237
      %v1286 = vpack.c.b16 %v1242, %v1240
      %v1287 = vpack.c.b16 %v1243, %v1241
      %v1288 = vpack.c.b16 %v1246, %v1244
      %v1289 = vpack.c.b16 %v1247, %v1245
      %v1290 = vpack.c.b16 %v1250, %v1248
      %v1291 = vpack.c.b16 %v1251, %v1249
      %v1292 = vpack.c.b16 %v1254, %v1252
      %v1293 = vpack.c.b16 %v1255, %v1253
      %v1294 = vpack.c.b16 %v1258, %v1256
      %v1295 = vpack.c.b16 %v1259, %v1257
      %v1296 = vpack.c.b16 %v1262, %v1260
      %v1297 = vpack.c.b16 %v1263, %v1261
      %v1298 = vpack.c.b16 %v1266, %v1264
      %v1299 = vpack.c.b16 %v1267, %v1265
      %v1364 = vunpack.c.l.b16 %v1140
      %v1365 = vunpack.c.l.b16 %v1141
      %v1366 = vunpack.c.l.b16 %v1142
      %v1367 = vunpack.c.l.b16 %v1143
      %v1368 = vunpack.c.l.b16 %v1144
      %v1369 = vunpack.c.l.b16 %v1145
      %v1370 = vunpack.c.l.b16 %v1146
      %v1371 = vunpack.c.l.b16 %v1147
      %v1372 = vunpack.c.l.b16 %v1148
      %v1373 = vunpack.c.l.b16 %v1149
      %v1374 = vunpack.c.l.b16 %v1150
      %v1375 = vunpack.c.l.b16 %v1151
      %v1376 = vunpack.c.l.b16 %v1152
      %v1377 = vunpack.c.l.b16 %v1153
      %v1378 = vunpack.c.l.b16 %v1154
      %v1379 = vunpack.c.l.b16 %v1155
      %v1380 = vunpack.c.l.b16 %v1156
      %v1381 = vunpack.c.l.b16 %v1157
      %v1382 = vunpack.c.l.b16 %v1158
      %v1383 = vunpack.c.l.b16 %v1159
      %v1384 = vunpack.c.l.b16 %v1160
      %v1385 = vunpack.c.l.b16 %v1161
      %v1386 = vunpack.c.l.b16 %v1162
      %v1387 = vunpack.c.l.b16 %v1163
      %v1388 = vunpack.c.l.b16 %v1164
      %v1389 = vunpack.c.l.b16 %v1165
      %v1390 = vunpack.c.l.b16 %v1166
      %v1391 = vunpack.c.l.b16 %v1167
      %v1392 = vunpack.c.l.b16 %v1168
      %v1393 = vunpack.c.l.b16 %v1169
      %v1394 = vunpack.c.l.b16 %v1170
      %v1395 = vunpack.c.l.b16 %v1171
      %v1396 = vpack.c.b16 %v1365, %v1364
      %v1397 = vpack.c.b16 %v1367, %v1366
      %v1398 = vpack.c.b16 %v1369, %v1368
      %v1399 = vpack.c.b16 %v1371, %v1370
      %v1400 = vpack.c.b16 %v1373, %v1372
      %v1401 = vpack.c.b16 %v1375, %v1374
      %v1402 = vpack.c.b16 %v1377, %v1376
      %v1403 = vpack.c.b16 %v1379, %v1378
      %v1404 = vpack.c.b16 %v1381, %v1380
      %v1405 = vpack.c.b16 %v1383, %v1382
      %v1406 = vpack.c.b16 %v1385, %v1384
      %v1407 = vpack.c.b16 %v1387, %v1386
      %v1408 = vpack.c.b16 %v1389, %v1388
      %v1409 = vpack.c.b16 %v1391, %v1390
      %v1410 = vpack.c.b16 %v1393, %v1392
      %v1411 = vpack.c.b16 %v1395, %v1394
      %1428 = vmatprep.subr.bf16.mxu0 0
      %1429 = vmatpush1.bf16.msra.mxu0 %v1403
      %1430 = vmatprep.subr.bf16.mxu0 0
      %1431 = vmatpush1.bf16.msra.mxu0 %v1402
      %1432 = vmatprep.subr.bf16.mxu0 0
      %1433 = vmatpush1.bf16.msra.mxu0 %v1401
      %1434 = vmatprep.subr.bf16.mxu0 0
      %1435 = vmatpush1.bf16.msra.mxu0 %v1400
      %1436 = vmatprep.subr.bf16.mxu0 0
      %1437 = vmatpush1.bf16.msra.mxu0 %v1399
      %1438 = vmatprep.subr.bf16.mxu0 0
      %1439 = vmatpush1.bf16.msra.mxu0 %v1398
      %1440 = vmatprep.subr.bf16.mxu0 0
      %1441 = vmatpush1.bf16.msra.mxu0 %v1397
      %1442 = vmatprep.subr.bf16.mxu0 0
      %1443 = vmatpush1.bf16.msra.mxu0 %v1396
      %1444 = vmatprep.subr.bf16.mxu0 0
      %1445 = vmatpush2.bf16.msra.mxu0 %v1411
      %1446 = vmatprep.subr.bf16.mxu0 0
      %1447 = vmatpush2.bf16.msra.mxu0 %v1410
      %1448 = vmatprep.subr.bf16.mxu0 0
      %1449 = vmatpush2.bf16.msra.mxu0 %v1409
      %1450 = vmatprep.subr.bf16.mxu0 0
      %1451 = vmatpush2.bf16.msra.mxu0 %v1408
      %1452 = vmatprep.subr.bf16.mxu0 0
      %1453 = vmatpush2.bf16.msra.mxu0 %v1407
      %1454 = vmatprep.subr.bf16.mxu0 0
      %1455 = vmatpush2.bf16.msra.mxu0 %v1406
      %1456 = vmatprep.subr.bf16.mxu0 0
      %1457 = vmatpush2.bf16.msra.mxu0 %v1405
      %1458 = vmatprep.subr.bf16.mxu0 0
      %1459 = vmatpush2.bf16.msra.mxu0 %v1404
      %1460 = vmatprep.mubr.bf16.mxu0 %v1269
      %1461 = vmatmul.mubr.bf16.gmra.mxu0 %v1268
      %v1462 = vpop.f32.mrf.mxu0
      %v1463 = vadd.f32 0.0, %v1462
      %v1464 = vpop.f32.mrf.mxu0
      %v1465 = vpop.f32.mrf.mxu0
      %v1466 = vadd.f32 0.0, %v1465
      %v1467 = vpop.f32.mrf.mxu0
      %1468 = vmatprep.mubr.bf16.mxu0 %v1271
      %1469 = vmatmul.mubr.bf16.gmra.mxu0 %v1270
      %v1470 = vpop.f32.mrf.mxu0
      %v1471 = vadd.f32 0.0, %v1470
      %v1472 = vpop.f32.mrf.mxu0
      %v1473 = vpop.f32.mrf.mxu0
      %v1474 = vadd.f32 0.0, %v1473
      %v1475 = vpop.f32.mrf.mxu0
      %1476 = vmatprep.mubr.bf16.mxu0 %v1273
      %1477 = vmatmul.mubr.bf16.gmra.mxu0 %v1272
      %v1478 = vpop.f32.mrf.mxu0
      %v1479 = vadd.f32 0.0, %v1478
      %v1480 = vpop.f32.mrf.mxu0
      %v1481 = vpop.f32.mrf.mxu0
      %v1482 = vadd.f32 0.0, %v1481
      %v1483 = vpop.f32.mrf.mxu0
      %1484 = vmatprep.mubr.bf16.mxu0 %v1275
      %1485 = vmatmul.mubr.bf16.gmra.mxu0 %v1274
      %v1486 = vpop.f32.mrf.mxu0
      %v1487 = vadd.f32 0.0, %v1486
      %v1488 = vpop.f32.mrf.mxu0
      %v1489 = vpop.f32.mrf.mxu0
      %v1490 = vadd.f32 0.0, %v1489
      %v1491 = vpop.f32.mrf.mxu0
      %1492 = vmatprep.mubr.bf16.mxu0 %v1277
      %1493 = vmatmul.mubr.bf16.gmra.mxu0 %v1276
      %v1494 = vpop.f32.mrf.mxu0
      %v1495 = vadd.f32 0.0, %v1494
      %v1496 = vpop.f32.mrf.mxu0
      %v1497 = vpop.f32.mrf.mxu0
      %v1498 = vadd.f32 0.0, %v1497
      %v1499 = vpop.f32.mrf.mxu0
      %1500 = vmatprep.mubr.bf16.mxu0 %v1279
      %1501 = vmatmul.mubr.bf16.gmra.mxu0 %v1278
      %v1502 = vpop.f32.mrf.mxu0
      %v1503 = vadd.f32 0.0, %v1502
      %v1504 = vpop.f32.mrf.mxu0
      %v1505 = vpop.f32.mrf.mxu0
      %v1506 = vadd.f32 0.0, %v1505
      %v1507 = vpop.f32.mrf.mxu0
      %1508 = vmatprep.mubr.bf16.mxu0 %v1281
      %1509 = vmatmul.mubr.bf16.gmra.mxu0 %v1280
      %v1510 = vpop.f32.mrf.mxu0
      %v1511 = vadd.f32 0.0, %v1510
      %v1512 = vpop.f32.mrf.mxu0
      %v1513 = vpop.f32.mrf.mxu0
      %v1514 = vadd.f32 0.0, %v1513
      %v1515 = vpop.f32.mrf.mxu0
      %1516 = vmatprep.mubr.bf16.mxu0 %v1283
      %1517 = vmatmul.mubr.bf16.gmra.mxu0 %v1282
      %v1518 = vpop.f32.mrf.mxu0
      %v1519 = vadd.f32 0.0, %v1518
      %v1520 = vpop.f32.mrf.mxu0
      %v1521 = vpop.f32.mrf.mxu0
      %v1522 = vadd.f32 0.0, %v1521
      %v1523 = vpop.f32.mrf.mxu0
      %1524 = vmatprep.mubr.bf16.mxu0 %v1285
      %1525 = vmatmul.mubr.bf16.gmra.mxu0 %v1284
      %v1526 = vpop.f32.mrf.mxu0
      %v1527 = vadd.f32 0.0, %v1526
      %v1528 = vpop.f32.mrf.mxu0
      %v1529 = vpop.f32.mrf.mxu0
      %v1530 = vadd.f32 0.0, %v1529
      %v1531 = vpop.f32.mrf.mxu0
      %1532 = vmatprep.mubr.bf16.mxu0 %v1287
      %1533 = vmatmul.mubr.bf16.gmra.mxu0 %v1286
      %v1534 = vpop.f32.mrf.mxu0
      %v1535 = vadd.f32 0.0, %v1534
      %v1536 = vpop.f32.mrf.mxu0
      %v1537 = vpop.f32.mrf.mxu0
      %v1538 = vadd.f32 0.0, %v1537
      %v1539 = vpop.f32.mrf.mxu0
      %1540 = vmatprep.mubr.bf16.mxu0 %v1289
      %1541 = vmatmul.mubr.bf16.gmra.mxu0 %v1288
      %v1542 = vpop.f32.mrf.mxu0
      %v1543 = vadd.f32 0.0, %v1542
      %v1544 = vpop.f32.mrf.mxu0
      %v1545 = vpop.f32.mrf.mxu0
      %v1546 = vadd.f32 0.0, %v1545
      %v1547 = vpop.f32.mrf.mxu0
      %1548 = vmatprep.mubr.bf16.mxu0 %v1291
      %1549 = vmatmul.mubr.bf16.gmra.mxu0 %v1290
      %v1550 = vpop.f32.mrf.mxu0
      %v1551 = vadd.f32 0.0, %v1550
      %v1552 = vpop.f32.mrf.mxu0
      %v1553 = vpop.f32.mrf.mxu0
      %v1554 = vadd.f32 0.0, %v1553
      %v1555 = vpop.f32.mrf.mxu0
      %1556 = vmatprep.mubr.bf16.mxu0 %v1293
      %1557 = vmatmul.mubr.bf16.gmra.mxu0 %v1292
      %v1558 = vpop.f32.mrf.mxu0
      %v1559 = vadd.f32 0.0, %v1558
      %v1560 = vpop.f32.mrf.mxu0
      %v1561 = vpop.f32.mrf.mxu0
      %v1562 = vadd.f32 0.0, %v1561
      %v1563 = vpop.f32.mrf.mxu0
      %1564 = vmatprep.mubr.bf16.mxu0 %v1295
      %1565 = vmatmul.mubr.bf16.gmra.mxu0 %v1294
      %v1566 = vpop.f32.mrf.mxu0
      %v1567 = vadd.f32 0.0, %v1566
      %v1568 = vpop.f32.mrf.mxu0
      %v1569 = vpop.f32.mrf.mxu0
      %v1570 = vadd.f32 0.0, %v1569
      %v1571 = vpop.f32.mrf.mxu0
      %1572 = vmatprep.mubr.bf16.mxu0 %v1297
      %1573 = vmatmul.mubr.bf16.gmra.mxu0 %v1296
      %v1574 = vpop.f32.mrf.mxu0
      %v1575 = vadd.f32 0.0, %v1574
      %v1576 = vpop.f32.mrf.mxu0
      %v1577 = vpop.f32.mrf.mxu0
      %v1578 = vadd.f32 0.0, %v1577
      %v1579 = vpop.f32.mrf.mxu0
      %1580 = vmatprep.mubr.bf16.mxu0 %v1299
      %1581 = vmatmul.mubr.bf16.gmra.mxu0 %v1298
      %v1582 = vpop.f32.mrf.mxu0
      %v1583 = vadd.f32 0.0, %v1582
      %v1584 = vpop.f32.mrf.mxu0
      %v1585 = vpop.f32.mrf.mxu0
      %v1586 = vadd.f32 0.0, %v1585
      %v1587 = vpop.f32.mrf.mxu0
      %1588 = vdwg.mxu0
      %v1590 = vlaneseq
      %v1591 = vshrl.u32 %v1590, 7
      %v1592 = vsub.s32 0, %v1591
      %v1593 = vrot.slane %v1107, %v1592
      %v1595 = vadd.f32 %v1593, %v1463
      %v1596 = vadd.f32 %v1593, %v1466
      %v1597 = vadd.f32 %v1593, %v1471
      %v1598 = vadd.f32 %v1593, %v1474
      %v1599 = vadd.f32 %v1593, %v1479
      %v1600 = vadd.f32 %v1593, %v1482
      %v1601 = vadd.f32 %v1593, %v1487
      %v1602 = vadd.f32 %v1593, %v1490
      %v1603 = vadd.f32 %v1593, %v1495
      %v1604 = vadd.f32 %v1593, %v1498
      %v1605 = vadd.f32 %v1593, %v1503
      %v1606 = vadd.f32 %v1593, %v1506
      %v1607 = vadd.f32 %v1593, %v1511
      %v1608 = vadd.f32 %v1593, %v1514
      %v1609 = vadd.f32 %v1593, %v1519
      %v1610 = vadd.f32 %v1593, %v1522
      %v1611 = vadd.f32 %v1593, %v1527
      %v1612 = vadd.f32 %v1593, %v1530
      %v1613 = vadd.f32 %v1593, %v1535
      %v1614 = vadd.f32 %v1593, %v1538
      %v1615 = vadd.f32 %v1593, %v1543
      %v1616 = vadd.f32 %v1593, %v1546
      %v1617 = vadd.f32 %v1593, %v1551
      %v1618 = vadd.f32 %v1593, %v1554
      %v1619 = vadd.f32 %v1593, %v1559
      %v1620 = vadd.f32 %v1593, %v1562
      %v1621 = vadd.f32 %v1593, %v1567
      %v1622 = vadd.f32 %v1593, %v1570
      %v1623 = vadd.f32 %v1593, %v1575
      %v1624 = vadd.f32 %v1593, %v1578
      %v1625 = vadd.f32 %v1593, %v1583
      %v1626 = vadd.f32 %v1593, %v1586
      %v1627 = vld [vmem:[%s177] sm:$0xff]
      %v1628 = vld [vmem:[%s177 + $0x8] sm:$0xff]
      %v1629 = vld [vmem:[%s177 + $0x10] sm:$0xff]
      %v1630 = vld [vmem:[%s177 + $0x18] sm:$0xff]
      %v1631 = vld [vmem:[%s177 + $0x20] sm:$0xff]
      %v1632 = vld [vmem:[%s177 + $0x28] sm:$0xff]
      %v1633 = vld [vmem:[%s177 + $0x30] sm:$0xff]
      %v1634 = vld [vmem:[%s177 + $0x38] sm:$0xff]
      %v1635 = vld [vmem:[%s177 + $0x40] sm:$0xff]
      %v1636 = vld [vmem:[%s177 + $0x48] sm:$0xff]
      %v1637 = vld [vmem:[%s177 + $0x50] sm:$0xff]
      %v1638 = vld [vmem:[%s177 + $0x58] sm:$0xff]
      %v1639 = vld [vmem:[%s177 + $0x60] sm:$0xff]
      %v1640 = vld [vmem:[%s177 + $0x68] sm:$0xff]
      %v1641 = vld [vmem:[%s177 + $0x70] sm:$0xff]
      %v1642 = vld [vmem:[%s177 + $0x78] sm:$0xff]
      %v1643 = vld [vmem:[%s177 + $0x80] sm:$0xff]
      %v1644 = vld [vmem:[%s177 + $0x88] sm:$0xff]
      %v1645 = vld [vmem:[%s177 + $0x90] sm:$0xff]
      %v1646 = vld [vmem:[%s177 + $0x98] sm:$0xff]
      %v1647 = vld [vmem:[%s177 + $0xa0] sm:$0xff]
      %v1648 = vld [vmem:[%s177 + $0xa8] sm:$0xff]
      %v1649 = vld [vmem:[%s177 + $0xb0] sm:$0xff]
      %v1650 = vld [vmem:[%s177 + $0xb8] sm:$0xff]
      %v1651 = vld [vmem:[%s177 + $0xc0] sm:$0xff]
      %v1652 = vld [vmem:[%s177 + $0xc8] sm:$0xff]
      %v1653 = vld [vmem:[%s177 + $0xd0] sm:$0xff]
      %v1654 = vld [vmem:[%s177 + $0xd8] sm:$0xff]
      %v1655 = vld [vmem:[%s177 + $0xe0] sm:$0xff]
      %v1656 = vld [vmem:[%s177 + $0xe8] sm:$0xff]
      %v1657 = vld [vmem:[%s177 + $0xf0] sm:$0xff]
      %v1658 = vld [vmem:[%s177 + $0xf8] sm:$0xff]
      %s1659 = scalar_lea.vmem %s1, 128
      %v1660 = vld [vmem:[%s1659] sm:$0xf]
      %v1661 = vld [vmem:[%s1659 + $0x4] sm:$0xf]
      %v1662 = vld [vmem:[%s1659 + $0x8] sm:$0xf]
      %v1663 = vld [vmem:[%s1659 + $0xc] sm:$0xf]
      %v1664 = vld [vmem:[%s1659 + $0x10] sm:$0xf]
      %v1665 = vld [vmem:[%s1659 + $0x14] sm:$0xf]
      %v1666 = vld [vmem:[%s1659 + $0x18] sm:$0xf]
      %v1667 = vld [vmem:[%s1659 + $0x1c] sm:$0xf]
      %v1668 = vld [vmem:[%s1659 + $0x20] sm:$0xf]
      %v1669 = vld [vmem:[%s1659 + $0x24] sm:$0xf]
      %v1670 = vld [vmem:[%s1659 + $0x28] sm:$0xf]
      %v1671 = vld [vmem:[%s1659 + $0x2c] sm:$0xf]
      %v1672 = vld [vmem:[%s1659 + $0x30] sm:$0xf]
      %v1673 = vld [vmem:[%s1659 + $0x34] sm:$0xf]
      %v1674 = vld [vmem:[%s1659 + $0x38] sm:$0xf]
      %v1675 = vld [vmem:[%s1659 + $0x3c] sm:$0xf]
      %v1676 = vld [vmem:[%s1659 + $0x40] sm:$0xf]
      %v1677 = vld [vmem:[%s1659 + $0x44] sm:$0xf]
      %v1678 = vld [vmem:[%s1659 + $0x48] sm:$0xf]
      %v1679 = vld [vmem:[%s1659 + $0x4c] sm:$0xf]
      %v1680 = vld [vmem:[%s1659 + $0x50] sm:$0xf]
      %v1681 = vld [vmem:[%s1659 + $0x54] sm:$0xf]
      %v1682 = vld [vmem:[%s1659 + $0x58] sm:$0xf]
      %v1683 = vld [vmem:[%s1659 + $0x5c] sm:$0xf]
      %v1684 = vld [vmem:[%s1659 + $0x60] sm:$0xf]
      %v1685 = vld [vmem:[%s1659 + $0x64] sm:$0xf]
      %v1686 = vld [vmem:[%s1659 + $0x68] sm:$0xf]
      %v1687 = vld [vmem:[%s1659 + $0x6c] sm:$0xf]
      %v1688 = vld [vmem:[%s1659 + $0x70] sm:$0xf]
      %v1689 = vld [vmem:[%s1659 + $0x74] sm:$0xf]
      %v1690 = vld [vmem:[%s1659 + $0x78] sm:$0xf]
      %v1691 = vld [vmem:[%s1659 + $0x7c] sm:$0xf]
      %v1724 = vunpack.c.l.b16 %v1627
      %v1725 = vunpack.c.h.b16 %v1627
      %v1726 = vunpack.c.l.b16 %v1628
      %v1727 = vunpack.c.h.b16 %v1628
      %v1728 = vunpack.c.l.b16 %v1629
      %v1729 = vunpack.c.h.b16 %v1629
      %v1730 = vunpack.c.l.b16 %v1630
      %v1731 = vunpack.c.h.b16 %v1630
      %v1732 = vunpack.c.l.b16 %v1631
      %v1733 = vunpack.c.h.b16 %v1631
      %v1734 = vunpack.c.l.b16 %v1632
      %v1735 = vunpack.c.h.b16 %v1632
      %v1736 = vunpack.c.l.b16 %v1633
      %v1737 = vunpack.c.h.b16 %v1633
      %v1738 = vunpack.c.l.b16 %v1634
      %v1739 = vunpack.c.h.b16 %v1634
      %v1740 = vunpack.c.l.b16 %v1635
      %v1741 = vunpack.c.h.b16 %v1635
      %v1742 = vunpack.c.l.b16 %v1636
      %v1743 = vunpack.c.h.b16 %v1636
      %v1744 = vunpack.c.l.b16 %v1637
      %v1745 = vunpack.c.h.b16 %v1637
      %v1746 = vunpack.c.l.b16 %v1638
      %v1747 = vunpack.c.h.b16 %v1638
      %v1748 = vunpack.c.l.b16 %v1639
      %v1749 = vunpack.c.h.b16 %v1639
      %v1750 = vunpack.c.l.b16 %v1640
      %v1751 = vunpack.c.h.b16 %v1640
      %v1752 = vunpack.c.l.b16 %v1641
      %v1753 = vunpack.c.h.b16 %v1641
      %v1754 = vunpack.c.l.b16 %v1642
      %v1755 = vunpack.c.h.b16 %v1642
      %v1756 = vunpack.c.l.b16 %v1643
      %v1757 = vunpack.c.h.b16 %v1643
      %v1758 = vunpack.c.l.b16 %v1644
      %v1759 = vunpack.c.h.b16 %v1644
      %v1760 = vunpack.c.l.b16 %v1645
      %v1761 = vunpack.c.h.b16 %v1645
      %v1762 = vunpack.c.l.b16 %v1646
      %v1763 = vunpack.c.h.b16 %v1646
      %v1764 = vunpack.c.l.b16 %v1647
      %v1765 = vunpack.c.h.b16 %v1647
      %v1766 = vunpack.c.l.b16 %v1648
      %v1767 = vunpack.c.h.b16 %v1648
      %v1768 = vunpack.c.l.b16 %v1649
      %v1769 = vunpack.c.h.b16 %v1649
      %v1770 = vunpack.c.l.b16 %v1650
      %v1771 = vunpack.c.h.b16 %v1650
      %v1772 = vunpack.c.l.b16 %v1651
      %v1773 = vunpack.c.h.b16 %v1651
      %v1774 = vunpack.c.l.b16 %v1652
      %v1775 = vunpack.c.h.b16 %v1652
      %v1776 = vunpack.c.l.b16 %v1653
      %v1777 = vunpack.c.h.b16 %v1653
      %v1778 = vunpack.c.l.b16 %v1654
      %v1779 = vunpack.c.h.b16 %v1654
      %v1780 = vunpack.c.l.b16 %v1655
      %v1781 = vunpack.c.h.b16 %v1655
      %v1782 = vunpack.c.l.b16 %v1656
      %v1783 = vunpack.c.h.b16 %v1656
      %v1784 = vunpack.c.l.b16 %v1657
      %v1785 = vunpack.c.h.b16 %v1657
      %v1786 = vunpack.c.l.b16 %v1658
      %v1787 = vunpack.c.h.b16 %v1658
      %v1788 = vpack.c.b16 %v1726, %v1724
      %v1789 = vpack.c.b16 %v1727, %v1725
      %v1790 = vpack.c.b16 %v1730, %v1728
      %v1791 = vpack.c.b16 %v1731, %v1729
      %v1792 = vpack.c.b16 %v1734, %v1732
      %v1793 = vpack.c.b16 %v1735, %v1733
      %v1794 = vpack.c.b16 %v1738, %v1736
      %v1795 = vpack.c.b16 %v1739, %v1737
      %v1796 = vpack.c.b16 %v1742, %v1740
      %v1797 = vpack.c.b16 %v1743, %v1741
      %v1798 = vpack.c.b16 %v1746, %v1744
      %v1799 = vpack.c.b16 %v1747, %v1745
      %v1800 = vpack.c.b16 %v1750, %v1748
      %v1801 = vpack.c.b16 %v1751, %v1749
      %v1802 = vpack.c.b16 %v1754, %v1752
      %v1803 = vpack.c.b16 %v1755, %v1753
      %v1804 = vpack.c.b16 %v1758, %v1756
      %v1805 = vpack.c.b16 %v1759, %v1757
      %v1806 = vpack.c.b16 %v1762, %v1760
      %v1807 = vpack.c.b16 %v1763, %v1761
      %v1808 = vpack.c.b16 %v1766, %v1764
      %v1809 = vpack.c.b16 %v1767, %v1765
      %v1810 = vpack.c.b16 %v1770, %v1768
      %v1811 = vpack.c.b16 %v1771, %v1769
      %v1812 = vpack.c.b16 %v1774, %v1772
      %v1813 = vpack.c.b16 %v1775, %v1773
      %v1814 = vpack.c.b16 %v1778, %v1776
      %v1815 = vpack.c.b16 %v1779, %v1777
      %v1816 = vpack.c.b16 %v1782, %v1780
      %v1817 = vpack.c.b16 %v1783, %v1781
      %v1818 = vpack.c.b16 %v1786, %v1784
      %v1819 = vpack.c.b16 %v1787, %v1785
      %v1884 = vunpack.c.l.b16 %v1660
      %v1885 = vunpack.c.l.b16 %v1661
      %v1886 = vunpack.c.l.b16 %v1662
      %v1887 = vunpack.c.l.b16 %v1663
      %v1888 = vunpack.c.l.b16 %v1664
      %v1889 = vunpack.c.l.b16 %v1665
      %v1890 = vunpack.c.l.b16 %v1666
      %v1891 = vunpack.c.l.b16 %v1667
      %v1892 = vunpack.c.l.b16 %v1668
      %v1893 = vunpack.c.l.b16 %v1669
      %v1894 = vunpack.c.l.b16 %v1670
      %v1895 = vunpack.c.l.b16 %v1671
      %v1896 = vunpack.c.l.b16 %v1672
      %v1897 = vunpack.c.l.b16 %v1673
      %v1898 = vunpack.c.l.b16 %v1674
      %v1899 = vunpack.c.l.b16 %v1675
      %v1900 = vunpack.c.l.b16 %v1676
      %v1901 = vunpack.c.l.b16 %v1677
      %v1902 = vunpack.c.l.b16 %v1678
      %v1903 = vunpack.c.l.b16 %v1679
      %v1904 = vunpack.c.l.b16 %v1680
      %v1905 = vunpack.c.l.b16 %v1681
      %v1906 = vunpack.c.l.b16 %v1682
      %v1907 = vunpack.c.l.b16 %v1683
      %v1908 = vunpack.c.l.b16 %v1684
      %v1909 = vunpack.c.l.b16 %v1685
      %v1910 = vunpack.c.l.b16 %v1686
      %v1911 = vunpack.c.l.b16 %v1687
      %v1912 = vunpack.c.l.b16 %v1688
      %v1913 = vunpack.c.l.b16 %v1689
      %v1914 = vunpack.c.l.b16 %v1690
      %v1915 = vunpack.c.l.b16 %v1691
      %v1916 = vpack.c.b16 %v1885, %v1884
      %v1917 = vpack.c.b16 %v1887, %v1886
      %v1918 = vpack.c.b16 %v1889, %v1888
      %v1919 = vpack.c.b16 %v1891, %v1890
      %v1920 = vpack.c.b16 %v1893, %v1892
      %v1921 = vpack.c.b16 %v1895, %v1894
      %v1922 = vpack.c.b16 %v1897, %v1896
      %v1923 = vpack.c.b16 %v1899, %v1898
      %v1924 = vpack.c.b16 %v1901, %v1900
      %v1925 = vpack.c.b16 %v1903, %v1902
      %v1926 = vpack.c.b16 %v1905, %v1904
      %v1927 = vpack.c.b16 %v1907, %v1906
      %v1928 = vpack.c.b16 %v1909, %v1908
      %v1929 = vpack.c.b16 %v1911, %v1910
      %v1930 = vpack.c.b16 %v1913, %v1912
      %v1931 = vpack.c.b16 %v1915, %v1914
      %1948 = vmatprep.subr.bf16.mxu0 0
      %1949 = vmatpush1.bf16.msra.mxu0 %v1923
      %1950 = vmatprep.subr.bf16.mxu0 0
      %1951 = vmatpush1.bf16.msra.mxu0 %v1922
      %1952 = vmatprep.subr.bf16.mxu0 0
      %1953 = vmatpush1.bf16.msra.mxu0 %v1921
      %1954 = vmatprep.subr.bf16.mxu0 0
      %1955 = vmatpush1.bf16.msra.mxu0 %v1920
      %1956 = vmatprep.subr.bf16.mxu0 0
      %1957 = vmatpush1.bf16.msra.mxu0 %v1919
      %1958 = vmatprep.subr.bf16.mxu0 0
      %1959 = vmatpush1.bf16.msra.mxu0 %v1918
      %1960 = vmatprep.subr.bf16.mxu0 0
      %1961 = vmatpush1.bf16.msra.mxu0 %v1917
      %1962 = vmatprep.subr.bf16.mxu0 0
      %1963 = vmatpush1.bf16.msra.mxu0 %v1916
      %1964 = vmatprep.subr.bf16.mxu0 0
      %1965 = vmatpush2.bf16.msra.mxu0 %v1931
      %1966 = vmatprep.subr.bf16.mxu0 0
      %1967 = vmatpush2.bf16.msra.mxu0 %v1930
      %1968 = vmatprep.subr.bf16.mxu0 0
      %1969 = vmatpush2.bf16.msra.mxu0 %v1929
      %1970 = vmatprep.subr.bf16.mxu0 0
      %1971 = vmatpush2.bf16.msra.mxu0 %v1928
      %1972 = vmatprep.subr.bf16.mxu0 0
      %1973 = vmatpush2.bf16.msra.mxu0 %v1927
      %1974 = vmatprep.subr.bf16.mxu0 0
      %1975 = vmatpush2.bf16.msra.mxu0 %v1926
      %1976 = vmatprep.subr.bf16.mxu0 0
      %1977 = vmatpush2.bf16.msra.mxu0 %v1925
      %1978 = vmatprep.subr.bf16.mxu0 0
      %1979 = vmatpush2.bf16.msra.mxu0 %v1924
      %1980 = vmatprep.mubr.bf16.mxu0 %v1789
      %1981 = vmatmul.mubr.bf16.gmra.mxu0 %v1788
      %v1982 = vpop.f32.mrf.mxu0
      %v1983 = vadd.f32 0.0, %v1982
      %v1984 = vpop.f32.mrf.mxu0
      %v1985 = vpop.f32.mrf.mxu0
      %v1986 = vadd.f32 0.0, %v1985
      %v1987 = vpop.f32.mrf.mxu0
      %1988 = vmatprep.mubr.bf16.mxu0 %v1791
      %1989 = vmatmul.mubr.bf16.gmra.mxu0 %v1790
      %v1990 = vpop.f32.mrf.mxu0
      %v1991 = vadd.f32 0.0, %v1990
      %v1992 = vpop.f32.mrf.mxu0
      %v1993 = vpop.f32.mrf.mxu0
      %v1994 = vadd.f32 0.0, %v1993
      %v1995 = vpop.f32.mrf.mxu0
      %1996 = vmatprep.mubr.bf16.mxu0 %v1793
      %1997 = vmatmul.mubr.bf16.gmra.mxu0 %v1792
      %v1998 = vpop.f32.mrf.mxu0
      %v1999 = vadd.f32 0.0, %v1998
      %v2000 = vpop.f32.mrf.mxu0
      %v2001 = vpop.f32.mrf.mxu0
      %v2002 = vadd.f32 0.0, %v2001
      %v2003 = vpop.f32.mrf.mxu0
      %2004 = vmatprep.mubr.bf16.mxu0 %v1795
      %2005 = vmatmul.mubr.bf16.gmra.mxu0 %v1794
      %v2006 = vpop.f32.mrf.mxu0
      %v2007 = vadd.f32 0.0, %v2006
      %v2008 = vpop.f32.mrf.mxu0
      %v2009 = vpop.f32.mrf.mxu0
      %v2010 = vadd.f32 0.0, %v2009
      %v2011 = vpop.f32.mrf.mxu0
      %2012 = vmatprep.mubr.bf16.mxu0 %v1797
      %2013 = vmatmul.mubr.bf16.gmra.mxu0 %v1796
      %v2014 = vpop.f32.mrf.mxu0
      %v2015 = vadd.f32 0.0, %v2014
      %v2016 = vpop.f32.mrf.mxu0
      %v2017 = vpop.f32.mrf.mxu0
      %v2018 = vadd.f32 0.0, %v2017
      %v2019 = vpop.f32.mrf.mxu0
      %2020 = vmatprep.mubr.bf16.mxu0 %v1799
      %2021 = vmatmul.mubr.bf16.gmra.mxu0 %v1798
      %v2022 = vpop.f32.mrf.mxu0
      %v2023 = vadd.f32 0.0, %v2022
      %v2024 = vpop.f32.mrf.mxu0
      %v2025 = vpop.f32.mrf.mxu0
      %v2026 = vadd.f32 0.0, %v2025
      %v2027 = vpop.f32.mrf.mxu0
      %2028 = vmatprep.mubr.bf16.mxu0 %v1801
      %2029 = vmatmul.mubr.bf16.gmra.mxu0 %v1800
      %v2030 = vpop.f32.mrf.mxu0
      %v2031 = vadd.f32 0.0, %v2030
      %v2032 = vpop.f32.mrf.mxu0
      %v2033 = vpop.f32.mrf.mxu0
      %v2034 = vadd.f32 0.0, %v2033
      %v2035 = vpop.f32.mrf.mxu0
      %2036 = vmatprep.mubr.bf16.mxu0 %v1803
      %2037 = vmatmul.mubr.bf16.gmra.mxu0 %v1802
      %v2038 = vpop.f32.mrf.mxu0
      %v2039 = vadd.f32 0.0, %v2038
      %v2040 = vpop.f32.mrf.mxu0
      %v2041 = vpop.f32.mrf.mxu0
      %v2042 = vadd.f32 0.0, %v2041
      %v2043 = vpop.f32.mrf.mxu0
      %2044 = vmatprep.mubr.bf16.mxu0 %v1805
      %2045 = vmatmul.mubr.bf16.gmra.mxu0 %v1804
      %v2046 = vpop.f32.mrf.mxu0
      %v2047 = vadd.f32 0.0, %v2046
      %v2048 = vpop.f32.mrf.mxu0
      %v2049 = vpop.f32.mrf.mxu0
      %v2050 = vadd.f32 0.0, %v2049
      %v2051 = vpop.f32.mrf.mxu0
      %2052 = vmatprep.mubr.bf16.mxu0 %v1807
      %2053 = vmatmul.mubr.bf16.gmra.mxu0 %v1806
      %v2054 = vpop.f32.mrf.mxu0
      %v2055 = vadd.f32 0.0, %v2054
      %v2056 = vpop.f32.mrf.mxu0
      %v2057 = vpop.f32.mrf.mxu0
      %v2058 = vadd.f32 0.0, %v2057
      %v2059 = vpop.f32.mrf.mxu0
      %2060 = vmatprep.mubr.bf16.mxu0 %v1809
      %2061 = vmatmul.mubr.bf16.gmra.mxu0 %v1808
      %v2062 = vpop.f32.mrf.mxu0
      %v2063 = vadd.f32 0.0, %v2062
      %v2064 = vpop.f32.mrf.mxu0
      %v2065 = vpop.f32.mrf.mxu0
      %v2066 = vadd.f32 0.0, %v2065
      %v2067 = vpop.f32.mrf.mxu0
      %2068 = vmatprep.mubr.bf16.mxu0 %v1811
      %2069 = vmatmul.mubr.bf16.gmra.mxu0 %v1810
      %v2070 = vpop.f32.mrf.mxu0
      %v2071 = vadd.f32 0.0, %v2070
      %v2072 = vpop.f32.mrf.mxu0
      %v2073 = vpop.f32.mrf.mxu0
      %v2074 = vadd.f32 0.0, %v2073
      %v2075 = vpop.f32.mrf.mxu0
      %2076 = vmatprep.mubr.bf16.mxu0 %v1813
      %2077 = vmatmul.mubr.bf16.gmra.mxu0 %v1812
      %v2078 = vpop.f32.mrf.mxu0
      %v2079 = vadd.f32 0.0, %v2078
      %v2080 = vpop.f32.mrf.mxu0
      %v2081 = vpop.f32.mrf.mxu0
      %v2082 = vadd.f32 0.0, %v2081
      %v2083 = vpop.f32.mrf.mxu0
      %2084 = vmatprep.mubr.bf16.mxu0 %v1815
      %2085 = vmatmul.mubr.bf16.gmra.mxu0 %v1814
      %v2086 = vpop.f32.mrf.mxu0
      %v2087 = vadd.f32 0.0, %v2086
      %v2088 = vpop.f32.mrf.mxu0
      %v2089 = vpop.f32.mrf.mxu0
      %v2090 = vadd.f32 0.0, %v2089
      %v2091 = vpop.f32.mrf.mxu0
      %2092 = vmatprep.mubr.bf16.mxu0 %v1817
      %2093 = vmatmul.mubr.bf16.gmra.mxu0 %v1816
      %v2094 = vpop.f32.mrf.mxu0
      %v2095 = vadd.f32 0.0, %v2094
      %v2096 = vpop.f32.mrf.mxu0
      %v2097 = vpop.f32.mrf.mxu0
      %v2098 = vadd.f32 0.0, %v2097
      %v2099 = vpop.f32.mrf.mxu0
      %2100 = vmatprep.mubr.bf16.mxu0 %v1819
      %2101 = vmatmul.mubr.bf16.gmra.mxu0 %v1818
      %v2102 = vpop.f32.mrf.mxu0
      %v2103 = vadd.f32 0.0, %v2102
      %v2104 = vpop.f32.mrf.mxu0
      %v2105 = vpop.f32.mrf.mxu0
      %v2106 = vadd.f32 0.0, %v2105
      %v2107 = vpop.f32.mrf.mxu0
      %2108 = vdwg.mxu0
      %v2109 = vadd.f32 %v1595, %v1983
      %v2110 = vadd.f32 %v1596, %v1986
      %v2111 = vadd.f32 %v1597, %v1991
      %v2112 = vadd.f32 %v1598, %v1994
      %v2113 = vadd.f32 %v1599, %v1999
      %v2114 = vadd.f32 %v1600, %v2002
      %v2115 = vadd.f32 %v1601, %v2007
      %v2116 = vadd.f32 %v1602, %v2010
      %v2117 = vadd.f32 %v1603, %v2015
      %v2118 = vadd.f32 %v1604, %v2018
      %v2119 = vadd.f32 %v1605, %v2023
      %v2120 = vadd.f32 %v1606, %v2026
      %v2121 = vadd.f32 %v1607, %v2031
      %v2122 = vadd.f32 %v1608, %v2034
      %v2123 = vadd.f32 %v1609, %v2039
      %v2124 = vadd.f32 %v1610, %v2042
      %v2125 = vadd.f32 %v1611, %v2047
      %v2126 = vadd.f32 %v1612, %v2050
      %v2127 = vadd.f32 %v1613, %v2055
      %v2128 = vadd.f32 %v1614, %v2058
      %v2129 = vadd.f32 %v1615, %v2063
      %v2130 = vadd.f32 %v1616, %v2066
      %v2131 = vadd.f32 %v1617, %v2071
      %v2132 = vadd.f32 %v1618, %v2074
      %v2133 = vadd.f32 %v1619, %v2079
      %v2134 = vadd.f32 %v1620, %v2082
      %v2135 = vadd.f32 %v1621, %v2087
      %v2136 = vadd.f32 %v1622, %v2090
      %v2137 = vadd.f32 %v1623, %v2095
      %v2138 = vadd.f32 %v1624, %v2098
      %v2139 = vadd.f32 %v1625, %v2103
      %v2140 = vadd.f32 %v1626, %v2106
      %s2141 = scalar_lea.vmem [#allocation2], 32
      %v2142 = vld [vmem:[%s2141] sm:$0xff]
      %v2143 = vld [vmem:[%s2141 + $0x8] sm:$0xff]
      %v2144 = vld [vmem:[%s2141 + $0x10] sm:$0xff]
      %v2145 = vld [vmem:[%s2141 + $0x18] sm:$0xff]
      %v2146 = vld [vmem:[%s2141 + $0x20] sm:$0xff]
      %v2147 = vld [vmem:[%s2141 + $0x28] sm:$0xff]
      %v2148 = vld [vmem:[%s2141 + $0x30] sm:$0xff]
      %v2149 = vld [vmem:[%s2141 + $0x38] sm:$0xff]
      %v2150 = vld [vmem:[%s2141 + $0x40] sm:$0xff]
      %v2151 = vld [vmem:[%s2141 + $0x48] sm:$0xff]
      %v2152 = vld [vmem:[%s2141 + $0x50] sm:$0xff]
      %v2153 = vld [vmem:[%s2141 + $0x58] sm:$0xff]
      %v2154 = vld [vmem:[%s2141 + $0x60] sm:$0xff]
      %v2155 = vld [vmem:[%s2141 + $0x68] sm:$0xff]
      %v2156 = vld [vmem:[%s2141 + $0x70] sm:$0xff]
      %v2157 = vld [vmem:[%s2141 + $0x78] sm:$0xff]
      %v2158 = vld [vmem:[%s2141 + $0x80] sm:$0xff]
      %v2159 = vld [vmem:[%s2141 + $0x88] sm:$0xff]
      %v2160 = vld [vmem:[%s2141 + $0x90] sm:$0xff]
      %v2161 = vld [vmem:[%s2141 + $0x98] sm:$0xff]
      %v2162 = vld [vmem:[%s2141 + $0xa0] sm:$0xff]
      %v2163 = vld [vmem:[%s2141 + $0xa8] sm:$0xff]
      %v2164 = vld [vmem:[%s2141 + $0xb0] sm:$0xff]
      %v2165 = vld [vmem:[%s2141 + $0xb8] sm:$0xff]
      %v2166 = vld [vmem:[%s2141 + $0xc0] sm:$0xff]
      %v2167 = vld [vmem:[%s2141 + $0xc8] sm:$0xff]
      %v2168 = vld [vmem:[%s2141 + $0xd0] sm:$0xff]
      %v2169 = vld [vmem:[%s2141 + $0xd8] sm:$0xff]
      %v2170 = vld [vmem:[%s2141 + $0xe0] sm:$0xff]
      %v2171 = vld [vmem:[%s2141 + $0xe8] sm:$0xff]
      %v2172 = vld [vmem:[%s2141 + $0xf0] sm:$0xff]
      %v2173 = vld [vmem:[%s2141 + $0xf8] sm:$0xff]
      %s2174 = scalar_lea.vmem %s1, 256
      %v2175 = vld [vmem:[%s2174] sm:$0xf]
      %v2176 = vld [vmem:[%s2174 + $0x4] sm:$0xf]
      %v2177 = vld [vmem:[%s2174 + $0x8] sm:$0xf]
      %v2178 = vld [vmem:[%s2174 + $0xc] sm:$0xf]
      %v2179 = vld [vmem:[%s2174 + $0x10] sm:$0xf]
      %v2180 = vld [vmem:[%s2174 + $0x14] sm:$0xf]
      %v2181 = vld [vmem:[%s2174 + $0x18] sm:$0xf]
      %v2182 = vld [vmem:[%s2174 + $0x1c] sm:$0xf]
      %v2183 = vld [vmem:[%s2174 + $0x20] sm:$0xf]
      %v2184 = vld [vmem:[%s2174 + $0x24] sm:$0xf]
      %v2185 = vld [vmem:[%s2174 + $0x28] sm:$0xf]
      %v2186 = vld [vmem:[%s2174 + $0x2c] sm:$0xf]
      %v2187 = vld [vmem:[%s2174 + $0x30] sm:$0xf]
      %v2188 = vld [vmem:[%s2174 + $0x34] sm:$0xf]
      %v2189 = vld [vmem:[%s2174 + $0x38] sm:$0xf]
      %v2190 = vld [vmem:[%s2174 + $0x3c] sm:$0xf]
      %v2191 = vld [vmem:[%s2174 + $0x40] sm:$0xf]
      %v2192 = vld [vmem:[%s2174 + $0x44] sm:$0xf]
      %v2193 = vld [vmem:[%s2174 + $0x48] sm:$0xf]
      %v2194 = vld [vmem:[%s2174 + $0x4c] sm:$0xf]
      %v2195 = vld [vmem:[%s2174 + $0x50] sm:$0xf]
      %v2196 = vld [vmem:[%s2174 + $0x54] sm:$0xf]
      %v2197 = vld [vmem:[%s2174 + $0x58] sm:$0xf]
      %v2198 = vld [vmem:[%s2174 + $0x5c] sm:$0xf]
      %v2199 = vld [vmem:[%s2174 + $0x60] sm:$0xf]
      %v2200 = vld [vmem:[%s2174 + $0x64] sm:$0xf]
      %v2201 = vld [vmem:[%s2174 + $0x68] sm:$0xf]
      %v2202 = vld [vmem:[%s2174 + $0x6c] sm:$0xf]
      %v2203 = vld [vmem:[%s2174 + $0x70] sm:$0xf]
      %v2204 = vld [vmem:[%s2174 + $0x74] sm:$0xf]
      %v2205 = vld [vmem:[%s2174 + $0x78] sm:$0xf]
      %v2206 = vld [vmem:[%s2174 + $0x7c] sm:$0xf]
      %v2239 = vunpack.c.l.b16 %v2142
      %v2240 = vunpack.c.h.b16 %v2142
      %v2241 = vunpack.c.l.b16 %v2143
      %v2242 = vunpack.c.h.b16 %v2143
      %v2243 = vunpack.c.l.b16 %v2144
      %v2244 = vunpack.c.h.b16 %v2144
      %v2245 = vunpack.c.l.b16 %v2145
      %v2246 = vunpack.c.h.b16 %v2145
      %v2247 = vunpack.c.l.b16 %v2146
      %v2248 = vunpack.c.h.b16 %v2146
      %v2249 = vunpack.c.l.b16 %v2147
      %v2250 = vunpack.c.h.b16 %v2147
      %v2251 = vunpack.c.l.b16 %v2148
      %v2252 = vunpack.c.h.b16 %v2148
      %v2253 = vunpack.c.l.b16 %v2149
      %v2254 = vunpack.c.h.b16 %v2149
      %v2255 = vunpack.c.l.b16 %v2150
      %v2256 = vunpack.c.h.b16 %v2150
      %v2257 = vunpack.c.l.b16 %v2151
      %v2258 = vunpack.c.h.b16 %v2151
      %v2259 = vunpack.c.l.b16 %v2152
      %v2260 = vunpack.c.h.b16 %v2152
      %v2261 = vunpack.c.l.b16 %v2153
      %v2262 = vunpack.c.h.b16 %v2153
      %v2263 = vunpack.c.l.b16 %v2154
      %v2264 = vunpack.c.h.b16 %v2154
      %v2265 = vunpack.c.l.b16 %v2155
      %v2266 = vunpack.c.h.b16 %v2155
      %v2267 = vunpack.c.l.b16 %v2156
      %v2268 = vunpack.c.h.b16 %v2156
      %v2269 = vunpack.c.l.b16 %v2157
      %v2270 = vunpack.c.h.b16 %v2157
      %v2271 = vunpack.c.l.b16 %v2158
      %v2272 = vunpack.c.h.b16 %v2158
      %v2273 = vunpack.c.l.b16 %v2159
      %v2274 = vunpack.c.h.b16 %v2159
      %v2275 = vunpack.c.l.b16 %v2160
      %v2276 = vunpack.c.h.b16 %v2160
      %v2277 = vunpack.c.l.b16 %v2161
      %v2278 = vunpack.c.h.b16 %v2161
      %v2279 = vunpack.c.l.b16 %v2162
      %v2280 = vunpack.c.h.b16 %v2162
      %v2281 = vunpack.c.l.b16 %v2163
      %v2282 = vunpack.c.h.b16 %v2163
      %v2283 = vunpack.c.l.b16 %v2164
      %v2284 = vunpack.c.h.b16 %v2164
      %v2285 = vunpack.c.l.b16 %v2165
      %v2286 = vunpack.c.h.b16 %v2165
      %v2287 = vunpack.c.l.b16 %v2166
      %v2288 = vunpack.c.h.b16 %v2166
      %v2289 = vunpack.c.l.b16 %v2167
      %v2290 = vunpack.c.h.b16 %v2167
      %v2291 = vunpack.c.l.b16 %v2168
      %v2292 = vunpack.c.h.b16 %v2168
      %v2293 = vunpack.c.l.b16 %v2169
      %v2294 = vunpack.c.h.b16 %v2169
      %v2295 = vunpack.c.l.b16 %v2170
      %v2296 = vunpack.c.h.b16 %v2170
      %v2297 = vunpack.c.l.b16 %v2171
      %v2298 = vunpack.c.h.b16 %v2171
      %v2299 = vunpack.c.l.b16 %v2172
      %v2300 = vunpack.c.h.b16 %v2172
      %v2301 = vunpack.c.l.b16 %v2173
      %v2302 = vunpack.c.h.b16 %v2173
      %v2303 = vpack.c.b16 %v2241, %v2239
      %v2304 = vpack.c.b16 %v2242, %v2240
      %v2305 = vpack.c.b16 %v2245, %v2243
      %v2306 = vpack.c.b16 %v2246, %v2244
      %v2307 = vpack.c.b16 %v2249, %v2247
      %v2308 = vpack.c.b16 %v2250, %v2248
      %v2309 = vpack.c.b16 %v2253, %v2251
      %v2310 = vpack.c.b16 %v2254, %v2252
      %v2311 = vpack.c.b16 %v2257, %v2255
      %v2312 = vpack.c.b16 %v2258, %v2256
      %v2313 = vpack.c.b16 %v2261, %v2259
      %v2314 = vpack.c.b16 %v2262, %v2260
      %v2315 = vpack.c.b16 %v2265, %v2263
      %v2316 = vpack.c.b16 %v2266, %v2264
      %v2317 = vpack.c.b16 %v2269, %v2267
      %v2318 = vpack.c.b16 %v2270, %v2268
      %v2319 = vpack.c.b16 %v2273, %v2271
      %v2320 = vpack.c.b16 %v2274, %v2272
      %v2321 = vpack.c.b16 %v2277, %v2275
      %v2322 = vpack.c.b16 %v2278, %v2276
      %v2323 = vpack.c.b16 %v2281, %v2279
      %v2324 = vpack.c.b16 %v2282, %v2280
      %v2325 = vpack.c.b16 %v2285, %v2283
      %v2326 = vpack.c.b16 %v2286, %v2284
      %v2327 = vpack.c.b16 %v2289, %v2287
      %v2328 = vpack.c.b16 %v2290, %v2288
      %v2329 = vpack.c.b16 %v2293, %v2291
      %v2330 = vpack.c.b16 %v2294, %v2292
      %v2331 = vpack.c.b16 %v2297, %v2295
      %v2332 = vpack.c.b16 %v2298, %v2296
      %v2333 = vpack.c.b16 %v2301, %v2299
      %v2334 = vpack.c.b16 %v2302, %v2300
      %v2399 = vunpack.c.l.b16 %v2175
      %v2400 = vunpack.c.l.b16 %v2176
      %v2401 = vunpack.c.l.b16 %v2177
      %v2402 = vunpack.c.l.b16 %v2178
      %v2403 = vunpack.c.l.b16 %v2179
      %v2404 = vunpack.c.l.b16 %v2180
      %v2405 = vunpack.c.l.b16 %v2181
      %v2406 = vunpack.c.l.b16 %v2182
      %v2407 = vunpack.c.l.b16 %v2183
      %v2408 = vunpack.c.l.b16 %v2184
      %v2409 = vunpack.c.l.b16 %v2185
      %v2410 = vunpack.c.l.b16 %v2186
      %v2411 = vunpack.c.l.b16 %v2187
      %v2412 = vunpack.c.l.b16 %v2188
      %v2413 = vunpack.c.l.b16 %v2189
      %v2414 = vunpack.c.l.b16 %v2190
      %v2415 = vunpack.c.l.b16 %v2191
      %v2416 = vunpack.c.l.b16 %v2192
      %v2417 = vunpack.c.l.b16 %v2193
      %v2418 = vunpack.c.l.b16 %v2194
      %v2419 = vunpack.c.l.b16 %v2195
      %v2420 = vunpack.c.l.b16 %v2196
      %v2421 = vunpack.c.l.b16 %v2197
      %v2422 = vunpack.c.l.b16 %v2198
      %v2423 = vunpack.c.l.b16 %v2199
      %v2424 = vunpack.c.l.b16 %v2200
      %v2425 = vunpack.c.l.b16 %v2201
      %v2426 = vunpack.c.l.b16 %v2202
      %v2427 = vunpack.c.l.b16 %v2203
      %v2428 = vunpack.c.l.b16 %v2204
      %v2429 = vunpack.c.l.b16 %v2205
      %v2430 = vunpack.c.l.b16 %v2206
      %v2431 = vpack.c.b16 %v2400, %v2399
      %v2432 = vpack.c.b16 %v2402, %v2401
      %v2433 = vpack.c.b16 %v2404, %v2403
      %v2434 = vpack.c.b16 %v2406, %v2405
      %v2435 = vpack.c.b16 %v2408, %v2407
      %v2436 = vpack.c.b16 %v2410, %v2409
      %v2437 = vpack.c.b16 %v2412, %v2411
      %v2438 = vpack.c.b16 %v2414, %v2413
      %v2439 = vpack.c.b16 %v2416, %v2415
      %v2440 = vpack.c.b16 %v2418, %v2417
      %v2441 = vpack.c.b16 %v2420, %v2419
      %v2442 = vpack.c.b16 %v2422, %v2421
      %v2443 = vpack.c.b16 %v2424, %v2423
      %v2444 = vpack.c.b16 %v2426, %v2425
      %v2445 = vpack.c.b16 %v2428, %v2427
      %v2446 = vpack.c.b16 %v2430, %v2429
      %2463 = vmatprep.subr.bf16.mxu0 0
      %2464 = vmatpush1.bf16.msra.mxu0 %v2438
      %2465 = vmatprep.subr.bf16.mxu0 0
      %2466 = vmatpush1.bf16.msra.mxu0 %v2437
      %2467 = vmatprep.subr.bf16.mxu0 0
      %2468 = vmatpush1.bf16.msra.mxu0 %v2436
      %2469 = vmatprep.subr.bf16.mxu0 0
      %2470 = vmatpush1.bf16.msra.mxu0 %v2435
      %2471 = vmatprep.subr.bf16.mxu0 0
      %2472 = vmatpush1.bf16.msra.mxu0 %v2434
      %2473 = vmatprep.subr.bf16.mxu0 0
      %2474 = vmatpush1.bf16.msra.mxu0 %v2433
      %2475 = vmatprep.subr.bf16.mxu0 0
      %2476 = vmatpush1.bf16.msra.mxu0 %v2432
      %2477 = vmatprep.subr.bf16.mxu0 0
      %2478 = vmatpush1.bf16.msra.mxu0 %v2431
      %2479 = vmatprep.subr.bf16.mxu0 0
      %2480 = vmatpush2.bf16.msra.mxu0 %v2446
      %2481 = vmatprep.subr.bf16.mxu0 0
      %2482 = vmatpush2.bf16.msra.mxu0 %v2445
      %2483 = vmatprep.subr.bf16.mxu0 0
      %2484 = vmatpush2.bf16.msra.mxu0 %v2444
      %2485 = vmatprep.subr.bf16.mxu0 0
      %2486 = vmatpush2.bf16.msra.mxu0 %v2443
      %2487 = vmatprep.subr.bf16.mxu0 0
      %2488 = vmatpush2.bf16.msra.mxu0 %v2442
      %2489 = vmatprep.subr.bf16.mxu0 0
      %2490 = vmatpush2.bf16.msra.mxu0 %v2441
      %2491 = vmatprep.subr.bf16.mxu0 0
      %2492 = vmatpush2.bf16.msra.mxu0 %v2440
      %2493 = vmatprep.subr.bf16.mxu0 0
      %2494 = vmatpush2.bf16.msra.mxu0 %v2439
      %2495 = vmatprep.mubr.bf16.mxu0 %v2304
      %2496 = vmatmul.mubr.bf16.gmra.mxu0 %v2303
      %v2497 = vpop.f32.mrf.mxu0
      %v2498 = vadd.f32 0.0, %v2497
      %v2499 = vpop.f32.mrf.mxu0
      %v2500 = vpop.f32.mrf.mxu0
      %v2501 = vadd.f32 0.0, %v2500
      %v2502 = vpop.f32.mrf.mxu0
      %2503 = vmatprep.mubr.bf16.mxu0 %v2306
      %2504 = vmatmul.mubr.bf16.gmra.mxu0 %v2305
      %v2505 = vpop.f32.mrf.mxu0
      %v2506 = vadd.f32 0.0, %v2505
      %v2507 = vpop.f32.mrf.mxu0
      %v2508 = vpop.f32.mrf.mxu0
      %v2509 = vadd.f32 0.0, %v2508
      %v2510 = vpop.f32.mrf.mxu0
      %2511 = vmatprep.mubr.bf16.mxu0 %v2308
      %2512 = vmatmul.mubr.bf16.gmra.mxu0 %v2307
      %v2513 = vpop.f32.mrf.mxu0
      %v2514 = vadd.f32 0.0, %v2513
      %v2515 = vpop.f32.mrf.mxu0
      %v2516 = vpop.f32.mrf.mxu0
      %v2517 = vadd.f32 0.0, %v2516
      %v2518 = vpop.f32.mrf.mxu0
      %2519 = vmatprep.mubr.bf16.mxu0 %v2310
      %2520 = vmatmul.mubr.bf16.gmra.mxu0 %v2309
      %v2521 = vpop.f32.mrf.mxu0
      %v2522 = vadd.f32 0.0, %v2521
      %v2523 = vpop.f32.mrf.mxu0
      %v2524 = vpop.f32.mrf.mxu0
      %v2525 = vadd.f32 0.0, %v2524
      %v2526 = vpop.f32.mrf.mxu0
      %2527 = vmatprep.mubr.bf16.mxu0 %v2312
      %2528 = vmatmul.mubr.bf16.gmra.mxu0 %v2311
      %v2529 = vpop.f32.mrf.mxu0
      %v2530 = vadd.f32 0.0, %v2529
      %v2531 = vpop.f32.mrf.mxu0
      %v2532 = vpop.f32.mrf.mxu0
      %v2533 = vadd.f32 0.0, %v2532
      %v2534 = vpop.f32.mrf.mxu0
      %2535 = vmatprep.mubr.bf16.mxu0 %v2314
      %2536 = vmatmul.mubr.bf16.gmra.mxu0 %v2313
      %v2537 = vpop.f32.mrf.mxu0
      %v2538 = vadd.f32 0.0, %v2537
      %v2539 = vpop.f32.mrf.mxu0
      %v2540 = vpop.f32.mrf.mxu0
      %v2541 = vadd.f32 0.0, %v2540
      %v2542 = vpop.f32.mrf.mxu0
      %2543 = vmatprep.mubr.bf16.mxu0 %v2316
      %2544 = vmatmul.mubr.bf16.gmra.mxu0 %v2315
      %v2545 = vpop.f32.mrf.mxu0
      %v2546 = vadd.f32 0.0, %v2545
      %v2547 = vpop.f32.mrf.mxu0
      %v2548 = vpop.f32.mrf.mxu0
      %v2549 = vadd.f32 0.0, %v2548
      %v2550 = vpop.f32.mrf.mxu0
      %2551 = vmatprep.mubr.bf16.mxu0 %v2318
      %2552 = vmatmul.mubr.bf16.gmra.mxu0 %v2317
      %v2553 = vpop.f32.mrf.mxu0
      %v2554 = vadd.f32 0.0, %v2553
      %v2555 = vpop.f32.mrf.mxu0
      %v2556 = vpop.f32.mrf.mxu0
      %v2557 = vadd.f32 0.0, %v2556
      %v2558 = vpop.f32.mrf.mxu0
      %2559 = vmatprep.mubr.bf16.mxu0 %v2320
      %2560 = vmatmul.mubr.bf16.gmra.mxu0 %v2319
      %v2561 = vpop.f32.mrf.mxu0
      %v2562 = vadd.f32 0.0, %v2561
      %v2563 = vpop.f32.mrf.mxu0
      %v2564 = vpop.f32.mrf.mxu0
      %v2565 = vadd.f32 0.0, %v2564
      %v2566 = vpop.f32.mrf.mxu0
      %2567 = vmatprep.mubr.bf16.mxu0 %v2322
      %2568 = vmatmul.mubr.bf16.gmra.mxu0 %v2321
      %v2569 = vpop.f32.mrf.mxu0
      %v2570 = vadd.f32 0.0, %v2569
      %v2571 = vpop.f32.mrf.mxu0
      %v2572 = vpop.f32.mrf.mxu0
      %v2573 = vadd.f32 0.0, %v2572
      %v2574 = vpop.f32.mrf.mxu0
      %2575 = vmatprep.mubr.bf16.mxu0 %v2324
      %2576 = vmatmul.mubr.bf16.gmra.mxu0 %v2323
      %v2577 = vpop.f32.mrf.mxu0
      %v2578 = vadd.f32 0.0, %v2577
      %v2579 = vpop.f32.mrf.mxu0
      %v2580 = vpop.f32.mrf.mxu0
      %v2581 = vadd.f32 0.0, %v2580
      %v2582 = vpop.f32.mrf.mxu0
      %2583 = vmatprep.mubr.bf16.mxu0 %v2326
      %2584 = vmatmul.mubr.bf16.gmra.mxu0 %v2325
      %v2585 = vpop.f32.mrf.mxu0
      %v2586 = vadd.f32 0.0, %v2585
      %v2587 = vpop.f32.mrf.mxu0
      %v2588 = vpop.f32.mrf.mxu0
      %v2589 = vadd.f32 0.0, %v2588
      %v2590 = vpop.f32.mrf.mxu0
      %2591 = vmatprep.mubr.bf16.mxu0 %v2328
      %2592 = vmatmul.mubr.bf16.gmra.mxu0 %v2327
      %v2593 = vpop.f32.mrf.mxu0
      %v2594 = vadd.f32 0.0, %v2593
      %v2595 = vpop.f32.mrf.mxu0
      %v2596 = vpop.f32.mrf.mxu0
      %v2597 = vadd.f32 0.0, %v2596
      %v2598 = vpop.f32.mrf.mxu0
      %2599 = vmatprep.mubr.bf16.mxu0 %v2330
      %2600 = vmatmul.mubr.bf16.gmra.mxu0 %v2329
      %v2601 = vpop.f32.mrf.mxu0
      %v2602 = vadd.f32 0.0, %v2601
      %v2603 = vpop.f32.mrf.mxu0
      %v2604 = vpop.f32.mrf.mxu0
      %v2605 = vadd.f32 0.0, %v2604
      %v2606 = vpop.f32.mrf.mxu0
      %2607 = vmatprep.mubr.bf16.mxu0 %v2332
      %2608 = vmatmul.mubr.bf16.gmra.mxu0 %v2331
      %v2609 = vpop.f32.mrf.mxu0
      %v2610 = vadd.f32 0.0, %v2609
      %v2611 = vpop.f32.mrf.mxu0
      %v2612 = vpop.f32.mrf.mxu0
      %v2613 = vadd.f32 0.0, %v2612
      %v2614 = vpop.f32.mrf.mxu0
      %2615 = vmatprep.mubr.bf16.mxu0 %v2334
      %2616 = vmatmul.mubr.bf16.gmra.mxu0 %v2333
      %v2617 = vpop.f32.mrf.mxu0
      %v2618 = vadd.f32 0.0, %v2617
      %v2619 = vpop.f32.mrf.mxu0
      %v2620 = vpop.f32.mrf.mxu0
      %v2621 = vadd.f32 0.0, %v2620
      %v2622 = vpop.f32.mrf.mxu0
      %2623 = vdwg.mxu0
      %v2624 = vadd.f32 %v2109, %v2498
      %v2625 = vadd.f32 %v2110, %v2501
      %v2626 = vadd.f32 %v2111, %v2506
      %v2627 = vadd.f32 %v2112, %v2509
      %v2628 = vadd.f32 %v2113, %v2514
      %v2629 = vadd.f32 %v2114, %v2517
      %v2630 = vadd.f32 %v2115, %v2522
      %v2631 = vadd.f32 %v2116, %v2525
      %v2632 = vadd.f32 %v2117, %v2530
      %v2633 = vadd.f32 %v2118, %v2533
      %v2634 = vadd.f32 %v2119, %v2538
      %v2635 = vadd.f32 %v2120, %v2541
      %v2636 = vadd.f32 %v2121, %v2546
      %v2637 = vadd.f32 %v2122, %v2549
      %v2638 = vadd.f32 %v2123, %v2554
      %v2639 = vadd.f32 %v2124, %v2557
      %v2640 = vadd.f32 %v2125, %v2562
      %v2641 = vadd.f32 %v2126, %v2565
      %v2642 = vadd.f32 %v2127, %v2570
      %v2643 = vadd.f32 %v2128, %v2573
      %v2644 = vadd.f32 %v2129, %v2578
      %v2645 = vadd.f32 %v2130, %v2581
      %v2646 = vadd.f32 %v2131, %v2586
      %v2647 = vadd.f32 %v2132, %v2589
      %v2648 = vadd.f32 %v2133, %v2594
      %v2649 = vadd.f32 %v2134, %v2597
      %v2650 = vadd.f32 %v2135, %v2602
      %v2651 = vadd.f32 %v2136, %v2605
      %v2652 = vadd.f32 %v2137, %v2610
      %v2653 = vadd.f32 %v2138, %v2613
      %v2654 = vadd.f32 %v2139, %v2618
      %v2655 = vadd.f32 %v2140, %v2621
      %vm2656 = vcmask 48128
      %2657 = vst.msk [vmem:[%s170] sm:$0xff] %vm2656, %v2624
      %2658 = vst.msk [vmem:[%s170 + $0x8] sm:$0xff] %vm2656, %v2625
      %2659 = vst.msk [vmem:[%s170 + $0x10] sm:$0xff] %vm2656, %v2626
      %2660 = vst.msk [vmem:[%s170 + $0x18] sm:$0xff] %vm2656, %v2627
      %2661 = vst.msk [vmem:[%s170 + $0x20] sm:$0xff] %vm2656, %v2628
      %2662 = vst.msk [vmem:[%s170 + $0x28] sm:$0xff] %vm2656, %v2629
      %2663 = vst.msk [vmem:[%s170 + $0x30] sm:$0xff] %vm2656, %v2630
      %2664 = vst.msk [vmem:[%s170 + $0x38] sm:$0xff] %vm2656, %v2631
      %2665 = vst.msk [vmem:[%s170 + $0x40] sm:$0xff] %vm2656, %v2632
      %2666 = vst.msk [vmem:[%s170 + $0x48] sm:$0xff] %vm2656, %v2633
      %2667 = vst.msk [vmem:[%s170 + $0x50] sm:$0xff] %vm2656, %v2634
      %2668 = vst.msk [vmem:[%s170 + $0x58] sm:$0xff] %vm2656, %v2635
      %2669 = vst.msk [vmem:[%s170 + $0x60] sm:$0xff] %vm2656, %v2636
      %2670 = vst.msk [vmem:[%s170 + $0x68] sm:$0xff] %vm2656, %v2637
      %2671 = vst.msk [vmem:[%s170 + $0x70] sm:$0xff] %vm2656, %v2638
      %2672 = vst.msk [vmem:[%s170 + $0x78] sm:$0xff] %vm2656, %v2639
      %2673 = vst.msk [vmem:[%s170 + $0x80] sm:$0xff] %vm2656, %v2640
      %2674 = vst.msk [vmem:[%s170 + $0x88] sm:$0xff] %vm2656, %v2641
      %2675 = vst.msk [vmem:[%s170 + $0x90] sm:$0xff] %vm2656, %v2642
      %2676 = vst.msk [vmem:[%s170 + $0x98] sm:$0xff] %vm2656, %v2643
      %2677 = vst.msk [vmem:[%s170 + $0xa0] sm:$0xff] %vm2656, %v2644
      %2678 = vst.msk [vmem:[%s170 + $0xa8] sm:$0xff] %vm2656, %v2645
      %2679 = vst.msk [vmem:[%s170 + $0xb0] sm:$0xff] %vm2656, %v2646
      %2680 = vst.msk [vmem:[%s170 + $0xb8] sm:$0xff] %vm2656, %v2647
      %2681 = vst.msk [vmem:[%s170 + $0xc0] sm:$0xff] %vm2656, %v2648
      %2682 = vst.msk [vmem:[%s170 + $0xc8] sm:$0xff] %vm2656, %v2649
      %2683 = vst.msk [vmem:[%s170 + $0xd0] sm:$0xff] %vm2656, %v2650
      %2684 = vst.msk [vmem:[%s170 + $0xd8] sm:$0xff] %vm2656, %v2651
      %2685 = vst.msk [vmem:[%s170 + $0xe0] sm:$0xff] %vm2656, %v2652
      %2686 = vst.msk [vmem:[%s170 + $0xe8] sm:$0xff] %vm2656, %v2653
      %2687 = vst.msk [vmem:[%s170 + $0xf0] sm:$0xff] %vm2656, %v2654
      %2688 = vst.msk [vmem:[%s170 + $0xf8] sm:$0xff] %vm2656, %v2655
      %p2689 = scmp.lt.s32.totalorder %s14, 1
      %s2690 = scalar_select %p2689, %s14, 1
      %s2691 = smul.addr %s2690, 32
      %s2692 = smul.addr %s2691, 8
      %s2693 = scalar_lea.vmem %s3, %s2692
      // Predicated region
      $region33: #{estnet_forward_pallas.3} parent=31 // pred_check
        %p2694 = pneg %p100
      $region34: #{estnet_forward_pallas.3} parent=31 // pred_check_branch
        %2696 = sbr.rel (%p2694) target = $region36
      $region35: #{estnet_forward_pallas.3} parent=31 // pred_region
        _
      $region36: #{estnet_forward_pallas.3} parent=31 // pred_fallthru
        _
    $region32: #{estnet_forward_pallas.3} parent=5 // pred_fallthru
      _
    %p2697 = scmp.le.s32.totalorder 2, %s9
    // Predicated region
    $region37: #{estnet_forward_pallas.3} parent=5 // pred_check
      %p2698 = pneg %p2697
    $region38: #{estnet_forward_pallas.3} parent=5 // pred_check_branch
      %2700 = sbr.rel (%p2698) target = $region40
    $region39: #{estnet_forward_pallas.3} parent=5 // pred_region
      %s2701 = ssub.s32 %s9, 2
      // Predicated region
      $region41: #{estnet_forward_pallas.3} parent=39 // pred_check
        %p2702 = pneg %p106
      $region42: #{estnet_forward_pallas.3} parent=39 // pred_check_branch
        %2704 = sbr.rel (%p2702) target = $region44
      $region43: #{estnet_forward_pallas.3} parent=39 // pred_region
        %p2705 = scmp.lt.s32.totalorder %s15, 1
        %s2706 = scalar_select %p2705, %s15, 1
        %s2707 = smul.addr %s2706, 32
        %s2708 = smul.addr %s2707, 8
        %s2709 = scalar_lea.vmem %s3, %s2708
      $region44: #{estnet_forward_pallas.3} parent=39 // pred_fallthru
        _
    $region40: #{estnet_forward_pallas.3} parent=5 // pred_fallthru
      _
  $region6: #{estnet_forward_pallas.3} parent=0 // loop_footer
    %s13 = sadd.s32 1, %s9
  $region7: #{estnet_forward_pallas.3} parent=0 // loop_footer_branch
    %8 = sbr.rel target = $region3
  $region8: #{estnet_forward_pallas.3} parent=0 // loop_exit
    _

</llo_original>
